<compile_context>
chip_gen: v5e
topology: v5e:2x2
jax: 0.10.0
libtpu: 0.0.40
codegen_flags: <defaults>
</compile_context>

<pallas_src>
import functools

import jax
import jax.numpy as jnp
from jax.experimental import pallas as pl
from jax.experimental.pallas import tpu as pltpu


_VMEM_LIMIT = 64 * 1024 * 1024   # safe on v5e/v6e/v7x; raise toward ~100 MiB on v5e/v6e


def _pick_row_tile(h, wd, row_target=512):
    """Largest TH that divides H, is a multiple of 8 and keeps TH*W near row_target.

    TODO(synk): on v7x (64 MiB VMEM, 2 TCs) re-derive row_target ~ half of v6e's.
    """
    if h % 8 != 0:
        return h
    th_cap = max(8, row_target // max(wd, 1))
    limit = min(h, max(8, th_cap))
    best = 8
    for t in range(8, limit + 1, 8):
        if h % t == 0:
            best = t
    return best


# ----------------------------- Pallas kernels ------------------------------ #

def _conv_bn_kernel(top_ref, mid_ref, bot_ref, scale_ref, shift_ref, w_ref,
                    o_ref, stats_ref, *, th, wd, cin, cout, kp, apply_act,
                    single_matmul):
    """Fused [prev-layer BN+ReLU] -> 3x3 'same' conv (bf16 MXU) -> BN partial stats.

    top_ref/bot_ref: (1, 1, W, Cin)   halo rows (clamped; zeroed at image border)
    mid_ref:         (1, TH, W, Cin)  main row tile of the previous activation
    scale/shift:     (1, Cin)         folded BN of the PREVIOUS layer (f32)
    w_ref:           (Kp, Cout)       flattened conv weights, bf16
    o_ref:           (1, TH*W, Cout)  raw (pre-BN) conv output, f32
    stats_ref:       (1, 1, 1, 2*Cout) per-step partial [sum | sum_sq], f32
    """
    j = pl.program_id(1)
    last_j = pl.num_programs(1) - 1

    def act(v):
        if apply_act:
            v = jnp.maximum(v * scale_ref[0] + shift_ref[0], 0.0)
        return v

    mid = act(mid_ref[0])                         # (TH, W, Cin)  f32
    top = act(top_ref[0, 0])                      # (W, Cin)
    bot = act(bot_ref[0, 0])
    # Zero halo rows outside the image.  Padding applies to the *activated*
    # previous-layer output, hence zero AFTER the activation.
    top = top * (j > 0).astype(top.dtype)
    bot = bot * (j < last_j).astype(bot.dtype)

    xt = jnp.concatenate([top[None], mid, bot[None]], axis=0)     # (TH+2, W, Cin)
    zcol = jnp.zeros((th + 2, 1, cin), xt.dtype)
    xt = jnp.concatenate([zcol, xt, zcol], axis=1)                # (TH+2, W+2, Cin)
    xt = xt.astype(jnp.bfloat16)                  # bf16 operands for the MXU

    if single_matmul:
        # Tiny Cin: one im2col matmul, K zero-padded up to a multiple of 128.
        taps = [xt[dy:dy + th, dx:dx + wd, :]
                for dy in range(3) for dx in range(3)]
        if kp > 9 * cin:
            taps.append(jnp.zeros((th, wd, kp - 9 * cin), xt.dtype))
        patches = jnp.concatenate(taps, axis=-1).reshape(th * wd, kp)
        acc = jnp.dot(patches, w_ref[...], preferred_element_type=jnp.float32)
    else:
        # Production Cin: 9 accumulating matmuls with K=Cin, no patch concat.
        acc = jnp.zeros((th * wd, cout), jnp.float32)
        for dy in range(3):
            for dx in range(3):
                a = xt[dy:dy + th, dx:dx + wd, :].reshape(th * wd, cin)
                k0 = (dy * 3 + dx) * cin
                acc = acc + jnp.dot(a, w_ref[k0:k0 + cin, :],
                                    preferred_element_type=jnp.float32)

    o_ref[0] = acc                                # natural matmul layout, no repack

    # Partial batch-norm statistics for this tile (lane-dense, reduced in wrapper).
    psum = jnp.sum(acc, axis=0, keepdims=True)            # (1, Cout)
    psq = jnp.sum(acc * acc, axis=0, keepdims=True)       # (1, Cout)
    stats_ref[0, 0] = jnp.concatenate([psum, psq], axis=-1)   # (1, 2*Cout)


def _bn_relu_kernel(x_ref, scale_ref, shift_ref, o_ref):
    """y = max(x * scale + shift, 0) on a (rows, C) tile."""
    o_ref[...] = jnp.maximum(x_ref[...] * scale_ref[...] + shift_ref[...], 0.0)


# ------------------------------- wrappers ----------------------------------- #

def _conv3x3_bn_stats(x4d, w_pad, scale, shift, *, apply_act, cout, single_matmul):
    """x4d: (N,H,W,Cin) raw previous activation; returns (conv (N,H*W,Cout), stats)."""
    n, h, wd, cin = x4d.shape
    kp = w_pad.shape[0]
    th = _pick_row_tile(h, wd)
    n_th = h // th

    kern = functools.partial(_conv_bn_kernel, th=th, wd=wd, cin=cin, cout=cout,
                             kp=kp, apply_act=apply_act,
                             single_matmul=single_matmul)
    conv_flat, pstats = pl.pallas_call(
        kern,
        out_shape=(
            jax.ShapeDtypeStruct((n, h * wd, cout), jnp.float32),
            jax.ShapeDtypeStruct((n, n_th, 1, 2 * cout), jnp.float32),
        ),
        grid=(n, n_th),
        in_specs=[
            # Halo row above (block size 1 on H => index_map returns a row index).
            pl.BlockSpec((1, 1, wd, cin),
                         lambda i, j: (i, jnp.maximum(j * th - 1, 0), 0, 0)),
            # Main TH-row tile.
            pl.BlockSpec((1, th, wd, cin), lambda i, j: (i, j, 0, 0)),
            # Halo row below.
            pl.BlockSpec((1, 1, wd, cin),
                         lambda i, j: (i, jnp.minimum((j + 1) * th, h - 1), 0, 0)),
            pl.BlockSpec((1, cin), lambda i, j: (0, 0)),
            pl.BlockSpec((1, cin), lambda i, j: (0, 0)),
            pl.BlockSpec((kp, cout), lambda i, j: (0, 0)),
        ],
        out_specs=(
            pl.BlockSpec((1, th * wd, cout), lambda i, j: (i, j, 0)),
            pl.BlockSpec((1, 1, 1, 2 * cout), lambda i, j: (i, j, 0, 0)),
        ),
        compiler_params=pltpu.CompilerParams(
            dimension_semantics=("parallel", "parallel"),
            vmem_limit_bytes=_VMEM_LIMIT),
    )(x4d, x4d, x4d, scale, shift, w_pad)
    return conv_flat, pstats


def _bn_relu_apply(z_flat, scale, shift):
    """Standalone BN+ReLU for the FINAL layer only, on the (N*H*W, C) view."""
    rows, c = z_flat.shape
    tr = _pick_row_tile(rows, 1, row_target=512)
    return pl.pallas_call(
        _bn_relu_kernel,
        out_shape=jax.ShapeDtypeStruct((rows, c), jnp.float32),
        grid=(rows // tr,),
        in_specs=[
            pl.BlockSpec((tr, c), lambda i: (i, 0)),
            pl.BlockSpec((1, c), lambda i: (0, 0)),
            pl.BlockSpec((1, c), lambda i: (0, 0)),
        ],
        out_specs=pl.BlockSpec((tr, c), lambda i: (i, 0)),
        input_output_aliases={0: 0},
        compiler_params=pltpu.CompilerParams(
            dimension_semantics=("parallel",),
            vmem_limit_bytes=_VMEM_LIMIT),
    )(z_flat, scale.reshape(1, c), shift.reshape(1, c))


@jax.jit
def ae_conv_block(x_nchw, params):
    """Pallas implementation of AEConvBlock.forward.  Input/output are NCHW."""
    n = x_nchw.shape[0]
    y4 = jnp.transpose(x_nchw, (0, 2, 3, 1))          # NCHW -> NHWC (once at entry)
    h, wd = y4.shape[1], y4.shape[2]

    scale = jnp.ones((1, y4.shape[3]), jnp.float32)   # identity "previous BN" for layer 0
    shift = jnp.zeros((1, y4.shape[3]), jnp.float32)
    conv_flat = None
    cout = y4.shape[3]

    for idx, (w_oihw, _b, gamma, beta) in enumerate(params):
        cout, cin = w_oihw.shape[0], w_oihw.shape[1]
        # (Cout,Cin,3,3) -> (ky,kx,Cin,Cout) -> (9*Cin, Cout); zero-pad K to a
        # multiple of 128 for the single big-K path; bf16 operands for the MXU.
        w_flat = jnp.transpose(w_oihw, (2, 3, 1, 0)).reshape(9 * cin, cout)
        single_matmul = (9 * cin) <= 256
        if single_matmul:
            kp = ((9 * cin + 127) // 128) * 128
            w_flat = jnp.pad(w_flat, ((0, kp - 9 * cin), (0, 0)))
        w_flat = w_flat.astype(jnp.bfloat16)

        # NOTE: conv bias is dropped on purpose: under training-mode BatchNorm
        # (batch statistics) it cancels exactly in (x - mean).  Not valid for
        # eval-mode / running-stats BN.
        conv_flat, pstats = _conv3x3_bn_stats(
            y4, w_flat, scale, shift, apply_act=(idx > 0), cout=cout,
            single_matmul=single_matmul)

        # Reduce the tiny partial stats; fold BN into per-channel scale/shift (f32).
        stats = jnp.sum(pstats, axis=(0, 1, 2))           # (2*Cout,)
        cnt = float(n * h * wd)
        mean = stats[:cout] / cnt
        var = jnp.maximum(stats[cout:] / cnt - mean * mean, 0.0)   # biased var (training BN)
        # TODO(synk): E[x^2]-E[x]^2 can cancel for very large-magnitude activations;
        # switch to a centered / Welford-style merge if that regime matters.
        s = gamma * jax.lax.rsqrt(var + 1e-5)
        t = beta - mean * s
        scale, shift = s.reshape(1, cout), t.reshape(1, cout)

        y4 = conv_flat.reshape(n, h, wd, cout)            # raw pre-BN activation (free reshape)

    # Final layer's BN + ReLU (earlier layers were fused into the following conv).
    y = _bn_relu_apply(conv_flat.reshape(n * h * wd, cout), scale, shift)
    return jnp.transpose(y.reshape(n, h, wd, cout), (0, 3, 1, 2))   # NHWC -> NCHW


# ------------------------- pure-JAX reference ------------------------------- #

def ae_conv_block_ref(x_nchw, params):
    y = x_nchw
    for (w, b, gamma, beta) in params:
        y = jax.lax.conv_general_dilated(
            y, w, window_strides=(1, 1), padding=((1, 1), (1, 1)),
            dimension_numbers=("NCHW", "OIHW", "NCHW"))
        y = y + b[None, :, None, None]
        mean = jnp.mean(y, axis=(0, 2, 3), keepdims=True)
        var = jnp.mean((y - mean) ** 2, axis=(0, 2, 3), keepdims=True)
        y = (y - mean) / jnp.sqrt(var + 1e-5)
        y = y * gamma[None, :, None, None] + beta[None, :, None, None]
        y = jnp.maximum(y, 0.0)
    return y


# --------------------------------- main -------------------------------------- #

if __name__ == "__main__":
    key = jax.random.PRNGKey(0)

    N, C_IN, C_OUT, H, W = 2, 4, 8, 16, 16
    NUM_LAYERS = 2

    # Deterministic synthetic parameters (PyTorch layouts: conv W is (Cout,Cin,3,3)).
    params = []
    for i in range(NUM_LAYERS):
        c_in = C_IN if i == 0 else C_OUT
        key, kw, kb, kg, kbt = jax.random.split(key, 5)
        w = 0.1 * jax.random.normal(kw, (C_OUT, c_in, 3, 3), jnp.float32)
        b = 0.1 * jax.random.normal(kb, (C_OUT,), jnp.float32)
        gamma = 1.0 + 0.1 * jax.random.normal(kg, (C_OUT,), jnp.float32)
        beta = 0.1 * jax.random.normal(kbt, (C_OUT,), jnp.float32)
        params.append((w, b, gamma, beta))
    params = tuple(params)

    key, kx = jax.random.split(key)
    x = jax.random.normal(kx, (N, C_IN, H, W), jnp.float32)

    out = jax.block_until_ready(ae_conv_block(x, params))
    ref = ae_conv_block_ref(x, params)

    assert out.shape == (N, C_OUT, H, W), out.shape
    # bf16 MXU operands (f32 accumulation) -> tolerance loosened vs an all-f32 ref.
    max_err = float(jnp.max(jnp.abs(out - ref)))
    assert max_err < 1e-1, f"max abs err vs reference: {max_err}"

    print("KERNEL_OK")
</pallas_src>

<mosaic_0001>
module attributes {stable_mosaic.version = 11 : i64} {
  func.func @_bn_relu_kernel(%arg0: i32, %arg1: memref<512x8xf32, #tpu.memory_space<vmem>>, %arg2: memref<1x8xf32, #tpu.memory_space<vmem>>, %arg3: memref<1x8xf32, #tpu.memory_space<vmem>>, %arg4: memref<512x8xf32, #tpu.memory_space<vmem>>) attributes {dimension_semantics = [#tpu.dimension_semantics<parallel>], iteration_bounds = array<i64: 1>, scalar_prefetch = 0 : i64, scratch_operands = 0 : i64, tpu.core_type = #tpu.core_type<tc>, window_params = [{transform_indices = @transform_0, window_bounds = array<i64: 512, 8>}, {pipeline_mode = #tpu.pipeline_mode<synchronous>, transform_indices = @transform_1, window_bounds = array<i64: 1, 8>}, {pipeline_mode = #tpu.pipeline_mode<synchronous>, transform_indices = @transform_2, window_bounds = array<i64: 1, 8>}, {transform_indices = @transform_3, window_bounds = array<i64: 512, 8>}]} {
    %c0 = arith.constant 0 : index
    %c0_0 = arith.constant 0 : index
    %0 = vector.load %arg1[%c0, %c0_0] : memref<512x8xf32, #tpu.memory_space<vmem>>, vector<512x8xf32>
    %c0_1 = arith.constant 0 : index
    %c0_2 = arith.constant 0 : index
    %1 = vector.load %arg2[%c0_1, %c0_2] : memref<1x8xf32, #tpu.memory_space<vmem>>, vector<1x8xf32>
    %2 = vector.broadcast %1 : vector<1x8xf32> to vector<512x8xf32>
    %3 = arith.mulf %0, %2 : vector<512x8xf32>
    %c0_3 = arith.constant 0 : index
    %c0_4 = arith.constant 0 : index
    %4 = vector.load %arg3[%c0_3, %c0_4] : memref<1x8xf32, #tpu.memory_space<vmem>>, vector<1x8xf32>
    %5 = vector.broadcast %4 : vector<1x8xf32> to vector<512x8xf32>
    %6 = arith.addf %3, %5 : vector<512x8xf32>
    %cst = arith.constant 0.000000e+00 : f32
    %7 = vector.broadcast %cst : f32 to vector<512x8xf32>
    %8 = arith.maximumf %6, %7 : vector<512x8xf32>
    %c0_5 = arith.constant 0 : index
    %c0_6 = arith.constant 0 : index
    %9 = vector.load %arg4[%c0_5, %c0_6] : memref<512x8xf32, #tpu.memory_space<vmem>>, vector<512x8xf32>
    tpu.vector_store %arg4[%c0_5, %c0_6], %8 {strides = array<i32>} : memref<512x8xf32, #tpu.memory_space<vmem>>, vector<512x8xf32>,
    return
  }
  func.func @transform_0(%arg0: i32) -> (i32, i32) {
    %c0_i32 = arith.constant 0 : i32
    %c0_i32_0 = arith.constant 0 : i32
    return %arg0, %c0_i32 : i32, i32
  }
  func.func @transform_1(%arg0: i32) -> (i32, i32) {
    %c0_i32 = arith.constant 0 : i32
    %c0_i32_0 = arith.constant 0 : i32
    %c0_i32_1 = arith.constant 0 : i32
    return %c0_i32, %c0_i32_0 : i32, i32
  }
  func.func @transform_2(%arg0: i32) -> (i32, i32) {
    %c0_i32 = arith.constant 0 : i32
    %c0_i32_0 = arith.constant 0 : i32
    %c0_i32_1 = arith.constant 0 : i32
    return %c0_i32, %c0_i32_0 : i32, i32
  }
  func.func @transform_3(%arg0: i32) -> (i32, i32) {
    %c0_i32 = arith.constant 0 : i32
    %c0_i32_0 = arith.constant 0 : i32
    return %arg0, %c0_i32 : i32, i32
  }
}

module attributes {stable_mosaic.version = 11 : i64} {
  func.func @_conv_bn_kernel(%arg0: i32, %arg1: i32, %arg2: memref<1x1x16x4xf32, #tpu.memory_space<vmem>>, %arg3: memref<1x16x16x4xf32, #tpu.memory_space<vmem>>, %arg4: memref<1x1x16x4xf32, #tpu.memory_space<vmem>>, %arg5: memref<1x4xf32, #tpu.memory_space<vmem>>, %arg6: memref<1x4xf32, #tpu.memory_space<vmem>>, %arg7: memref<128x8xbf16, #tpu.memory_space<vmem>>, %arg8: memref<1x256x8xf32, #tpu.memory_space<vmem>>, %arg9: memref<1x1x1x16xf32, #tpu.memory_space<vmem>>) attributes {dimension_semantics = [#tpu.dimension_semantics<parallel>, #tpu.dimension_semantics<parallel>], iteration_bounds = array<i64: 2, 1>, scalar_prefetch = 0 : i64, scratch_operands = 0 : i64, tpu.core_type = #tpu.core_type<tc>, window_params = [{transform_indices = @transform_0, window_bounds = array<i64: 1, 1, 16, 4>}, {transform_indices = @transform_1, window_bounds = array<i64: 1, 16, 16, 4>}, {transform_indices = @transform_2, window_bounds = array<i64: 1, 1, 16, 4>}, {pipeline_mode = #tpu.pipeline_mode<synchronous>, transform_indices = @transform_3, window_bounds = array<i64: 1, 4>}, {pipeline_mode = #tpu.pipeline_mode<synchronous>, transform_indices = @transform_4, window_bounds = array<i64: 1, 4>}, {pipeline_mode = #tpu.pipeline_mode<synchronous>, transform_indices = @transform_5, window_bounds = array<i64: 128, 8>}, {transform_indices = @transform_6, window_bounds = array<i64: 1, 256, 8>}, {transform_indices = @transform_7, window_bounds = array<i64: 1, 1, 1, 16>}]} {
    %c0 = arith.constant 0 : index
    %c0_0 = arith.constant 0 : index
    %c0_1 = arith.constant 0 : index
    %c0_2 = arith.constant 0 : index
    %0 = vector.load %arg3[%c0, %c0_0, %c0_1, %c0_2] : memref<1x16x16x4xf32, #tpu.memory_space<vmem>>, vector<1x16x16x4xf32>
    %1 = vector.shape_cast %0 : vector<1x16x16x4xf32> to vector<16x16x4xf32>
    %c0_3 = arith.constant 0 : index
    %c0_4 = arith.constant 0 : index
    %c0_5 = arith.constant 0 : index
    %c0_6 = arith.constant 0 : index
    %2 = vector.load %arg2[%c0_3, %c0_4, %c0_5, %c0_6] : memref<1x1x16x4xf32, #tpu.memory_space<vmem>>, vector<1x1x16x4xf32>
    %3 = vector.shape_cast %2 : vector<1x1x16x4xf32> to vector<16x4xf32>
    %c0_7 = arith.constant 0 : index
    %c0_8 = arith.constant 0 : index
    %c0_9 = arith.constant 0 : index
    %c0_10 = arith.constant 0 : index
    %4 = vector.load %arg4[%c0_7, %c0_8, %c0_9, %c0_10] : memref<1x1x16x4xf32, #tpu.memory_space<vmem>>, vector<1x1x16x4xf32>
    %5 = vector.shape_cast %4 : vector<1x1x16x4xf32> to vector<16x4xf32>
    %c0_i32 = arith.constant 0 : i32
    %6 = arith.cmpi sgt, %arg1, %c0_i32 : i32
    %7 = arith.extui %6 : i1 to i32
    %8 = arith.sitofp %7 : i32 to f32
    %9 = vector.broadcast %8 : f32 to vector<16x4xf32>
    %10 = arith.mulf %3, %9 : vector<16x4xf32>
    %c0_i32_11 = arith.constant 0 : i32
    %11 = arith.cmpi slt, %arg1, %c0_i32_11 : i32
    %12 = arith.extui %11 : i1 to i32
    %13 = arith.sitofp %12 : i32 to f32
    %14 = vector.broadcast %13 : f32 to vector<16x4xf32>
    %15 = arith.mulf %5, %14 : vector<16x4xf32>
    %16 = vector.shape_cast %10 : vector<16x4xf32> to vector<1x16x4xf32>
    %17 = vector.shape_cast %15 : vector<16x4xf32> to vector<1x16x4xf32>
    %18 = tpu.concatenate %16, %1, %17 in 0 : vector<1x16x4xf32>, vector<16x16x4xf32>, vector<1x16x4xf32> -> vector<18x16x4xf32>
    %cst = arith.constant 0.000000e+00 : f32
    %19 = vector.broadcast %cst : f32 to vector<18x1x4xf32>
    %20 = tpu.concatenate %19, %18, %19 in 1 : vector<18x1x4xf32>, vector<18x16x4xf32>, vector<18x1x4xf32> -> vector<18x18x4xf32>
    %21 = arith.truncf %20 : vector<18x18x4xf32> to vector<18x18x4xbf16>
    %22 = vector.extract_strided_slice %21 {offsets = [0, 0, 0], sizes = [16, 16, 4], strides = [1, 1, 1]} : vector<18x18x4xbf16> to vector<16x16x4xbf16>
    %23 = vector.extract_strided_slice %21 {offsets = [0, 1, 0], sizes = [16, 16, 4], strides = [1, 1, 1]} : vector<18x18x4xbf16> to vector<16x16x4xbf16>
    %24 = vector.extract_strided_slice %21 {offsets = [0, 2, 0], sizes = [16, 16, 4], strides = [1, 1, 1]} : vector<18x18x4xbf16> to vector<16x16x4xbf16>
    %25 = vector.extract_strided_slice %21 {offsets = [1, 0, 0], sizes = [16, 16, 4], strides = [1, 1, 1]} : vector<18x18x4xbf16> to vector<16x16x4xbf16>
    %26 = vector.extract_strided_slice %21 {offsets = [1, 1, 0], sizes = [16, 16, 4], strides = [1, 1, 1]} : vector<18x18x4xbf16> to vector<16x16x4xbf16>
    %27 = vector.extract_strided_slice %21 {offsets = [1, 2, 0], sizes = [16, 16, 4], strides = [1, 1, 1]} : vector<18x18x4xbf16> to vector<16x16x4xbf16>
    %28 = vector.extract_strided_slice %21 {offsets = [2, 0, 0], sizes = [16, 16, 4], strides = [1, 1, 1]} : vector<18x18x4xbf16> to vector<16x16x4xbf16>
    %29 = vector.extract_strided_slice %21 {offsets = [2, 1, 0], sizes = [16, 16, 4], strides = [1, 1, 1]} : vector<18x18x4xbf16> to vector<16x16x4xbf16>
    %30 = vector.extract_strided_slice %21 {offsets = [2, 2, 0], sizes = [16, 16, 4], strides = [1, 1, 1]} : vector<18x18x4xbf16> to vector<16x16x4xbf16>
    %cst_12 = arith.constant 0.000000e+00 : bf16
    %31 = vector.broadcast %cst_12 : bf16 to vector<16x16x92xbf16>
    %32 = tpu.concatenate %22, %23, %24, %25, %26, %27, %28, %29, %30, %31 in 2 : vector<16x16x4xbf16>, vector<16x16x4xbf16>, vector<16x16x4xbf16>, vector<16x16x4xbf16>, vector<16x16x4xbf16>, vector<16x16x4xbf16>, vector<16x16x4xbf16>, vector<16x16x4xbf16>, vector<16x16x4xbf16>, vector<16x16x92xbf16> -> vector<16x16x128xbf16>
    %33 = vector.shape_cast %32 : vector<16x16x128xbf16> to vector<256x128xbf16>
    %c0_13 = arith.constant 0 : index
    %c0_14 = arith.constant 0 : index
    %34 = vector.load %arg7[%c0_13, %c0_14] : memref<128x8xbf16, #tpu.memory_space<vmem>>, vector<128x8xbf16>
    %cst_15 = arith.constant dense<0.000000e+00> : vector<256x8xf32>
    %35 = tpu.matmul %33, %34, %cst_15 {dimension_numbers = #tpu.dot_dimension_numbers<[1], [0], [0], [1], [0, 0, 1, 1], [], []>} : vector<256x128xbf16>, vector<128x8xbf16>, vector<256x8xf32> -> vector<256x8xf32>
    %c0_16 = arith.constant 0 : index
    %c0_17 = arith.constant 0 : index
    %c0_18 = arith.constant 0 : index
    %36 = vector.load %arg8[%c0_16, %c0_17, %c0_18] : memref<1x256x8xf32, #tpu.memory_space<vmem>>, vector<1x256x8xf32>
    %37 = vector.shape_cast %36 : vector<1x256x8xf32> to vector<256x8xf32>
    %38 = vector.shape_cast %35 : vector<256x8xf32> to vector<1x256x8xf32>
    tpu.vector_store %arg8[%c0_16, %c0_17, %c0_18], %38 {strides = array<i32>} : memref<1x256x8xf32, #tpu.memory_space<vmem>>, vector<1x256x8xf32>,
    %cst_19 = arith.constant dense<0.000000e+00> : vector<8xf32>
    %39 = vector.multi_reduction <add>, %35, %cst_19 [0] : vector<256x8xf32> to vector<8xf32>
    %40 = vector.shape_cast %39 : vector<8xf32> to vector<1x8xf32>
    %41 = arith.mulf %35, %35 : vector<256x8xf32>
    %cst_20 = arith.constant dense<0.000000e+00> : vector<8xf32>
    %42 = vector.multi_reduction <add>, %41, %cst_20 [0] : vector<256x8xf32> to vector<8xf32>
    %43 = vector.shape_cast %42 : vector<8xf32> to vector<1x8xf32>
    %44 = tpu.concatenate %40, %43 in 1 : vector<1x8xf32>, vector<1x8xf32> -> vector<1x16xf32>
    %c0_21 = arith.constant 0 : index
    %c0_22 = arith.constant 0 : index
    %c0_23 = arith.constant 0 : index
    %c0_24 = arith.constant 0 : index
    %45 = vector.load %arg9[%c0_21, %c0_22, %c0_23, %c0_24] : memref<1x1x1x16xf32, #tpu.memory_space<vmem>>, vector<1x1x1x16xf32>
    %46 = vector.shape_cast %45 : vector<1x1x1x16xf32> to vector<1x16xf32>
    %47 = vector.shape_cast %44 : vector<1x16xf32> to vector<1x1x1x16xf32>
    tpu.vector_store %arg9[%c0_21, %c0_22, %c0_23, %c0_24], %47 {strides = array<i32>} : memref<1x1x1x16xf32, #tpu.memory_space<vmem>>, vector<1x1x1x16xf32>,
    return
  }
  func.func @transform_0(%arg0: i32, %arg1: i32) -> (i32, i32, i32, i32) {
    %c16_i32 = arith.constant 16 : i32
    %0 = arith.muli %arg1, %c16_i32 : i32
    %c1_i32 = arith.constant 1 : i32
    %1 = arith.subi %0, %c1_i32 : i32
    %c0_i32 = arith.constant 0 : i32
    %2 = arith.maxsi %1, %c0_i32 : i32
    %c0_i32_0 = arith.constant 0 : i32
    %c0_i32_1 = arith.constant 0 : i32
    %c0_i32_2 = arith.constant 0 : i32
    return %arg0, %2, %c0_i32_0, %c0_i32_1 : i32, i32, i32, i32
  }
  func.func @transform_1(%arg0: i32, %arg1: i32) -> (i32, i32, i32, i32) {
    %c0_i32 = arith.constant 0 : i32
    %c0_i32_0 = arith.constant 0 : i32
    %c0_i32_1 = arith.constant 0 : i32
    return %arg0, %arg1, %c0_i32, %c0_i32_0 : i32, i32, i32, i32
  }
  func.func @transform_2(%arg0: i32, %arg1: i32) -> (i32, i32, i32, i32) {
    %c1_i32 = arith.constant 1 : i32
    %0 = arith.addi %arg1, %c1_i32 : i32
    %c16_i32 = arith.constant 16 : i32
    %1 = arith.muli %0, %c16_i32 : i32
    %c15_i32 = arith.constant 15 : i32
    %2 = arith.minsi %1, %c15_i32 : i32
    %c0_i32 = arith.constant 0 : i32
    %c0_i32_0 = arith.constant 0 : i32
    %c0_i32_1 = arith.constant 0 : i32
    return %arg0, %2, %c0_i32, %c0_i32_0 : i32, i32, i32, i32
  }
  func.func @transform_3(%arg0: i32, %arg1: i32) -> (i32, i32) {
    %c0_i32 = arith.constant 0 : i32
    %c0_i32_0 = arith.constant 0 : i32
    %c0_i32_1 = arith.constant 0 : i32
    return %c0_i32, %c0_i32_0 : i32, i32
  }
  func.func @transform_4(%arg0: i32, %arg1: i32) -> (i32, i32) {
    %c0_i32 = arith.constant 0 : i32
    %c0_i32_0 = arith.constant 0 : i32
    %c0_i32_1 = arith.constant 0 : i32
    return %c0_i32, %c0_i32_0 : i32, i32
  }
  func.func @transform_5(%arg0: i32, %arg1: i32) -> (i32, i32) {
    %c0_i32 = arith.constant 0 : i32
    %c0_i32_0 = arith.constant 0 : i32
    %c0_i32_1 = arith.constant 0 : i32
    return %c0_i32, %c0_i32_0 : i32, i32
  }
  func.func @transform_6(%arg0: i32, %arg1: i32) -> (i32, i32, i32) {
    %c0_i32 = arith.constant 0 : i32
    %c0_i32_0 = arith.constant 0 : i32
    return %arg0, %arg1, %c0_i32 : i32, i32, i32
  }
  func.func @transform_7(%arg0: i32, %arg1: i32) -> (i32, i32, i32, i32) {
    %c0_i32 = arith.constant 0 : i32
    %c0_i32_0 = arith.constant 0 : i32
    %c0_i32_1 = arith.constant 0 : i32
    return %arg0, %arg1, %c0_i32, %c0_i32_0 : i32, i32, i32, i32
  }
}

module attributes {stable_mosaic.version = 11 : i64} {
  func.func @_conv_bn_kernel(%arg0: i32, %arg1: i32, %arg2: memref<1x1x16x8xf32, #tpu.memory_space<vmem>>, %arg3: memref<1x16x16x8xf32, #tpu.memory_space<vmem>>, %arg4: memref<1x1x16x8xf32, #tpu.memory_space<vmem>>, %arg5: memref<1x8xf32, #tpu.memory_space<vmem>>, %arg6: memref<1x8xf32, #tpu.memory_space<vmem>>, %arg7: memref<128x8xbf16, #tpu.memory_space<vmem>>, %arg8: memref<1x256x8xf32, #tpu.memory_space<vmem>>, %arg9: memref<1x1x1x16xf32, #tpu.memory_space<vmem>>) attributes {dimension_semantics = [#tpu.dimension_semantics<parallel>, #tpu.dimension_semantics<parallel>], iteration_bounds = array<i64: 2, 1>, scalar_prefetch = 0 : i64, scratch_operands = 0 : i64, tpu.core_type = #tpu.core_type<tc>, window_params = [{transform_indices = @transform_0, window_bounds = array<i64: 1, 1, 16, 8>}, {transform_indices = @transform_1, window_bounds = array<i64: 1, 16, 16, 8>}, {transform_indices = @transform_2, window_bounds = array<i64: 1, 1, 16, 8>}, {pipeline_mode = #tpu.pipeline_mode<synchronous>, transform_indices = @transform_3, window_bounds = array<i64: 1, 8>}, {pipeline_mode = #tpu.pipeline_mode<synchronous>, transform_indices = @transform_4, window_bounds = array<i64: 1, 8>}, {pipeline_mode = #tpu.pipeline_mode<synchronous>, transform_indices = @transform_5, window_bounds = array<i64: 128, 8>}, {transform_indices = @transform_6, window_bounds = array<i64: 1, 256, 8>}, {transform_indices = @transform_7, window_bounds = array<i64: 1, 1, 1, 16>}]} {
    %c0 = arith.constant 0 : index
    %c0_0 = arith.constant 0 : index
    %c0_1 = arith.constant 0 : index
    %c0_2 = arith.constant 0 : index
    %0 = vector.load %arg3[%c0, %c0_0, %c0_1, %c0_2] : memref<1x16x16x8xf32, #tpu.memory_space<vmem>>, vector<1x16x16x8xf32>
    %1 = vector.shape_cast %0 : vector<1x16x16x8xf32> to vector<16x16x8xf32>
    %c0_3 = arith.constant 0 : index
    %c0_4 = arith.constant 0 : index
    %2 = vector.load %arg5[%c0_3, %c0_4] : memref<1x8xf32, #tpu.memory_space<vmem>>, vector<1x8xf32>
    %3 = vector.shape_cast %2 : vector<1x8xf32> to vector<8xf32>
    %4 = vector.shape_cast %3 : vector<8xf32> to vector<1x1x8xf32>
    %5 = vector.broadcast %4 : vector<1x1x8xf32> to vector<16x16x8xf32>
    %6 = arith.mulf %1, %5 : vector<16x16x8xf32>
    %c0_5 = arith.constant 0 : index
    %c0_6 = arith.constant 0 : index
    %7 = vector.load %arg6[%c0_5, %c0_6] : memref<1x8xf32, #tpu.memory_space<vmem>>, vector<1x8xf32>
    %8 = vector.shape_cast %7 : vector<1x8xf32> to vector<8xf32>
    %9 = vector.shape_cast %8 : vector<8xf32> to vector<1x1x8xf32>
    %10 = vector.broadcast %9 : vector<1x1x8xf32> to vector<16x16x8xf32>
    %11 = arith.addf %6, %10 : vector<16x16x8xf32>
    %cst = arith.constant 0.000000e+00 : f32
    %12 = vector.broadcast %cst : f32 to vector<16x16x8xf32>
    %13 = arith.maximumf %11, %12 : vector<16x16x8xf32>
    %c0_7 = arith.constant 0 : index
    %c0_8 = arith.constant 0 : index
    %c0_9 = arith.constant 0 : index
    %c0_10 = arith.constant 0 : index
    %14 = vector.load %arg2[%c0_7, %c0_8, %c0_9, %c0_10] : memref<1x1x16x8xf32, #tpu.memory_space<vmem>>, vector<1x1x16x8xf32>
    %15 = vector.shape_cast %14 : vector<1x1x16x8xf32> to vector<16x8xf32>
    %c0_11 = arith.constant 0 : index
    %c0_12 = arith.constant 0 : index
    %16 = vector.load %arg5[%c0_11, %c0_12] : memref<1x8xf32, #tpu.memory_space<vmem>>, vector<1x8xf32>
    %17 = vector.shape_cast %16 : vector<1x8xf32> to vector<8xf32>
    %18 = vector.shape_cast %17 : vector<8xf32> to vector<1x8xf32>
    %19 = vector.broadcast %18 : vector<1x8xf32> to vector<16x8xf32>
    %20 = arith.mulf %15, %19 : vector<16x8xf32>
    %c0_13 = arith.constant 0 : index
    %c0_14 = arith.constant 0 : index
    %21 = vector.load %arg6[%c0_13, %c0_14] : memref<1x8xf32, #tpu.memory_space<vmem>>, vector<1x8xf32>
    %22 = vector.shape_cast %21 : vector<1x8xf32> to vector<8xf32>
    %23 = vector.shape_cast %22 : vector<8xf32> to vector<1x8xf32>
    %24 = vector.broadcast %23 : vector<1x8xf32> to vector<16x8xf32>
    %25 = arith.addf %20, %24 : vector<16x8xf32>
    %cst_15 = arith.constant 0.000000e+00 : f32
    %26 = vector.broadcast %cst_15 : f32 to vector<16x8xf32>
    %27 = arith.maximumf %25, %26 : vector<16x8xf32>
    %c0_16 = arith.constant 0 : index
    %c0_17 = arith.constant 0 : index
    %c0_18 = arith.constant 0 : index
    %c0_19 = arith.constant 0 : index
    %28 = vector.load %arg4[%c0_16, %c0_17, %c0_18, %c0_19] : memref<1x1x16x8xf32, #tpu.memory_space<vmem>>, vector<1x1x16x8xf32>
    %29 = vector.shape_cast %28 : vector<1x1x16x8xf32> to vector<16x8xf32>
    %c0_20 = arith.constant 0 : index
    %c0_21 = arith.constant 0 : index
    %30 = vector.load %arg5[%c0_20, %c0_21] : memref<1x8xf32, #tpu.memory_space<vmem>>, vector<1x8xf32>
    %31 = vector.shape_cast %30 : vector<1x8xf32> to vector<8xf32>
    %32 = vector.shape_cast %31 : vector<8xf32> to vector<1x8xf32>
    %33 = vector.broadcast %32 : vector<1x8xf32> to vector<16x8xf32>
    %34 = arith.mulf %29, %33 : vector<16x8xf32>
    %c0_22 = arith.constant 0 : index
    %c0_23 = arith.constant 0 : index
    %35 = vector.load %arg6[%c0_22, %c0_23] : memref<1x8xf32, #tpu.memory_space<vmem>>, vector<1x8xf32>
    %36 = vector.shape_cast %35 : vector<1x8xf32> to vector<8xf32>
    %37 = vector.shape_cast %36 : vector<8xf32> to vector<1x8xf32>
    %38 = vector.broadcast %37 : vector<1x8xf32> to vector<16x8xf32>
    %39 = arith.addf %34, %38 : vector<16x8xf32>
    %cst_24 = arith.constant 0.000000e+00 : f32
    %40 = vector.broadcast %cst_24 : f32 to vector<16x8xf32>
    %41 = arith.maximumf %39, %40 : vector<16x8xf32>
    %c0_i32 = arith.constant 0 : i32
    %42 = arith.cmpi sgt, %arg1, %c0_i32 : i32
    %43 = arith.extui %42 : i1 to i32
    %44 = arith.sitofp %43 : i32 to f32
    %45 = vector.broadcast %44 : f32 to vector<16x8xf32>
    %46 = arith.mulf %27, %45 : vector<16x8xf32>
    %c0_i32_25 = arith.constant 0 : i32
    %47 = arith.cmpi slt, %arg1, %c0_i32_25 : i32
    %48 = arith.extui %47 : i1 to i32
    %49 = arith.sitofp %48 : i32 to f32
    %50 = vector.broadcast %49 : f32 to vector<16x8xf32>
    %51 = arith.mulf %41, %50 : vector<16x8xf32>
    %52 = vector.shape_cast %46 : vector<16x8xf32> to vector<1x16x8xf32>
    %53 = vector.shape_cast %51 : vector<16x8xf32> to vector<1x16x8xf32>
    %54 = tpu.concatenate %52, %13, %53 in 0 : vector<1x16x8xf32>, vector<16x16x8xf32>, vector<1x16x8xf32> -> vector<18x16x8xf32>
    %cst_26 = arith.constant 0.000000e+00 : f32
    %55 = vector.broadcast %cst_26 : f32 to vector<18x1x8xf32>
    %56 = tpu.concatenate %55, %54, %55 in 1 : vector<18x1x8xf32>, vector<18x16x8xf32>, vector<18x1x8xf32> -> vector<18x18x8xf32>
    %57 = arith.truncf %56 : vector<18x18x8xf32> to vector<18x18x8xbf16>
    %58 = vector.extract_strided_slice %57 {offsets = [0, 0, 0], sizes = [16, 16, 8], strides = [1, 1, 1]} : vector<18x18x8xbf16> to vector<16x16x8xbf16>
    %59 = vector.extract_strided_slice %57 {offsets = [0, 1, 0], sizes = [16, 16, 8], strides = [1, 1, 1]} : vector<18x18x8xbf16> to vector<16x16x8xbf16>
    %60 = vector.extract_strided_slice %57 {offsets = [0, 2, 0], sizes = [16, 16, 8], strides = [1, 1, 1]} : vector<18x18x8xbf16> to vector<16x16x8xbf16>
    %61 = vector.extract_strided_slice %57 {offsets = [1, 0, 0], sizes = [16, 16, 8], strides = [1, 1, 1]} : vector<18x18x8xbf16> to vector<16x16x8xbf16>
    %62 = vector.extract_strided_slice %57 {offsets = [1, 1, 0], sizes = [16, 16, 8], strides = [1, 1, 1]} : vector<18x18x8xbf16> to vector<16x16x8xbf16>
    %63 = vector.extract_strided_slice %57 {offsets = [1, 2, 0], sizes = [16, 16, 8], strides = [1, 1, 1]} : vector<18x18x8xbf16> to vector<16x16x8xbf16>
    %64 = vector.extract_strided_slice %57 {offsets = [2, 0, 0], sizes = [16, 16, 8], strides = [1, 1, 1]} : vector<18x18x8xbf16> to vector<16x16x8xbf16>
    %65 = vector.extract_strided_slice %57 {offsets = [2, 1, 0], sizes = [16, 16, 8], strides = [1, 1, 1]} : vector<18x18x8xbf16> to vector<16x16x8xbf16>
    %66 = vector.extract_strided_slice %57 {offsets = [2, 2, 0], sizes = [16, 16, 8], strides = [1, 1, 1]} : vector<18x18x8xbf16> to vector<16x16x8xbf16>
    %cst_27 = arith.constant 0.000000e+00 : bf16
    %67 = vector.broadcast %cst_27 : bf16 to vector<16x16x56xbf16>
    %68 = tpu.concatenate %58, %59, %60, %61, %62, %63, %64, %65, %66, %67 in 2 : vector<16x16x8xbf16>, vector<16x16x8xbf16>, vector<16x16x8xbf16>, vector<16x16x8xbf16>, vector<16x16x8xbf16>, vector<16x16x8xbf16>, vector<16x16x8xbf16>, vector<16x16x8xbf16>, vector<16x16x8xbf16>, vector<16x16x56xbf16> -> vector<16x16x128xbf16>
    %69 = vector.shape_cast %68 : vector<16x16x128xbf16> to vector<256x128xbf16>
    %c0_28 = arith.constant 0 : index
    %c0_29 = arith.constant 0 : index
    %70 = vector.load %arg7[%c0_28, %c0_29] : memref<128x8xbf16, #tpu.memory_space<vmem>>, vector<128x8xbf16>
    %cst_30 = arith.constant dense<0.000000e+00> : vector<256x8xf32>
    %71 = tpu.matmul %69, %70, %cst_30 {dimension_numbers = #tpu.dot_dimension_numbers<[1], [0], [0], [1], [0, 0, 1, 1], [], []>} : vector<256x128xbf16>, vector<128x8xbf16>, vector<256x8xf32> -> vector<256x8xf32>
    %c0_31 = arith.constant 0 : index
    %c0_32 = arith.constant 0 : index
    %c0_33 = arith.constant 0 : index
    %72 = vector.load %arg8[%c0_31, %c0_32, %c0_33] : memref<1x256x8xf32, #tpu.memory_space<vmem>>, vector<1x256x8xf32>
    %73 = vector.shape_cast %72 : vector<1x256x8xf32> to vector<256x8xf32>
    %74 = vector.shape_cast %71 : vector<256x8xf32> to vector<1x256x8xf32>
    tpu.vector_store %arg8[%c0_31, %c0_32, %c0_33], %74 {strides = array<i32>} : memref<1x256x8xf32, #tpu.memory_space<vmem>>, vector<1x256x8xf32>,
    %cst_34 = arith.constant dense<0.000000e+00> : vector<8xf32>
    %75 = vector.multi_reduction <add>, %71, %cst_34 [0] : vector<256x8xf32> to vector<8xf32>
    %76 = vector.shape_cast %75 : vector<8xf32> to vector<1x8xf32>
    %77 = arith.mulf %71, %71 : vector<256x8xf32>
    %cst_35 = arith.constant dense<0.000000e+00> : vector<8xf32>
    %78 = vector.multi_reduction <add>, %77, %cst_35 [0] : vector<256x8xf32> to vector<8xf32>
    %79 = vector.shape_cast %78 : vector<8xf32> to vector<1x8xf32>
    %80 = tpu.concatenate %76, %79 in 1 : vector<1x8xf32>, vector<1x8xf32> -> vector<1x16xf32>
    %c0_36 = arith.constant 0 : index
    %c0_37 = arith.constant 0 : index
    %c0_38 = arith.constant 0 : index
    %c0_39 = arith.constant 0 : index
    %81 = vector.load %arg9[%c0_36, %c0_37, %c0_38, %c0_39] : memref<1x1x1x16xf32, #tpu.memory_space<vmem>>, vector<1x1x1x16xf32>
    %82 = vector.shape_cast %81 : vector<1x1x1x16xf32> to vector<1x16xf32>
    %83 = vector.shape_cast %80 : vector<1x16xf32> to vector<1x1x1x16xf32>
    tpu.vector_store %arg9[%c0_36, %c0_37, %c0_38, %c0_39], %83 {strides = array<i32>} : memref<1x1x1x16xf32, #tpu.memory_space<vmem>>, vector<1x1x1x16xf32>,
    return
  }
  func.func @transform_0(%arg0: i32, %arg1: i32) -> (i32, i32, i32, i32) {
    %c16_i32 = arith.constant 16 : i32
    %0 = arith.muli %arg1, %c16_i32 : i32
    %c1_i32 = arith.constant 1 : i32
    %1 = arith.subi %0, %c1_i32 : i32
    %c0_i32 = arith.constant 0 : i32
    %2 = arith.maxsi %1, %c0_i32 : i32
    %c0_i32_0 = arith.constant 0 : i32
    %c0_i32_1 = arith.constant 0 : i32
    %c0_i32_2 = arith.constant 0 : i32
    return %arg0, %2, %c0_i32_0, %c0_i32_1 : i32, i32, i32, i32
  }
  func.func @transform_1(%arg0: i32, %arg1: i32) -> (i32, i32, i32, i32) {
    %c0_i32 = arith.constant 0 : i32
    %c0_i32_0 = arith.constant 0 : i32
    %c0_i32_1 = arith.constant 0 : i32
    return %arg0, %arg1, %c0_i32, %c0_i32_0 : i32, i32, i32, i32
  }
  func.func @transform_2(%arg0: i32, %arg1: i32) -> (i32, i32, i32, i32) {
    %c1_i32 = arith.constant 1 : i32
    %0 = arith.addi %arg1, %c1_i32 : i32
    %c16_i32 = arith.constant 16 : i32
    %1 = arith.muli %0, %c16_i32 : i32
    %c15_i32 = arith.constant 15 : i32
    %2 = arith.minsi %1, %c15_i32 : i32
    %c0_i32 = arith.constant 0 : i32
    %c0_i32_0 = arith.constant 0 : i32
    %c0_i32_1 = arith.constant 0 : i32
    return %arg0, %2, %c0_i32, %c0_i32_0 : i32, i32, i32, i32
  }
  func.func @transform_3(%arg0: i32, %arg1: i32) -> (i32, i32) {
    %c0_i32 = arith.constant 0 : i32
    %c0_i32_0 = arith.constant 0 : i32
    %c0_i32_1 = arith.constant 0 : i32
    return %c0_i32, %c0_i32_0 : i32, i32
  }
  func.func @transform_4(%arg0: i32, %arg1: i32) -> (i32, i32) {
    %c0_i32 = arith.constant 0 : i32
    %c0_i32_0 = arith.constant 0 : i32
    %c0_i32_1 = arith.constant 0 : i32
    return %c0_i32, %c0_i32_0 : i32, i32
  }
  func.func @transform_5(%arg0: i32, %arg1: i32) -> (i32, i32) {
    %c0_i32 = arith.constant 0 : i32
    %c0_i32_0 = arith.constant 0 : i32
    %c0_i32_1 = arith.constant 0 : i32
    return %c0_i32, %c0_i32_0 : i32, i32
  }
  func.func @transform_6(%arg0: i32, %arg1: i32) -> (i32, i32, i32) {
    %c0_i32 = arith.constant 0 : i32
    %c0_i32_0 = arith.constant 0 : i32
    return %arg0, %arg1, %c0_i32 : i32, i32, i32
  }
  func.func @transform_7(%arg0: i32, %arg1: i32) -> (i32, i32, i32, i32) {
    %c0_i32 = arith.constant 0 : i32
    %c0_i32_0 = arith.constant 0 : i32
    %c0_i32_1 = arith.constant 0 : i32
    return %arg0, %arg1, %c0_i32, %c0_i32_0 : i32, i32, i32, i32
  }
}

</mosaic_0001>

<llo_original>
// kernel: ae_conv_block.5
$region0: #{ae_conv_block.5}
  #allocation0 [shape = 'u32[]', space=smem, size = 0x4, offset = 0x4, fixed_abs, tag = 'smem constant byte address 0x4 - core index']
  #allocation1 [shape = 'u32[72,128]{1,0:T(1,128)}', space=vmem, size = 0x9000, scoped, tag = 'internal scratch']
  %s0 = inlined_call_operand.vmem [shape: f32[512,8], index: 0, kind: input, shape index: {}, may-alias: {0,3}]
  %s1 = inlined_call_operand.vmem [shape: f32[1,8], index: 1, kind: input, shape index: {}]
  %s2 = inlined_call_operand.vmem [shape: f32[1,8], index: 2, kind: input, shape index: {}]
  %s3 = inlined_call_operand.vmem [shape: f32[512,8], index: 3, kind: output, shape index: {}, may-alias: {0,3}]
  %s4 = sld [smem:[#allocation0]]
  $region22: #{ae_conv_block.5} parent=0
    _
  %s6 = ssub.s32 1, %s4
  %s7 = scalar_select 0, %s6, %s4
  // Predicated region
  $region2: #{ae_conv_block.5} parent=0 // pred_check
    _
  $region3: #{ae_conv_block.5} parent=0 // pred_check_branch
    %9 = sbr.rel (0) target = $region5
  $region4: #{ae_conv_block.5} parent=0 // pred_region
    _
  $region5: #{ae_conv_block.5} parent=0 // pred_fallthru
    _
  // Predicated region
  $region6: #{ae_conv_block.5} parent=0 // pred_check
    _
  $region7: #{ae_conv_block.5} parent=0 // pred_check_branch
    %11 = sbr.rel (0) target = $region9
  $region8: #{ae_conv_block.5} parent=0 // pred_region
    _
  $region9: #{ae_conv_block.5} parent=0 // pred_fallthru
    _
  // Predicated region
  $region10: #{ae_conv_block.5} parent=0 // pred_check
    _
  $region11: #{ae_conv_block.5} parent=0 // pred_check_branch
    %13 = sbr.rel (0) target = $region13
  $region12: #{ae_conv_block.5} parent=0 // pred_region
    _
  $region13: #{ae_conv_block.5} parent=0 // pred_fallthru
    _
  %v14 = vld [vmem:[%s0] sm:$0xff]
  %v15 = vld [vmem:[%s0 + $0x8] sm:$0xff]
  %v16 = vld [vmem:[%s0 + $0x10] sm:$0xff]
  %v17 = vld [vmem:[%s0 + $0x18] sm:$0xff]
  %v18 = vld [vmem:[%s0 + $0x20] sm:$0xff]
  %v19 = vld [vmem:[%s0 + $0x28] sm:$0xff]
  %v20 = vld [vmem:[%s0 + $0x30] sm:$0xff]
  %v21 = vld [vmem:[%s0 + $0x38] sm:$0xff]
  %v22 = vld [vmem:[%s0 + $0x40] sm:$0xff]
  %v23 = vld [vmem:[%s0 + $0x48] sm:$0xff]
  %v24 = vld [vmem:[%s0 + $0x50] sm:$0xff]
  %v25 = vld [vmem:[%s0 + $0x58] sm:$0xff]
  %v26 = vld [vmem:[%s0 + $0x60] sm:$0xff]
  %v27 = vld [vmem:[%s0 + $0x68] sm:$0xff]
  %v28 = vld [vmem:[%s0 + $0x70] sm:$0xff]
  %v29 = vld [vmem:[%s0 + $0x78] sm:$0xff]
  %v30 = vld [vmem:[%s0 + $0x80] sm:$0xff]
  %v31 = vld [vmem:[%s0 + $0x88] sm:$0xff]
  %v32 = vld [vmem:[%s0 + $0x90] sm:$0xff]
  %v33 = vld [vmem:[%s0 + $0x98] sm:$0xff]
  %v34 = vld [vmem:[%s0 + $0xa0] sm:$0xff]
  %v35 = vld [vmem:[%s0 + $0xa8] sm:$0xff]
  %v36 = vld [vmem:[%s0 + $0xb0] sm:$0xff]
  %v37 = vld [vmem:[%s0 + $0xb8] sm:$0xff]
  %v38 = vld [vmem:[%s0 + $0xc0] sm:$0xff]
  %v39 = vld [vmem:[%s0 + $0xc8] sm:$0xff]
  %v40 = vld [vmem:[%s0 + $0xd0] sm:$0xff]
  %v41 = vld [vmem:[%s0 + $0xd8] sm:$0xff]
  %v42 = vld [vmem:[%s0 + $0xe0] sm:$0xff]
  %v43 = vld [vmem:[%s0 + $0xe8] sm:$0xff]
  %v44 = vld [vmem:[%s0 + $0xf0] sm:$0xff]
  %v45 = vld [vmem:[%s0 + $0xf8] sm:$0xff]
  %v46 = vld [vmem:[%s0 + $0x100] sm:$0xff]
  %v47 = vld [vmem:[%s0 + $0x108] sm:$0xff]
  %v48 = vld [vmem:[%s0 + $0x110] sm:$0xff]
  %v49 = vld [vmem:[%s0 + $0x118] sm:$0xff]
  %v50 = vld [vmem:[%s0 + $0x120] sm:$0xff]
  %v51 = vld [vmem:[%s0 + $0x128] sm:$0xff]
  %v52 = vld [vmem:[%s0 + $0x130] sm:$0xff]
  %v53 = vld [vmem:[%s0 + $0x138] sm:$0xff]
  %v54 = vld [vmem:[%s0 + $0x140] sm:$0xff]
  %v55 = vld [vmem:[%s0 + $0x148] sm:$0xff]
  %v56 = vld [vmem:[%s0 + $0x150] sm:$0xff]
  %v57 = vld [vmem:[%s0 + $0x158] sm:$0xff]
  %v58 = vld [vmem:[%s0 + $0x160] sm:$0xff]
  %v59 = vld [vmem:[%s0 + $0x168] sm:$0xff]
  %v60 = vld [vmem:[%s0 + $0x170] sm:$0xff]
  %v61 = vld [vmem:[%s0 + $0x178] sm:$0xff]
  %v62 = vld [vmem:[%s0 + $0x180] sm:$0xff]
  %v63 = vld [vmem:[%s0 + $0x188] sm:$0xff]
  %v64 = vld [vmem:[%s0 + $0x190] sm:$0xff]
  %v65 = vld [vmem:[%s0 + $0x198] sm:$0xff]
  %v66 = vld [vmem:[%s0 + $0x1a0] sm:$0xff]
  %v67 = vld [vmem:[%s0 + $0x1a8] sm:$0xff]
  %v68 = vld [vmem:[%s0 + $0x1b0] sm:$0xff]
  %v69 = vld [vmem:[%s0 + $0x1b8] sm:$0xff]
  %v70 = vld [vmem:[%s0 + $0x1c0] sm:$0xff]
  %v71 = vld [vmem:[%s0 + $0x1c8] sm:$0xff]
  %v72 = vld [vmem:[%s0 + $0x1d0] sm:$0xff]
  %v73 = vld [vmem:[%s0 + $0x1d8] sm:$0xff]
  %v74 = vld [vmem:[%s0 + $0x1e0] sm:$0xff]
  %v75 = vld [vmem:[%s0 + $0x1e8] sm:$0xff]
  %v76 = vld [vmem:[%s0 + $0x1f0] sm:$0xff]
  %v77 = vld [vmem:[%s0 + $0x1f8] sm:$0xff]
  %v78 = vld [vmem:[%s1] sm:$0x1]
  %v80 = vperm.slane %v78, 0
  %v82 = vmul.f32 %v14, %v80
  %v83 = vmul.f32 %v15, %v80
  %v84 = vmul.f32 %v16, %v80
  %v85 = vmul.f32 %v17, %v80
  %v86 = vmul.f32 %v18, %v80
  %v87 = vmul.f32 %v19, %v80
  %v88 = vmul.f32 %v20, %v80
  %v89 = vmul.f32 %v21, %v80
  %v90 = vmul.f32 %v22, %v80
  %v91 = vmul.f32 %v23, %v80
  %v92 = vmul.f32 %v24, %v80
  %v93 = vmul.f32 %v25, %v80
  %v94 = vmul.f32 %v26, %v80
  %v95 = vmul.f32 %v27, %v80
  %v96 = vmul.f32 %v28, %v80
  %v97 = vmul.f32 %v29, %v80
  %v98 = vmul.f32 %v30, %v80
  %v99 = vmul.f32 %v31, %v80
  %v100 = vmul.f32 %v32, %v80
  %v101 = vmul.f32 %v33, %v80
  %v102 = vmul.f32 %v34, %v80
  %v103 = vmul.f32 %v35, %v80
  %v104 = vmul.f32 %v36, %v80
  %v105 = vmul.f32 %v37, %v80
  %v106 = vmul.f32 %v38, %v80
  %v107 = vmul.f32 %v39, %v80
  %v108 = vmul.f32 %v40, %v80
  %v109 = vmul.f32 %v41, %v80
  %v110 = vmul.f32 %v42, %v80
  %v111 = vmul.f32 %v43, %v80
  %v112 = vmul.f32 %v44, %v80
  %v113 = vmul.f32 %v45, %v80
  %v114 = vmul.f32 %v46, %v80
  %v115 = vmul.f32 %v47, %v80
  %v116 = vmul.f32 %v48, %v80
  %v117 = vmul.f32 %v49, %v80
  %v118 = vmul.f32 %v50, %v80
  %v119 = vmul.f32 %v51, %v80
  %v120 = vmul.f32 %v52, %v80
  %v121 = vmul.f32 %v53, %v80
  %v122 = vmul.f32 %v54, %v80
  %v123 = vmul.f32 %v55, %v80
  %v124 = vmul.f32 %v56, %v80
  %v125 = vmul.f32 %v57, %v80
  %v126 = vmul.f32 %v58, %v80
  %v127 = vmul.f32 %v59, %v80
  %v128 = vmul.f32 %v60, %v80
  %v129 = vmul.f32 %v61, %v80
  %v130 = vmul.f32 %v62, %v80
  %v131 = vmul.f32 %v63, %v80
  %v132 = vmul.f32 %v64, %v80
  %v133 = vmul.f32 %v65, %v80
  %v134 = vmul.f32 %v66, %v80
  %v135 = vmul.f32 %v67, %v80
  %v136 = vmul.f32 %v68, %v80
  %v137 = vmul.f32 %v69, %v80
  %v138 = vmul.f32 %v70, %v80
  %v139 = vmul.f32 %v71, %v80
  %v140 = vmul.f32 %v72, %v80
  %v141 = vmul.f32 %v73, %v80
  %v142 = vmul.f32 %v74, %v80
  %v143 = vmul.f32 %v75, %v80
  %v144 = vmul.f32 %v76, %v80
  %v145 = vmul.f32 %v77, %v80
  %v146 = vld [vmem:[%s2] sm:$0x1]
  %v148 = vperm.slane %v146, 0
  %v150 = vadd.f32 %v82, %v148
  %v151 = vadd.f32 %v83, %v148
  %v152 = vadd.f32 %v84, %v148
  %v153 = vadd.f32 %v85, %v148
  %v154 = vadd.f32 %v86, %v148
  %v155 = vadd.f32 %v87, %v148
  %v156 = vadd.f32 %v88, %v148
  %v157 = vadd.f32 %v89, %v148
  %v158 = vadd.f32 %v90, %v148
  %v159 = vadd.f32 %v91, %v148
  %v160 = vadd.f32 %v92, %v148
  %v161 = vadd.f32 %v93, %v148
  %v162 = vadd.f32 %v94, %v148
  %v163 = vadd.f32 %v95, %v148
  %v164 = vadd.f32 %v96, %v148
  %v165 = vadd.f32 %v97, %v148
  %v166 = vadd.f32 %v98, %v148
  %v167 = vadd.f32 %v99, %v148
  %v168 = vadd.f32 %v100, %v148
  %v169 = vadd.f32 %v101, %v148
  %v170 = vadd.f32 %v102, %v148
  %v171 = vadd.f32 %v103, %v148
  %v172 = vadd.f32 %v104, %v148
  %v173 = vadd.f32 %v105, %v148
  %v174 = vadd.f32 %v106, %v148
  %v175 = vadd.f32 %v107, %v148
  %v176 = vadd.f32 %v108, %v148
  %v177 = vadd.f32 %v109, %v148
  %v178 = vadd.f32 %v110, %v148
  %v179 = vadd.f32 %v111, %v148
  %v180 = vadd.f32 %v112, %v148
  %v181 = vadd.f32 %v113, %v148
  %v182 = vadd.f32 %v114, %v148
  %v183 = vadd.f32 %v115, %v148
  %v184 = vadd.f32 %v116, %v148
  %v185 = vadd.f32 %v117, %v148
  %v186 = vadd.f32 %v118, %v148
  %v187 = vadd.f32 %v119, %v148
  %v188 = vadd.f32 %v120, %v148
  %v189 = vadd.f32 %v121, %v148
  %v190 = vadd.f32 %v122, %v148
  %v191 = vadd.f32 %v123, %v148
  %v192 = vadd.f32 %v124, %v148
  %v193 = vadd.f32 %v125, %v148
  %v194 = vadd.f32 %v126, %v148
  %v195 = vadd.f32 %v127, %v148
  %v196 = vadd.f32 %v128, %v148
  %v197 = vadd.f32 %v129, %v148
  %v198 = vadd.f32 %v130, %v148
  %v199 = vadd.f32 %v131, %v148
  %v200 = vadd.f32 %v132, %v148
  %v201 = vadd.f32 %v133, %v148
  %v202 = vadd.f32 %v134, %v148
  %v203 = vadd.f32 %v135, %v148
  %v204 = vadd.f32 %v136, %v148
  %v205 = vadd.f32 %v137, %v148
  %v206 = vadd.f32 %v138, %v148
  %v207 = vadd.f32 %v139, %v148
  %v208 = vadd.f32 %v140, %v148
  %v209 = vadd.f32 %v141, %v148
  %v210 = vadd.f32 %v142, %v148
  %v211 = vadd.f32 %v143, %v148
  %v212 = vadd.f32 %v144, %v148
  %v213 = vadd.f32 %v145, %v148
  %v214 = vmax.f32 %v150, 0.0
  %v215 = vmax.f32 %v151, 0.0
  %v216 = vmax.f32 %v152, 0.0
  %v217 = vmax.f32 %v153, 0.0
  %v218 = vmax.f32 %v154, 0.0
  %v219 = vmax.f32 %v155, 0.0
  %v220 = vmax.f32 %v156, 0.0
  %v221 = vmax.f32 %v157, 0.0
  %v222 = vmax.f32 %v158, 0.0
  %v223 = vmax.f32 %v159, 0.0
  %v224 = vmax.f32 %v160, 0.0
  %v225 = vmax.f32 %v161, 0.0
  %v226 = vmax.f32 %v162, 0.0
  %v227 = vmax.f32 %v163, 0.0
  %v228 = vmax.f32 %v164, 0.0
  %v229 = vmax.f32 %v165, 0.0
  %v230 = vmax.f32 %v166, 0.0
  %v231 = vmax.f32 %v167, 0.0
  %v232 = vmax.f32 %v168, 0.0
  %v233 = vmax.f32 %v169, 0.0
  %v234 = vmax.f32 %v170, 0.0
  %v235 = vmax.f32 %v171, 0.0
  %v236 = vmax.f32 %v172, 0.0
  %v237 = vmax.f32 %v173, 0.0
  %v238 = vmax.f32 %v174, 0.0
  %v239 = vmax.f32 %v175, 0.0
  %v240 = vmax.f32 %v176, 0.0
  %v241 = vmax.f32 %v177, 0.0
  %v242 = vmax.f32 %v178, 0.0
  %v243 = vmax.f32 %v179, 0.0
  %v244 = vmax.f32 %v180, 0.0
  %v245 = vmax.f32 %v181, 0.0
  %v246 = vmax.f32 %v182, 0.0
  %v247 = vmax.f32 %v183, 0.0
  %v248 = vmax.f32 %v184, 0.0
  %v249 = vmax.f32 %v185, 0.0
  %v250 = vmax.f32 %v186, 0.0
  %v251 = vmax.f32 %v187, 0.0
  %v252 = vmax.f32 %v188, 0.0
  %v253 = vmax.f32 %v189, 0.0
  %v254 = vmax.f32 %v190, 0.0
  %v255 = vmax.f32 %v191, 0.0
  %v256 = vmax.f32 %v192, 0.0
  %v257 = vmax.f32 %v193, 0.0
  %v258 = vmax.f32 %v194, 0.0
  %v259 = vmax.f32 %v195, 0.0
  %v260 = vmax.f32 %v196, 0.0
  %v261 = vmax.f32 %v197, 0.0
  %v262 = vmax.f32 %v198, 0.0
  %v263 = vmax.f32 %v199, 0.0
  %v264 = vmax.f32 %v200, 0.0
  %v265 = vmax.f32 %v201, 0.0
  %v266 = vmax.f32 %v202, 0.0
  %v267 = vmax.f32 %v203, 0.0
  %v268 = vmax.f32 %v204, 0.0
  %v269 = vmax.f32 %v205, 0.0
  %v270 = vmax.f32 %v206, 0.0
  %v271 = vmax.f32 %v207, 0.0
  %v272 = vmax.f32 %v208, 0.0
  %v273 = vmax.f32 %v209, 0.0
  %v274 = vmax.f32 %v210, 0.0
  %v275 = vmax.f32 %v211, 0.0
  %v276 = vmax.f32 %v212, 0.0
  %v277 = vmax.f32 %v213, 0.0
  %vm278 = vcmask 64512
  %279 = vst.msk [vmem:[%s3] sm:$0xff] %vm278, %v214
  %280 = vst.msk [vmem:[%s3 + $0x8] sm:$0xff] %vm278, %v215
  %281 = vst.msk [vmem:[%s3 + $0x10] sm:$0xff] %vm278, %v216
  %282 = vst.msk [vmem:[%s3 + $0x18] sm:$0xff] %vm278, %v217
  %283 = vst.msk [vmem:[%s3 + $0x20] sm:$0xff] %vm278, %v218
  %284 = vst.msk [vmem:[%s3 + $0x28] sm:$0xff] %vm278, %v219
  %285 = vst.msk [vmem:[%s3 + $0x30] sm:$0xff] %vm278, %v220
  %286 = vst.msk [vmem:[%s3 + $0x38] sm:$0xff] %vm278, %v221
  %287 = vst.msk [vmem:[%s3 + $0x40] sm:$0xff] %vm278, %v222
  %288 = vst.msk [vmem:[%s3 + $0x48] sm:$0xff] %vm278, %v223
  %289 = vst.msk [vmem:[%s3 + $0x50] sm:$0xff] %vm278, %v224
  %290 = vst.msk [vmem:[%s3 + $0x58] sm:$0xff] %vm278, %v225
  %291 = vst.msk [vmem:[%s3 + $0x60] sm:$0xff] %vm278, %v226
  %292 = vst.msk [vmem:[%s3 + $0x68] sm:$0xff] %vm278, %v227
  %293 = vst.msk [vmem:[%s3 + $0x70] sm:$0xff] %vm278, %v228
  %294 = vst.msk [vmem:[%s3 + $0x78] sm:$0xff] %vm278, %v229
  %295 = vst.msk [vmem:[%s3 + $0x80] sm:$0xff] %vm278, %v230
  %296 = vst.msk [vmem:[%s3 + $0x88] sm:$0xff] %vm278, %v231
  %297 = vst.msk [vmem:[%s3 + $0x90] sm:$0xff] %vm278, %v232
  %298 = vst.msk [vmem:[%s3 + $0x98] sm:$0xff] %vm278, %v233
  %299 = vst.msk [vmem:[%s3 + $0xa0] sm:$0xff] %vm278, %v234
  %300 = vst.msk [vmem:[%s3 + $0xa8] sm:$0xff] %vm278, %v235
  %301 = vst.msk [vmem:[%s3 + $0xb0] sm:$0xff] %vm278, %v236
  %302 = vst.msk [vmem:[%s3 + $0xb8] sm:$0xff] %vm278, %v237
  %303 = vst.msk [vmem:[%s3 + $0xc0] sm:$0xff] %vm278, %v238
  %304 = vst.msk [vmem:[%s3 + $0xc8] sm:$0xff] %vm278, %v239
  %305 = vst.msk [vmem:[%s3 + $0xd0] sm:$0xff] %vm278, %v240
  %306 = vst.msk [vmem:[%s3 + $0xd8] sm:$0xff] %vm278, %v241
  %307 = vst.msk [vmem:[%s3 + $0xe0] sm:$0xff] %vm278, %v242
  %308 = vst.msk [vmem:[%s3 + $0xe8] sm:$0xff] %vm278, %v243
  %309 = vst.msk [vmem:[%s3 + $0xf0] sm:$0xff] %vm278, %v244
  %310 = vst.msk [vmem:[%s3 + $0xf8] sm:$0xff] %vm278, %v245
  %311 = vst.msk [vmem:[%s3 + $0x100] sm:$0xff] %vm278, %v246
  %312 = vst.msk [vmem:[%s3 + $0x108] sm:$0xff] %vm278, %v247
  %313 = vst.msk [vmem:[%s3 + $0x110] sm:$0xff] %vm278, %v248
  %314 = vst.msk [vmem:[%s3 + $0x118] sm:$0xff] %vm278, %v249
  %315 = vst.msk [vmem:[%s3 + $0x120] sm:$0xff] %vm278, %v250
  %316 = vst.msk [vmem:[%s3 + $0x128] sm:$0xff] %vm278, %v251
  %317 = vst.msk [vmem:[%s3 + $0x130] sm:$0xff] %vm278, %v252
  %318 = vst.msk [vmem:[%s3 + $0x138] sm:$0xff] %vm278, %v253
  %319 = vst.msk [vmem:[%s3 + $0x140] sm:$0xff] %vm278, %v254
  %320 = vst.msk [vmem:[%s3 + $0x148] sm:$0xff] %vm278, %v255
  %321 = vst.msk [vmem:[%s3 + $0x150] sm:$0xff] %vm278, %v256
  %322 = vst.msk [vmem:[%s3 + $0x158] sm:$0xff] %vm278, %v257
  %323 = vst.msk [vmem:[%s3 + $0x160] sm:$0xff] %vm278, %v258
  %324 = vst.msk [vmem:[%s3 + $0x168] sm:$0xff] %vm278, %v259
  %325 = vst.msk [vmem:[%s3 + $0x170] sm:$0xff] %vm278, %v260
  %326 = vst.msk [vmem:[%s3 + $0x178] sm:$0xff] %vm278, %v261
  %327 = vst.msk [vmem:[%s3 + $0x180] sm:$0xff] %vm278, %v262
  %328 = vst.msk [vmem:[%s3 + $0x188] sm:$0xff] %vm278, %v263
  %329 = vst.msk [vmem:[%s3 + $0x190] sm:$0xff] %vm278, %v264
  %330 = vst.msk [vmem:[%s3 + $0x198] sm:$0xff] %vm278, %v265
  %331 = vst.msk [vmem:[%s3 + $0x1a0] sm:$0xff] %vm278, %v266
  %332 = vst.msk [vmem:[%s3 + $0x1a8] sm:$0xff] %vm278, %v267
  %333 = vst.msk [vmem:[%s3 + $0x1b0] sm:$0xff] %vm278, %v268
  %334 = vst.msk [vmem:[%s3 + $0x1b8] sm:$0xff] %vm278, %v269
  %335 = vst.msk [vmem:[%s3 + $0x1c0] sm:$0xff] %vm278, %v270
  %336 = vst.msk [vmem:[%s3 + $0x1c8] sm:$0xff] %vm278, %v271
  %337 = vst.msk [vmem:[%s3 + $0x1d0] sm:$0xff] %vm278, %v272
  %338 = vst.msk [vmem:[%s3 + $0x1d8] sm:$0xff] %vm278, %v273
  %339 = vst.msk [vmem:[%s3 + $0x1e0] sm:$0xff] %vm278, %v274
  %340 = vst.msk [vmem:[%s3 + $0x1e8] sm:$0xff] %vm278, %v275
  %341 = vst.msk [vmem:[%s3 + $0x1f0] sm:$0xff] %vm278, %v276
  %342 = vst.msk [vmem:[%s3 + $0x1f8] sm:$0xff] %vm278, %v277
  // Predicated region
  $region14: #{ae_conv_block.5} parent=0 // pred_check
    _
  $region15: #{ae_conv_block.5} parent=0 // pred_check_branch
    %344 = sbr.rel (0) target = $region17
  $region16: #{ae_conv_block.5} parent=0 // pred_region
    _
  $region17: #{ae_conv_block.5} parent=0 // pred_fallthru
    _
  // Predicated region
  $region18: #{ae_conv_block.5} parent=0 // pred_check
    _
  $region19: #{ae_conv_block.5} parent=0 // pred_check_branch
    %346 = sbr.rel (0) target = $region21
  $region20: #{ae_conv_block.5} parent=0 // pred_region
    _
  $region21: #{ae_conv_block.5} parent=0 // pred_fallthru
    _

// kernel: ae_conv_block.4
$region0: #{ae_conv_block.4}
  #allocation0 [shape = 'u32[]', space=smem, size = 0x4, offset = 0x4, fixed_abs, tag = 'smem constant byte address 0x4 - core index']
  #allocation1 [shape = 'u32[72,128]{1,0:T(1,128)}', space=vmem, size = 0x9000, scoped, tag = 'internal scratch']
  %s0 = inlined_call_operand.vmem [shape: f32[2,16,16,8], index: 0, kind: input, shape index: {}, may-alias: {0,1,2}]
  %s1 = inlined_call_operand.vmem [shape: f32[2,16,16,8], index: 1, kind: input, shape index: {}, may-alias: {0,1,2}]
  %s2 = inlined_call_operand.vmem [shape: f32[2,16,16,8], index: 2, kind: input, shape index: {}, may-alias: {0,1,2}]
  %s3 = inlined_call_operand.vmem [shape: f32[1,8], index: 3, kind: input, shape index: {}]
  %s4 = inlined_call_operand.vmem [shape: f32[1,8], index: 4, kind: input, shape index: {}]
  %s5 = inlined_call_operand.vmem [shape: bf16[128,8], index: 5, kind: input, shape index: {}]
  %s6 = inlined_call_operand.vmem [shape: f32[2,256,8], index: 6, kind: output, shape index: {0}]
  %s7 = inlined_call_operand.vmem [shape: f32[2,1,1,16], index: 7, kind: output, shape index: {1}]
  %8 = xla_tuple %s6, %s7
  %s9 = sld [smem:[#allocation0]]
  $region65: #{ae_conv_block.4} parent=0
    _
  %s11 = ssub.s32 1, %s9
  %s12 = scalar_select 0, %s11, %s9
  loop: start=0, step=1, limit=4
  $region2: #{ae_conv_block.4} parent=0 // loop_pre_header
    _
  $region3: #{ae_conv_block.4} parent=0 // loop_header
    %s14 = sphi 0, %s18
    %p15 = scmp.ge.s32.totalorder %s14, 4
    %s21 = sphi 0, %s33
    %s22 = sphi 0, %s29
    %s23 = sphi 0, %s21
    %s24 = sphi 0, %s22
    %s25 = sphi 0, %s23
    %s26 = sphi 0, %s24
    %s46 = sphi 0, %s48
    %s49 = sphi 0, %s46
    %s50 = sphi 0, %s49
    %s66 = sphi 0, %s50
    %s74 = sphi 0, %s76
    %s77 = sphi 0, %s74
    %s78 = sphi 0, %s77
    %s94 = sphi 0, %s78
    %s110 = sphi 0, %s112
    %s113 = sphi 0, %s110
    %s114 = sphi 0, %s113
    %s130 = sphi 0, %s114
    %s134 = sphi 0, %s134
    %s136 = sphi 0, %s134
    %s137 = sphi 0, %s136
    %s151 = sphi 0, %s137
    %s155 = sphi 0, %s155
    %s157 = sphi 0, %s155
    %s158 = sphi 0, %s157
    %s172 = sphi 0, %s158
    %s176 = sphi 0, %s176
    %s178 = sphi 0, %s176
    %s179 = sphi 0, %s178
    %s193 = sphi 0, %s179
    %s201 = sphi 0, %s203
    %s204 = sphi 0, %s201
    %s205 = sphi 0, %s204
    %s221 = sphi 0, %s205
    %s229 = sphi 0, %s231
    %s232 = sphi 0, %s229
    %s233 = sphi 0, %s232
    %s249 = sphi 0, %s233
  $region4: #{ae_conv_block.4} parent=0 // loop_header_branch
    %17 = sbr.rel (%p15) target = $region8
  $region5: #{ae_conv_block.4} parent=0 // loop_body
    %s19 = ssub.s32 %s14, 1
    %s20 = ssub.s32 %s14, 2
    %s27 = sadd.s32 1, %s22
    %p28 = scmp.ge.s32.totalorder %s27, 1
    %s29 = scalar_select %p28, 0, %s27
    %s30 = sadd.s32 1, %s21
    %s31 = scalar_select %p28, %s30, %s21
    %p32 = scmp.ge.s32.totalorder %s31, 2
    %s33 = scalar_select %p32, 0, %s31
    %s34 = smul.u32 %s22, 16
    %s35 = ssub.s32 %s34, 1
    %p36 = scmp.gt.s32.totalorder %s35, 0
    %s37 = scalar_select %p36, %s35, 0
    %s38 = smul.u32 %s29, 16
    %s39 = ssub.s32 %s38, 1
    %p40 = scmp.gt.s32.totalorder %s39, 0
    %s41 = scalar_select %p40, %s39, 0
    %s42 = ssub.s32 %s21, %s33
    %s43 = ssub.s32 %s37, %s41
    %s44 = sor.u32 %s42, %s43
    %p45 = scmp.eq.s32.totalorder %s44, 0
    %s47 = sadd.s32 %s46, 1
    %s48 = scalar_select %p45, %s46, %s47
    %p51 = pneg %p45
    %p52 = scmp.eq.s32.totalorder %s14, 1
    %p53 = por %p51, %p52
    %p54 = scmp.ne.s32.totalorder %s46, %s49
    %p55 = scmp.eq.s32.totalorder %s14, 0
    %p56 = por %p54, %p55
    %p57 = scmp.ne.s32.totalorder %s46, %s49
    %p58 = scmp.eq.s32.totalorder %s19, 1
    %p59 = por %p57, %p58
    %p60 = scmp.ne.s32.totalorder %s49, %s50
    %p61 = scmp.eq.s32.totalorder %s19, 0
    %p62 = por %p60, %p61
    %p63 = scmp.ne.s32.totalorder %s49, %s50
    %p64 = scmp.eq.s32.totalorder %s20, 1
    %p65 = por %p63, %p64
    %p67 = scmp.ne.s32.totalorder %s50, %s66
    %p68 = scmp.eq.s32.totalorder %s20, 0
    %p69 = por %p67, %p68
    %s70 = ssub.s32 %s21, %s33
    %s71 = ssub.s32 %s22, %s29
    %s72 = sor.u32 %s70, %s71
    %p73 = scmp.eq.s32.totalorder %s72, 0
    %s75 = sadd.s32 %s74, 1
    %s76 = scalar_select %p73, %s74, %s75
    %p79 = pneg %p73
    %p80 = scmp.eq.s32.totalorder %s14, 1
    %p81 = por %p79, %p80
    %p82 = scmp.ne.s32.totalorder %s74, %s77
    %p83 = scmp.eq.s32.totalorder %s14, 0
    %p84 = por %p82, %p83
    %p85 = scmp.ne.s32.totalorder %s74, %s77
    %p86 = scmp.eq.s32.totalorder %s19, 1
    %p87 = por %p85, %p86
    %p88 = scmp.ne.s32.totalorder %s77, %s78
    %p89 = scmp.eq.s32.totalorder %s19, 0
    %p90 = por %p88, %p89
    %p91 = scmp.ne.s32.totalorder %s77, %s78
    %p92 = scmp.eq.s32.totalorder %s20, 1
    %p93 = por %p91, %p92
    %p95 = scmp.ne.s32.totalorder %s78, %s94
    %p96 = scmp.eq.s32.totalorder %s20, 0
    %p97 = por %p95, %p96
    %s98 = sadd.s32 %s22, 1
    %s99 = smul.u32 %s98, 16
    %p100 = scmp.lt.s32.totalorder %s99, 15
    %s101 = scalar_select %p100, %s99, 15
    %s102 = sadd.s32 %s29, 1
    %s103 = smul.u32 %s102, 16
    %p104 = scmp.lt.s32.totalorder %s103, 15
    %s105 = scalar_select %p104, %s103, 15
    %s106 = ssub.s32 %s21, %s33
    %s107 = ssub.s32 %s101, %s105
    %s108 = sor.u32 %s106, %s107
    %p109 = scmp.eq.s32.totalorder %s108, 0
    %s111 = sadd.s32 %s110, 1
    %s112 = scalar_select %p109, %s110, %s111
    %p115 = pneg %p109
    %p116 = scmp.eq.s32.totalorder %s14, 1
    %p117 = por %p115, %p116
    %p118 = scmp.ne.s32.totalorder %s110, %s113
    %p119 = scmp.eq.s32.totalorder %s14, 0
    %p120 = por %p118, %p119
    %p121 = scmp.ne.s32.totalorder %s110, %s113
    %p122 = scmp.eq.s32.totalorder %s19, 1
    %p123 = por %p121, %p122
    %p124 = scmp.ne.s32.totalorder %s113, %s114
    %p125 = scmp.eq.s32.totalorder %s19, 0
    %p126 = por %p124, %p125
    %p127 = scmp.ne.s32.totalorder %s113, %s114
    %p128 = scmp.eq.s32.totalorder %s20, 1
    %p129 = por %p127, %p128
    %p131 = scmp.ne.s32.totalorder %s114, %s130
    %p132 = scmp.eq.s32.totalorder %s20, 0
    %p133 = por %p131, %p132
    %s135 = sadd.s32 %s134, 1
    %p138 = scmp.eq.s32.totalorder %s14, 1
    %p139 = scmp.ne.s32.totalorder %s134, %s136
    %p140 = scmp.eq.s32.totalorder %s14, 0
    %p141 = por %p139, %p140
    %p142 = scmp.ne.s32.totalorder %s134, %s136
    %p143 = scmp.eq.s32.totalorder %s19, 1
    %p144 = por %p142, %p143
    %p145 = scmp.ne.s32.totalorder %s136, %s137
    %p146 = scmp.eq.s32.totalorder %s19, 0
    %p147 = por %p145, %p146
    %p148 = scmp.ne.s32.totalorder %s136, %s137
    %p149 = scmp.eq.s32.totalorder %s20, 1
    %p150 = por %p148, %p149
    %p152 = scmp.ne.s32.totalorder %s137, %s151
    %p153 = scmp.eq.s32.totalorder %s20, 0
    %p154 = por %p152, %p153
    %s156 = sadd.s32 %s155, 1
    %p159 = scmp.eq.s32.totalorder %s14, 1
    %p160 = scmp.ne.s32.totalorder %s155, %s157
    %p161 = scmp.eq.s32.totalorder %s14, 0
    %p162 = por %p160, %p161
    %p163 = scmp.ne.s32.totalorder %s155, %s157
    %p164 = scmp.eq.s32.totalorder %s19, 1
    %p165 = por %p163, %p164
    %p166 = scmp.ne.s32.totalorder %s157, %s158
    %p167 = scmp.eq.s32.totalorder %s19, 0
    %p168 = por %p166, %p167
    %p169 = scmp.ne.s32.totalorder %s157, %s158
    %p170 = scmp.eq.s32.totalorder %s20, 1
    %p171 = por %p169, %p170
    %p173 = scmp.ne.s32.totalorder %s158, %s172
    %p174 = scmp.eq.s32.totalorder %s20, 0
    %p175 = por %p173, %p174
    %s177 = sadd.s32 %s176, 1
    %p180 = scmp.eq.s32.totalorder %s14, 1
    %p181 = scmp.ne.s32.totalorder %s176, %s178
    %p182 = scmp.eq.s32.totalorder %s14, 0
    %p183 = por %p181, %p182
    %p184 = scmp.ne.s32.totalorder %s176, %s178
    %p185 = scmp.eq.s32.totalorder %s19, 1
    %p186 = por %p184, %p185
    %p187 = scmp.ne.s32.totalorder %s178, %s179
    %p188 = scmp.eq.s32.totalorder %s19, 0
    %p189 = por %p187, %p188
    %p190 = scmp.ne.s32.totalorder %s178, %s179
    %p191 = scmp.eq.s32.totalorder %s20, 1
    %p192 = por %p190, %p191
    %p194 = scmp.ne.s32.totalorder %s179, %s193
    %p195 = scmp.eq.s32.totalorder %s20, 0
    %p196 = por %p194, %p195
    %s197 = ssub.s32 %s21, %s33
    %s198 = ssub.s32 %s22, %s29
    %s199 = sor.u32 %s197, %s198
    %p200 = scmp.eq.s32.totalorder %s199, 0
    %s202 = sadd.s32 %s201, 1
    %s203 = scalar_select %p200, %s201, %s202
    %p206 = pneg %p200
    %p207 = scmp.eq.s32.totalorder %s14, 1
    %p208 = por %p206, %p207
    %p209 = scmp.ne.s32.totalorder %s201, %s204
    %p210 = scmp.eq.s32.totalorder %s14, 0
    %p211 = por %p209, %p210
    %p212 = scmp.ne.s32.totalorder %s201, %s204
    %p213 = scmp.eq.s32.totalorder %s19, 1
    %p214 = por %p212, %p213
    %p215 = scmp.ne.s32.totalorder %s204, %s205
    %p216 = scmp.eq.s32.totalorder %s19, 0
    %p217 = por %p215, %p216
    %p218 = scmp.ne.s32.totalorder %s204, %s205
    %p219 = scmp.eq.s32.totalorder %s20, 1
    %p220 = por %p218, %p219
    %p222 = scmp.ne.s32.totalorder %s205, %s221
    %p223 = scmp.eq.s32.totalorder %s20, 0
    %p224 = por %p222, %p223
    %s225 = ssub.s32 %s21, %s33
    %s226 = ssub.s32 %s22, %s29
    %s227 = sor.u32 %s225, %s226
    %p228 = scmp.eq.s32.totalorder %s227, 0
    %s230 = sadd.s32 %s229, 1
    %s231 = scalar_select %p228, %s229, %s230
    %p234 = pneg %p228
    %p235 = scmp.eq.s32.totalorder %s14, 1
    %p236 = por %p234, %p235
    %p237 = scmp.ne.s32.totalorder %s229, %s232
    %p238 = scmp.eq.s32.totalorder %s14, 0
    %p239 = por %p237, %p238
    %p240 = scmp.ne.s32.totalorder %s229, %s232
    %p241 = scmp.eq.s32.totalorder %s19, 1
    %p242 = por %p240, %p241
    %p243 = scmp.ne.s32.totalorder %s232, %s233
    %p244 = scmp.eq.s32.totalorder %s19, 0
    %p245 = por %p243, %p244
    %p246 = scmp.ne.s32.totalorder %s232, %s233
    %p247 = scmp.eq.s32.totalorder %s20, 1
    %p248 = por %p246, %p247
    %p250 = scmp.ne.s32.totalorder %s233, %s249
    %p251 = scmp.eq.s32.totalorder %s20, 0
    %p252 = por %p250, %p251
    %p253 = scmp.le.s32.totalorder 1, %s14
    %p254 = scmp.lt.s32.totalorder %s14, 3
    %p255 = pnand %p253, %p254
    %p256 = pneg %p255
    // Predicated region
    $region9: #{ae_conv_block.4} parent=5 // pred_check
      _
    $region10: #{ae_conv_block.4} parent=5 // pred_check_branch
      %258 = sbr.rel (%p255) target = $region12
    $region11: #{ae_conv_block.4} parent=5 // pred_region
      %s259 = ssub.s32 %s14, 1
      // Predicated region
      $region13: #{ae_conv_block.4} parent=11 // pred_check
        %p260 = pneg %p147
      $region14: #{ae_conv_block.4} parent=11 // pred_check_branch
        %262 = sbr.rel (%p260) target = $region16
      $region15: #{ae_conv_block.4} parent=11 // pred_region
        _
      $region16: #{ae_conv_block.4} parent=11 // pred_fallthru
        _
      // Predicated region
      $region17: #{ae_conv_block.4} parent=11 // pred_check
        %p263 = pneg %p168
      $region18: #{ae_conv_block.4} parent=11 // pred_check_branch
        %265 = sbr.rel (%p263) target = $region20
      $region19: #{ae_conv_block.4} parent=11 // pred_region
        _
      $region20: #{ae_conv_block.4} parent=11 // pred_fallthru
        _
      // Predicated region
      $region21: #{ae_conv_block.4} parent=11 // pred_check
        %p266 = pneg %p189
      $region22: #{ae_conv_block.4} parent=11 // pred_check_branch
        %268 = sbr.rel (%p266) target = $region24
      $region23: #{ae_conv_block.4} parent=11 // pred_region
        _
      $region24: #{ae_conv_block.4} parent=11 // pred_fallthru
        _
    $region12: #{ae_conv_block.4} parent=5 // pred_fallthru
      _
    %p269 = scmp.lt.s32.totalorder %s14, 2
    // Predicated region
    $region25: #{ae_conv_block.4} parent=5 // pred_check
      %p270 = pneg %p269
    $region26: #{ae_conv_block.4} parent=5 // pred_check_branch
      %272 = sbr.rel (%p270) target = $region28
    $region27: #{ae_conv_block.4} parent=5 // pred_region
      // Predicated region
      $region29: #{ae_conv_block.4} parent=27 // pred_check
        %p273 = pneg %p56
      $region30: #{ae_conv_block.4} parent=27 // pred_check_branch
        %275 = sbr.rel (%p273) target = $region32
      $region31: #{ae_conv_block.4} parent=27 // pred_region
        %s276 = smul.u32 %s22, 16
        %s277 = ssub.s32 %s276, 1
        %p278 = scmp.gt.s32.totalorder %s277, 0
        %s279 = scalar_select %p278, %s277, 0
        %p280 = scmp.lt.s32.totalorder %s21, 1
        %s281 = scalar_select %p280, %s21, 1
        %p282 = scmp.lt.s32.totalorder %s279, 15
        %s283 = scalar_select %p282, %s279, 15
        %s284 = smul.addr %s283, 2
        %s285 = smul.addr %s281, 32
        %s286 = sadd.s32 %s284, %s285
        %s287 = smul.addr %s286, 8
        %s288 = scalar_lea.vmem %s0, %s287
        %s289 = smul.u32 %s22, 16
        %s290 = ssub.s32 %s289, 1
        %p291 = scmp.gt.s32.totalorder %s290, 0
        %s292 = scalar_select %p291, %s290, 0
      $region32: #{ae_conv_block.4} parent=27 // pred_fallthru
        _
      // Predicated region
      $region33: #{ae_conv_block.4} parent=27 // pred_check
        %p293 = pneg %p84
      $region34: #{ae_conv_block.4} parent=27 // pred_check_branch
        %295 = sbr.rel (%p293) target = $region36
      $region35: #{ae_conv_block.4} parent=27 // pred_region
        %s296 = smul.u32 16, %s22
        %p297 = scmp.lt.s32.totalorder %s21, 1
        %s298 = scalar_select %p297, %s21, 1
        %p299 = scmp.lt.s32.totalorder %s296, 15
        %s300 = scalar_select %p299, %s296, 15
        %s301 = smul.addr %s300, 2
        %s302 = smul.addr %s298, 32
        %s303 = sadd.s32 %s301, %s302
        %s304 = smul.addr %s303, 8
        %s305 = scalar_lea.vmem %s1, %s304
        %s306 = smul.u32 16, %s22
      $region36: #{ae_conv_block.4} parent=27 // pred_fallthru
        _
      // Predicated region
      $region37: #{ae_conv_block.4} parent=27 // pred_check
        %p307 = pneg %p120
      $region38: #{ae_conv_block.4} parent=27 // pred_check_branch
        %309 = sbr.rel (%p307) target = $region40
      $region39: #{ae_conv_block.4} parent=27 // pred_region
        %s310 = sadd.s32 %s22, 1
        %s311 = smul.u32 %s310, 16
        %p312 = scmp.lt.s32.totalorder %s311, 15
        %s313 = scalar_select %p312, %s311, 15
        %p314 = scmp.lt.s32.totalorder %s21, 1
        %s315 = scalar_select %p314, %s21, 1
        %p316 = scmp.lt.s32.totalorder %s313, 15
        %s317 = scalar_select %p316, %s313, 15
        %s318 = smul.addr %s317, 2
        %s319 = smul.addr %s315, 32
        %s320 = sadd.s32 %s318, %s319
        %s321 = smul.addr %s320, 8
        %s322 = scalar_lea.vmem %s2, %s321
        %s323 = sadd.s32 %s22, 1
        %s324 = smul.u32 %s323, 16
        %p325 = scmp.lt.s32.totalorder %s324, 15
        %s326 = scalar_select %p325, %s324, 15
      $region40: #{ae_conv_block.4} parent=27 // pred_fallthru
        _
    $region28: #{ae_conv_block.4} parent=5 // pred_fallthru
      _
    %p327 = scmp.le.s32.totalorder 1, %s14
    %p328 = scmp.lt.s32.totalorder %s14, 3
    %p329 = pnand %p327, %p328
    %p330 = pneg %p329
    // Predicated region
    $region41: #{ae_conv_block.4} parent=5 // pred_check
      _
    $region42: #{ae_conv_block.4} parent=5 // pred_check_branch
      %332 = sbr.rel (%p329) target = $region44
    $region43: #{ae_conv_block.4} parent=5 // pred_region
      %s333 = ssub.s32 %s14, 1
      %s334 = smul.u32 %s24, 16
      %s335 = ssub.s32 %s334, 1
      %p336 = scmp.gt.s32.totalorder %s335, 0
      %s337 = scalar_select %p336, %s335, 0
      %p338 = scmp.lt.s32.totalorder %s23, 1
      %s339 = scalar_select %p338, %s23, 1
      %p340 = scmp.lt.s32.totalorder %s337, 15
      %s341 = scalar_select %p340, %s337, 15
      %s342 = smul.addr %s341, 2
      %s343 = smul.addr %s339, 32
      %s344 = sadd.s32 %s342, %s343
      %s345 = smul.addr %s344, 8
      %s346 = scalar_lea.vmem %s0, %s345
      %p347 = pneg %p62
      %p348 = pneg %p59
      %s349 = smul.u32 16, %s24
      %p350 = scmp.lt.s32.totalorder %s23, 1
      %s351 = scalar_select %p350, %s23, 1
      %p352 = scmp.lt.s32.totalorder %s349, 15
      %s353 = scalar_select %p352, %s349, 15
      %s354 = smul.addr %s353, 2
      %s355 = smul.addr %s351, 32
      %s356 = sadd.s32 %s354, %s355
      %s357 = smul.addr %s356, 8
      %s358 = scalar_lea.vmem %s1, %s357
      %p359 = pneg %p90
      %p360 = pneg %p87
      %s361 = sadd.s32 %s24, 1
      %s362 = smul.u32 %s361, 16
      %p363 = scmp.lt.s32.totalorder %s362, 15
      %s364 = scalar_select %p363, %s362, 15
      %p365 = scmp.lt.s32.totalorder %s23, 1
      %s366 = scalar_select %p365, %s23, 1
      %p367 = scmp.lt.s32.totalorder %s364, 15
      %s368 = scalar_select %p367, %s364, 15
      %s369 = smul.addr %s368, 2
      %s370 = smul.addr %s366, 32
      %s371 = sadd.s32 %s369, %s370
      %s372 = smul.addr %s371, 8
      %s373 = scalar_lea.vmem %s2, %s372
      %p374 = pneg %p126
      %p375 = pneg %p123
      %p376 = pneg %p147
      %p377 = pneg %p144
      %p378 = pneg %p168
      %p379 = pneg %p165
      %p380 = pneg %p189
      %p381 = pneg %p186
      %p382 = pneg %p217
      %p383 = pneg %p214
      %s384 = smul.u32 32, %s24
      %p385 = scmp.lt.s32.totalorder %s23, 1
      %s386 = scalar_select %p385, %s23, 1
      %p387 = scmp.lt.s32.totalorder %s384, 31
      %s388 = scalar_select %p387, %s384, 31
      %s389 = smul.addr %s386, 32
      %s390 = sadd.s32 %s388, %s389
      %s391 = smul.addr %s390, 8
      %s392 = scalar_lea.vmem %s6, %s391
      %p393 = pneg %p245
      %p394 = pneg %p242
      %p395 = scmp.lt.s32.totalorder %s23, 1
      %s396 = scalar_select %p395, %s23, 1
      %p397 = scmp.lt.s32.totalorder %s24, 0
      %s398 = scalar_select %p397, %s24, 0
      %s399 = sadd.s32 %s398, %s396
      %s400 = scalar_lea.vmem %s7, %s399
      %s401 = smul.u32 %s24, 16
      %s402 = ssub.s32 %s401, 1
      %p403 = scmp.gt.s32.totalorder %s402, 0
      %s404 = scalar_select %p403, %s402, 0
      %p405 = scmp.lt.s32.totalorder %s23, 1
      %s406 = scalar_select %p405, %s23, 1
      %p407 = scmp.lt.s32.totalorder %s404, 15
      %s408 = scalar_select %p407, %s404, 15
      %s409 = smul.addr %s408, 2
      %s410 = smul.addr %s406, 32
      %s411 = sadd.s32 %s409, %s410
      %s412 = smul.addr %s411, 8
      %s413 = scalar_lea.vmem %s0, %s412
      %s414 = smul.u32 %s24, 16
      %s415 = ssub.s32 %s414, 1
      %p416 = scmp.gt.s32.totalorder %s415, 0
      %s417 = scalar_select %p416, %s415, 0
      %s418 = smul.u32 16, %s24
      %p419 = scmp.lt.s32.totalorder %s23, 1
      %s420 = scalar_select %p419, %s23, 1
      %p421 = scmp.lt.s32.totalorder %s418, 15
      %s422 = scalar_select %p421, %s418, 15
      %s423 = smul.addr %s422, 2
      %s424 = smul.addr %s420, 32
      %s425 = sadd.s32 %s423, %s424
      %s426 = smul.addr %s425, 8
      %s427 = scalar_lea.vmem %s1, %s426
      %s428 = smul.u32 16, %s24
      %s429 = sadd.s32 %s24, 1
      %s430 = smul.u32 %s429, 16
      %p431 = scmp.lt.s32.totalorder %s430, 15
      %s432 = scalar_select %p431, %s430, 15
      %p433 = scmp.lt.s32.totalorder %s23, 1
      %s434 = scalar_select %p433, %s23, 1
      %p435 = scmp.lt.s32.totalorder %s432, 15
      %s436 = scalar_select %p435, %s432, 15
      %s437 = smul.addr %s436, 2
      %s438 = smul.addr %s434, 32
      %s439 = sadd.s32 %s437, %s438
      %s440 = smul.addr %s439, 8
      %s441 = scalar_lea.vmem %s2, %s440
      %s442 = sadd.s32 %s24, 1
      %s443 = smul.u32 %s442, 16
      %p444 = scmp.lt.s32.totalorder %s443, 15
      %s445 = scalar_select %p444, %s443, 15
      %s446 = smul.u32 32, %s24
      %p447 = scmp.lt.s32.totalorder %s23, 1
      %s448 = scalar_select %p447, %s23, 1
      %p449 = scmp.lt.s32.totalorder %s446, 31
      %s450 = scalar_select %p449, %s446, 31
      %s451 = smul.addr %s448, 32
      %s452 = sadd.s32 %s450, %s451
      %s453 = smul.addr %s452, 8
      %s454 = scalar_lea.vmem %s6, %s453
      %s455 = smul.u32 32, %s24
      %p456 = scmp.lt.s32.totalorder %s23, 1
      %s457 = scalar_select %p456, %s23, 1
      %p458 = scmp.lt.s32.totalorder %s24, 0
      %s459 = scalar_select %p458, %s24, 0
      %s460 = sadd.s32 %s459, %s457
      %s461 = scalar_lea.vmem %s7, %s460
      %v463 = vld [vmem:[%s427] sm:$0xff]
      %v464 = vld [vmem:[%s427 + $0x8] sm:$0xff]
      %v465 = vld [vmem:[%s427 + $0x10] sm:$0xff]
      %v466 = vld [vmem:[%s427 + $0x18] sm:$0xff]
      %v467 = vld [vmem:[%s427 + $0x20] sm:$0xff]
      %v468 = vld [vmem:[%s427 + $0x28] sm:$0xff]
      %v469 = vld [vmem:[%s427 + $0x30] sm:$0xff]
      %v470 = vld [vmem:[%s427 + $0x38] sm:$0xff]
      %v471 = vld [vmem:[%s427 + $0x40] sm:$0xff]
      %v472 = vld [vmem:[%s427 + $0x48] sm:$0xff]
      %v473 = vld [vmem:[%s427 + $0x50] sm:$0xff]
      %v474 = vld [vmem:[%s427 + $0x58] sm:$0xff]
      %v475 = vld [vmem:[%s427 + $0x60] sm:$0xff]
      %v476 = vld [vmem:[%s427 + $0x68] sm:$0xff]
      %v477 = vld [vmem:[%s427 + $0x70] sm:$0xff]
      %v478 = vld [vmem:[%s427 + $0x78] sm:$0xff]
      %v479 = vld [vmem:[%s427 + $0x80] sm:$0xff]
      %v480 = vld [vmem:[%s427 + $0x88] sm:$0xff]
      %v481 = vld [vmem:[%s427 + $0x90] sm:$0xff]
      %v482 = vld [vmem:[%s427 + $0x98] sm:$0xff]
      %v483 = vld [vmem:[%s427 + $0xa0] sm:$0xff]
      %v484 = vld [vmem:[%s427 + $0xa8] sm:$0xff]
      %v485 = vld [vmem:[%s427 + $0xb0] sm:$0xff]
      %v486 = vld [vmem:[%s427 + $0xb8] sm:$0xff]
      %v487 = vld [vmem:[%s427 + $0xc0] sm:$0xff]
      %v488 = vld [vmem:[%s427 + $0xc8] sm:$0xff]
      %v489 = vld [vmem:[%s427 + $0xd0] sm:$0xff]
      %v490 = vld [vmem:[%s427 + $0xd8] sm:$0xff]
      %v491 = vld [vmem:[%s427 + $0xe0] sm:$0xff]
      %v492 = vld [vmem:[%s427 + $0xe8] sm:$0xff]
      %v493 = vld [vmem:[%s427 + $0xf0] sm:$0xff]
      %v494 = vld [vmem:[%s427 + $0xf8] sm:$0xff]
      %v495 = vld [vmem:[%s3] sm:$0x1]
      %v497 = vperm.slane %v495, 0
      %v499 = vmul.f32 %v463, %v497
      %v500 = vmul.f32 %v464, %v497
      %v501 = vmul.f32 %v465, %v497
      %v502 = vmul.f32 %v466, %v497
      %v503 = vmul.f32 %v467, %v497
      %v504 = vmul.f32 %v468, %v497
      %v505 = vmul.f32 %v469, %v497
      %v506 = vmul.f32 %v470, %v497
      %v507 = vmul.f32 %v471, %v497
      %v508 = vmul.f32 %v472, %v497
      %v509 = vmul.f32 %v473, %v497
      %v510 = vmul.f32 %v474, %v497
      %v511 = vmul.f32 %v475, %v497
      %v512 = vmul.f32 %v476, %v497
      %v513 = vmul.f32 %v477, %v497
      %v514 = vmul.f32 %v478, %v497
      %v515 = vmul.f32 %v479, %v497
      %v516 = vmul.f32 %v480, %v497
      %v517 = vmul.f32 %v481, %v497
      %v518 = vmul.f32 %v482, %v497
      %v519 = vmul.f32 %v483, %v497
      %v520 = vmul.f32 %v484, %v497
      %v521 = vmul.f32 %v485, %v497
      %v522 = vmul.f32 %v486, %v497
      %v523 = vmul.f32 %v487, %v497
      %v524 = vmul.f32 %v488, %v497
      %v525 = vmul.f32 %v489, %v497
      %v526 = vmul.f32 %v490, %v497
      %v527 = vmul.f32 %v491, %v497
      %v528 = vmul.f32 %v492, %v497
      %v529 = vmul.f32 %v493, %v497
      %v530 = vmul.f32 %v494, %v497
      %v531 = vld [vmem:[%s4] sm:$0x1]
      %v533 = vperm.slane %v531, 0
      %v535 = vadd.f32 %v499, %v533
      %v536 = vadd.f32 %v500, %v533
      %v537 = vadd.f32 %v501, %v533
      %v538 = vadd.f32 %v502, %v533
      %v539 = vadd.f32 %v503, %v533
      %v540 = vadd.f32 %v504, %v533
      %v541 = vadd.f32 %v505, %v533
      %v542 = vadd.f32 %v506, %v533
      %v543 = vadd.f32 %v507, %v533
      %v544 = vadd.f32 %v508, %v533
      %v545 = vadd.f32 %v509, %v533
      %v546 = vadd.f32 %v510, %v533
      %v547 = vadd.f32 %v511, %v533
      %v548 = vadd.f32 %v512, %v533
      %v549 = vadd.f32 %v513, %v533
      %v550 = vadd.f32 %v514, %v533
      %v551 = vadd.f32 %v515, %v533
      %v552 = vadd.f32 %v516, %v533
      %v553 = vadd.f32 %v517, %v533
      %v554 = vadd.f32 %v518, %v533
      %v555 = vadd.f32 %v519, %v533
      %v556 = vadd.f32 %v520, %v533
      %v557 = vadd.f32 %v521, %v533
      %v558 = vadd.f32 %v522, %v533
      %v559 = vadd.f32 %v523, %v533
      %v560 = vadd.f32 %v524, %v533
      %v561 = vadd.f32 %v525, %v533
      %v562 = vadd.f32 %v526, %v533
      %v563 = vadd.f32 %v527, %v533
      %v564 = vadd.f32 %v528, %v533
      %v565 = vadd.f32 %v529, %v533
      %v566 = vadd.f32 %v530, %v533
      %v567 = vmax.f32 %v535, 0.0
      %v568 = vmax.f32 %v536, 0.0
      %v569 = vmax.f32 %v537, 0.0
      %v570 = vmax.f32 %v538, 0.0
      %v571 = vmax.f32 %v539, 0.0
      %v572 = vmax.f32 %v540, 0.0
      %v573 = vmax.f32 %v541, 0.0
      %v574 = vmax.f32 %v542, 0.0
      %v575 = vmax.f32 %v543, 0.0
      %v576 = vmax.f32 %v544, 0.0
      %v577 = vmax.f32 %v545, 0.0
      %v578 = vmax.f32 %v546, 0.0
      %v579 = vmax.f32 %v547, 0.0
      %v580 = vmax.f32 %v548, 0.0
      %v581 = vmax.f32 %v549, 0.0
      %v582 = vmax.f32 %v550, 0.0
      %v583 = vmax.f32 %v551, 0.0
      %v584 = vmax.f32 %v552, 0.0
      %v585 = vmax.f32 %v553, 0.0
      %v586 = vmax.f32 %v554, 0.0
      %v587 = vmax.f32 %v555, 0.0
      %v588 = vmax.f32 %v556, 0.0
      %v589 = vmax.f32 %v557, 0.0
      %v590 = vmax.f32 %v558, 0.0
      %v591 = vmax.f32 %v559, 0.0
      %v592 = vmax.f32 %v560, 0.0
      %v593 = vmax.f32 %v561, 0.0
      %v594 = vmax.f32 %v562, 0.0
      %v595 = vmax.f32 %v563, 0.0
      %v596 = vmax.f32 %v564, 0.0
      %v597 = vmax.f32 %v565, 0.0
      %v598 = vmax.f32 %v566, 0.0
      %v599 = vld [vmem:[%s413] sm:$0xff]
      %v600 = vld [vmem:[%s413 + $0x8] sm:$0xff]
      %v601 = vmul.f32 %v599, %v497
      %v602 = vmul.f32 %v600, %v497
      %v603 = vadd.f32 %v601, %v533
      %v604 = vadd.f32 %v602, %v533
      %v605 = vmax.f32 %v603, 0.0
      %v606 = vmax.f32 %v604, 0.0
      %v607 = vld [vmem:[%s441] sm:$0xff]
      %v608 = vld [vmem:[%s441 + $0x8] sm:$0xff]
      %v609 = vmul.f32 %v607, %v497
      %v610 = vmul.f32 %v608, %v497
      %v611 = vadd.f32 %v609, %v533
      %v612 = vadd.f32 %v610, %v533
      %v613 = vmax.f32 %v611, 0.0
      %v614 = vmax.f32 %v612, 0.0
      %p615 = scmp.gt.s32.totalorder %s24, 0
      %s616 = scalar_select %p615, 1, 0
      %s617 = scvt.s32.f32 %s616
      %v618 = vstv %s617
      %v619 = vmul.f32 %v605, %v618
      %v620 = vmul.f32 %v606, %v618
      %p621 = scmp.lt.s32.totalorder %s24, 0
      %s622 = scalar_select %p621, 1, 0
      %s623 = scvt.s32.f32 %s622
      %v624 = vstv %s623
      %v625 = vmul.f32 %v613, %v624
      %v626 = vmul.f32 %v614, %v624
      %vm663 = vcmask 1040384
      %v664 = vrot.slane %v619, 7
      %v665 = vrot.slane %v620, 7
      %v666 = vsel %vm663, %v664, %v665
      %v667 = vrot.slane %v567, 7
      %v668 = vrot.slane %v568, 7
      %v669 = vsel %vm663, %v667, %v668
      %v670 = vrot.slane %v569, 7
      %v671 = vrot.slane %v570, 7
      %v672 = vsel %vm663, %v670, %v671
      %v673 = vrot.slane %v571, 7
      %v674 = vrot.slane %v572, 7
      %v675 = vsel %vm663, %v673, %v674
      %v676 = vrot.slane %v573, 7
      %v677 = vrot.slane %v574, 7
      %v678 = vsel %vm663, %v676, %v677
      %v679 = vrot.slane %v575, 7
      %v680 = vrot.slane %v576, 7
      %v681 = vsel %vm663, %v679, %v680
      %v682 = vrot.slane %v577, 7
      %v683 = vrot.slane %v578, 7
      %v684 = vsel %vm663, %v682, %v683
      %v685 = vrot.slane %v579, 7
      %v686 = vrot.slane %v580, 7
      %v687 = vsel %vm663, %v685, %v686
      %v688 = vrot.slane %v581, 7
      %v689 = vrot.slane %v582, 7
      %v690 = vsel %vm663, %v688, %v689
      %v691 = vrot.slane %v583, 7
      %v692 = vrot.slane %v584, 7
      %v693 = vsel %vm663, %v691, %v692
      %v694 = vrot.slane %v585, 7
      %v695 = vrot.slane %v586, 7
      %v696 = vsel %vm663, %v694, %v695
      %v697 = vrot.slane %v587, 7
      %v698 = vrot.slane %v588, 7
      %v699 = vsel %vm663, %v697, %v698
      %v700 = vrot.slane %v589, 7
      %v701 = vrot.slane %v590, 7
      %v702 = vsel %vm663, %v700, %v701
      %v703 = vrot.slane %v591, 7
      %v704 = vrot.slane %v592, 7
      %v705 = vsel %vm663, %v703, %v704
      %v706 = vrot.slane %v593, 7
      %v707 = vrot.slane %v594, 7
      %v708 = vsel %vm663, %v706, %v707
      %v709 = vrot.slane %v595, 7
      %v710 = vrot.slane %v596, 7
      %v711 = vsel %vm663, %v709, %v710
      %v712 = vrot.slane %v597, 7
      %v713 = vrot.slane %v598, 7
      %v714 = vsel %vm663, %v712, %v713
      %v715 = vrot.slane %v625, 7
      %v716 = vrot.slane %v626, 7
      %v717 = vsel %vm663, %v715, %v716
      %v772 = vsel %vm663, 0.0, %v664
      %v773 = vsel %vm663, 0.0, %v667
      %v774 = vsel %vm663, 0.0, %v670
      %v775 = vsel %vm663, 0.0, %v673
      %v776 = vsel %vm663, 0.0, %v676
      %v777 = vsel %vm663, 0.0, %v679
      %v778 = vsel %vm663, 0.0, %v682
      %v779 = vsel %vm663, 0.0, %v685
      %v780 = vsel %vm663, 0.0, %v688
      %v781 = vsel %vm663, 0.0, %v691
      %v782 = vsel %vm663, 0.0, %v694
      %v783 = vsel %vm663, 0.0, %v697
      %v784 = vsel %vm663, 0.0, %v700
      %v785 = vsel %vm663, 0.0, %v703
      %v786 = vsel %vm663, 0.0, %v706
      %v787 = vsel %vm663, 0.0, %v709
      %v788 = vsel %vm663, 0.0, %v712
      %v789 = vsel %vm663, 0.0, %v715
      %v790 = vsel %vm663, %v665, 0.0
      %v791 = vsel %vm663, %v668, 0.0
      %v792 = vsel %vm663, %v671, 0.0
      %v793 = vsel %vm663, %v674, 0.0
      %v794 = vsel %vm663, %v677, 0.0
      %v795 = vsel %vm663, %v680, 0.0
      %v796 = vsel %vm663, %v683, 0.0
      %v797 = vsel %vm663, %v686, 0.0
      %v798 = vsel %vm663, %v689, 0.0
      %v799 = vsel %vm663, %v692, 0.0
      %v800 = vsel %vm663, %v695, 0.0
      %v801 = vsel %vm663, %v698, 0.0
      %v802 = vsel %vm663, %v701, 0.0
      %v803 = vsel %vm663, %v704, 0.0
      %v804 = vsel %vm663, %v707, 0.0
      %v805 = vsel %vm663, %v710, 0.0
      %v806 = vsel %vm663, %v713, 0.0
      %v807 = vsel %vm663, %v716, 0.0
      %v808 = vpack.c.bf16 %v772, %v772
      %v809 = vpack.c.bf16 %v666, %v666
      %v810 = vpack.c.bf16 %v790, %v790
      %v811 = vpack.c.bf16 %v773, %v773
      %v812 = vpack.c.bf16 %v669, %v669
      %v813 = vpack.c.bf16 %v791, %v791
      %v814 = vpack.c.bf16 %v774, %v774
      %v815 = vpack.c.bf16 %v672, %v672
      %v816 = vpack.c.bf16 %v792, %v792
      %v817 = vpack.c.bf16 %v775, %v775
      %v818 = vpack.c.bf16 %v675, %v675
      %v819 = vpack.c.bf16 %v793, %v793
      %v820 = vpack.c.bf16 %v776, %v776
      %v821 = vpack.c.bf16 %v678, %v678
      %v822 = vpack.c.bf16 %v794, %v794
      %v823 = vpack.c.bf16 %v777, %v777
      %v824 = vpack.c.bf16 %v681, %v681
      %v825 = vpack.c.bf16 %v795, %v795
      %v826 = vpack.c.bf16 %v778, %v778
      %v827 = vpack.c.bf16 %v684, %v684
      %v828 = vpack.c.bf16 %v796, %v796
      %v829 = vpack.c.bf16 %v779, %v779
      %v830 = vpack.c.bf16 %v687, %v687
      %v831 = vpack.c.bf16 %v797, %v797
      %v832 = vpack.c.bf16 %v780, %v780
      %v833 = vpack.c.bf16 %v690, %v690
      %v834 = vpack.c.bf16 %v798, %v798
      %v835 = vpack.c.bf16 %v781, %v781
      %v836 = vpack.c.bf16 %v693, %v693
      %v837 = vpack.c.bf16 %v799, %v799
      %v838 = vpack.c.bf16 %v782, %v782
      %v839 = vpack.c.bf16 %v696, %v696
      %v840 = vpack.c.bf16 %v800, %v800
      %v841 = vpack.c.bf16 %v783, %v783
      %v842 = vpack.c.bf16 %v699, %v699
      %v843 = vpack.c.bf16 %v801, %v801
      %v844 = vpack.c.bf16 %v784, %v784
      %v845 = vpack.c.bf16 %v702, %v702
      %v846 = vpack.c.bf16 %v802, %v802
      %v847 = vpack.c.bf16 %v785, %v785
      %v848 = vpack.c.bf16 %v705, %v705
      %v849 = vpack.c.bf16 %v803, %v803
      %v850 = vpack.c.bf16 %v786, %v786
      %v851 = vpack.c.bf16 %v708, %v708
      %v852 = vpack.c.bf16 %v804, %v804
      %v853 = vpack.c.bf16 %v787, %v787
      %v854 = vpack.c.bf16 %v711, %v711
      %v855 = vpack.c.bf16 %v805, %v805
      %v856 = vpack.c.bf16 %v788, %v788
      %v857 = vpack.c.bf16 %v714, %v714
      %v858 = vpack.c.bf16 %v806, %v806
      %v859 = vpack.c.bf16 %v789, %v789
      %v860 = vpack.c.bf16 %v717, %v717
      %v861 = vpack.c.bf16 %v807, %v807
      %v894 = vunpack.c.l.b16 %v808
      %v895 = vunpack.c.l.b16 %v809
      %v896 = vunpack.c.l.b16 %v811
      %v897 = vunpack.c.l.b16 %v812
      %v898 = vunpack.c.l.b16 %v814
      %v899 = vunpack.c.l.b16 %v815
      %v900 = vunpack.c.l.b16 %v817
      %v901 = vunpack.c.l.b16 %v818
      %v902 = vunpack.c.l.b16 %v820
      %v903 = vunpack.c.l.b16 %v821
      %v904 = vunpack.c.l.b16 %v823
      %v905 = vunpack.c.l.b16 %v824
      %v906 = vunpack.c.l.b16 %v826
      %v907 = vunpack.c.l.b16 %v827
      %v908 = vunpack.c.l.b16 %v829
      %v909 = vunpack.c.l.b16 %v830
      %v910 = vunpack.c.l.b16 %v832
      %v911 = vunpack.c.l.b16 %v833
      %v912 = vunpack.c.l.b16 %v835
      %v913 = vunpack.c.l.b16 %v836
      %v914 = vunpack.c.l.b16 %v838
      %v915 = vunpack.c.l.b16 %v839
      %v916 = vunpack.c.l.b16 %v841
      %v917 = vunpack.c.l.b16 %v842
      %v918 = vunpack.c.l.b16 %v844
      %v919 = vunpack.c.l.b16 %v845
      %v920 = vunpack.c.l.b16 %v847
      %v921 = vunpack.c.l.b16 %v848
      %v922 = vunpack.c.l.b16 %v850
      %v923 = vunpack.c.l.b16 %v851
      %v924 = vunpack.c.l.b16 %v853
      %v925 = vunpack.c.l.b16 %v854
      %v926 = vpack.c.b16 %v895, %v894
      %v927 = vpack.c.b16 %v897, %v896
      %v928 = vpack.c.b16 %v899, %v898
      %v929 = vpack.c.b16 %v901, %v900
      %v930 = vpack.c.b16 %v903, %v902
      %v931 = vpack.c.b16 %v905, %v904
      %v932 = vpack.c.b16 %v907, %v906
      %v933 = vpack.c.b16 %v909, %v908
      %v934 = vpack.c.b16 %v911, %v910
      %v935 = vpack.c.b16 %v913, %v912
      %v936 = vpack.c.b16 %v915, %v914
      %v937 = vpack.c.b16 %v917, %v916
      %v938 = vpack.c.b16 %v919, %v918
      %v939 = vpack.c.b16 %v921, %v920
      %v940 = vpack.c.b16 %v923, %v922
      %v941 = vpack.c.b16 %v925, %v924
      %v958 = vunpack.c.l.b16 %v810
      %v959 = vunpack.c.l.b16 %v813
      %v960 = vunpack.c.l.b16 %v816
      %v961 = vunpack.c.l.b16 %v819
      %v962 = vunpack.c.l.b16 %v822
      %v963 = vunpack.c.l.b16 %v825
      %v964 = vunpack.c.l.b16 %v828
      %v965 = vunpack.c.l.b16 %v831
      %v966 = vunpack.c.l.b16 %v834
      %v967 = vunpack.c.l.b16 %v837
      %v968 = vunpack.c.l.b16 %v840
      %v969 = vunpack.c.l.b16 %v843
      %v970 = vunpack.c.l.b16 %v846
      %v971 = vunpack.c.l.b16 %v849
      %v972 = vunpack.c.l.b16 %v852
      %v973 = vunpack.c.l.b16 %v855
      %v974 = vpack.c.b16 %v958, %v958
      %v975 = vpack.c.b16 %v959, %v959
      %v976 = vpack.c.b16 %v960, %v960
      %v977 = vpack.c.b16 %v961, %v961
      %v978 = vpack.c.b16 %v962, %v962
      %v979 = vpack.c.b16 %v963, %v963
      %v980 = vpack.c.b16 %v964, %v964
      %v981 = vpack.c.b16 %v965, %v965
      %v982 = vpack.c.b16 %v966, %v966
      %v983 = vpack.c.b16 %v967, %v967
      %v984 = vpack.c.b16 %v968, %v968
      %v985 = vpack.c.b16 %v969, %v969
      %v986 = vpack.c.b16 %v970, %v970
      %v987 = vpack.c.b16 %v971, %v971
      %v988 = vpack.c.b16 %v972, %v972
      %v989 = vpack.c.b16 %v973, %v973
      %vm990 = vsmask.f32 7424
      %v992 = vshrl.u32 %v926, 16
      %v994 = vshll.u32 %v926, 16
      %v996 = vrot.slane %v994, 1
      %v997 = vor.u32 %v992, %v996
      %v999 = vshll.u32 %v974, 16
      %v1001 = vrot.slane %v999, 1
      %v1002 = vsel %vm990, %v997, %v1001
      %v1004 = vshrl.u32 %v927, 16
      %v1006 = vshll.u32 %v927, 16
      %v1008 = vrot.slane %v1006, 1
      %v1009 = vor.u32 %v1004, %v1008
      %v1011 = vshll.u32 %v975, 16
      %v1013 = vrot.slane %v1011, 1
      %v1014 = vsel %vm990, %v1009, %v1013
      %v1016 = vshrl.u32 %v928, 16
      %v1018 = vshll.u32 %v928, 16
      %v1020 = vrot.slane %v1018, 1
      %v1021 = vor.u32 %v1016, %v1020
      %v1023 = vshll.u32 %v976, 16
      %v1025 = vrot.slane %v1023, 1
      %v1026 = vsel %vm990, %v1021, %v1025
      %v1028 = vshrl.u32 %v929, 16
      %v1030 = vshll.u32 %v929, 16
      %v1032 = vrot.slane %v1030, 1
      %v1033 = vor.u32 %v1028, %v1032
      %v1035 = vshll.u32 %v977, 16
      %v1037 = vrot.slane %v1035, 1
      %v1038 = vsel %vm990, %v1033, %v1037
      %v1040 = vshrl.u32 %v930, 16
      %v1042 = vshll.u32 %v930, 16
      %v1044 = vrot.slane %v1042, 1
      %v1045 = vor.u32 %v1040, %v1044
      %v1047 = vshll.u32 %v978, 16
      %v1049 = vrot.slane %v1047, 1
      %v1050 = vsel %vm990, %v1045, %v1049
      %v1052 = vshrl.u32 %v931, 16
      %v1054 = vshll.u32 %v931, 16
      %v1056 = vrot.slane %v1054, 1
      %v1057 = vor.u32 %v1052, %v1056
      %v1059 = vshll.u32 %v979, 16
      %v1061 = vrot.slane %v1059, 1
      %v1062 = vsel %vm990, %v1057, %v1061
      %v1064 = vshrl.u32 %v932, 16
      %v1066 = vshll.u32 %v932, 16
      %v1068 = vrot.slane %v1066, 1
      %v1069 = vor.u32 %v1064, %v1068
      %v1071 = vshll.u32 %v980, 16
      %v1073 = vrot.slane %v1071, 1
      %v1074 = vsel %vm990, %v1069, %v1073
      %v1076 = vshrl.u32 %v933, 16
      %v1078 = vshll.u32 %v933, 16
      %v1080 = vrot.slane %v1078, 1
      %v1081 = vor.u32 %v1076, %v1080
      %v1083 = vshll.u32 %v981, 16
      %v1085 = vrot.slane %v1083, 1
      %v1086 = vsel %vm990, %v1081, %v1085
      %v1088 = vshrl.u32 %v934, 16
      %v1090 = vshll.u32 %v934, 16
      %v1092 = vrot.slane %v1090, 1
      %v1093 = vor.u32 %v1088, %v1092
      %v1095 = vshll.u32 %v982, 16
      %v1097 = vrot.slane %v1095, 1
      %v1098 = vsel %vm990, %v1093, %v1097
      %v1100 = vshrl.u32 %v935, 16
      %v1102 = vshll.u32 %v935, 16
      %v1104 = vrot.slane %v1102, 1
      %v1105 = vor.u32 %v1100, %v1104
      %v1107 = vshll.u32 %v983, 16
      %v1109 = vrot.slane %v1107, 1
      %v1110 = vsel %vm990, %v1105, %v1109
      %v1112 = vshrl.u32 %v936, 16
      %v1114 = vshll.u32 %v936, 16
      %v1116 = vrot.slane %v1114, 1
      %v1117 = vor.u32 %v1112, %v1116
      %v1119 = vshll.u32 %v984, 16
      %v1121 = vrot.slane %v1119, 1
      %v1122 = vsel %vm990, %v1117, %v1121
      %v1124 = vshrl.u32 %v937, 16
      %v1126 = vshll.u32 %v937, 16
      %v1128 = vrot.slane %v1126, 1
      %v1129 = vor.u32 %v1124, %v1128
      %v1131 = vshll.u32 %v985, 16
      %v1133 = vrot.slane %v1131, 1
      %v1134 = vsel %vm990, %v1129, %v1133
      %v1136 = vshrl.u32 %v938, 16
      %v1138 = vshll.u32 %v938, 16
      %v1140 = vrot.slane %v1138, 1
      %v1141 = vor.u32 %v1136, %v1140
      %v1143 = vshll.u32 %v986, 16
      %v1145 = vrot.slane %v1143, 1
      %v1146 = vsel %vm990, %v1141, %v1145
      %v1148 = vshrl.u32 %v939, 16
      %v1150 = vshll.u32 %v939, 16
      %v1152 = vrot.slane %v1150, 1
      %v1153 = vor.u32 %v1148, %v1152
      %v1155 = vshll.u32 %v987, 16
      %v1157 = vrot.slane %v1155, 1
      %v1158 = vsel %vm990, %v1153, %v1157
      %v1160 = vshrl.u32 %v940, 16
      %v1162 = vshll.u32 %v940, 16
      %v1164 = vrot.slane %v1162, 1
      %v1165 = vor.u32 %v1160, %v1164
      %v1167 = vshll.u32 %v988, 16
      %v1169 = vrot.slane %v1167, 1
      %v1170 = vsel %vm990, %v1165, %v1169
      %v1172 = vshrl.u32 %v941, 16
      %v1174 = vshll.u32 %v941, 16
      %v1176 = vrot.slane %v1174, 1
      %v1177 = vor.u32 %v1172, %v1176
      %v1179 = vshll.u32 %v989, 16
      %v1181 = vrot.slane %v1179, 1
      %v1182 = vsel %vm990, %v1177, %v1181
      %1183 = vrot.lane.b32.xlu0 %v1002, 8
      %v1184 = vpop.permute.xlu0 %1183
      %1185 = vrot.lane.b32.xlu0 %v1014, 8
      %v1186 = vpop.permute.xlu0 %1185
      %1187 = vrot.lane.b32.xlu0 %v1026, 8
      %v1188 = vpop.permute.xlu0 %1187
      %1189 = vrot.lane.b32.xlu0 %v1038, 8
      %v1190 = vpop.permute.xlu0 %1189
      %1191 = vrot.lane.b32.xlu0 %v1050, 8
      %v1192 = vpop.permute.xlu0 %1191
      %1193 = vrot.lane.b32.xlu0 %v1062, 8
      %v1194 = vpop.permute.xlu0 %1193
      %1195 = vrot.lane.b32.xlu0 %v1074, 8
      %v1196 = vpop.permute.xlu0 %1195
      %1197 = vrot.lane.b32.xlu0 %v1086, 8
      %v1198 = vpop.permute.xlu0 %1197
      %1199 = vrot.lane.b32.xlu0 %v1098, 8
      %v1200 = vpop.permute.xlu0 %1199
      %1201 = vrot.lane.b32.xlu0 %v1110, 8
      %v1202 = vpop.permute.xlu0 %1201
      %1203 = vrot.lane.b32.xlu0 %v1122, 8
      %v1204 = vpop.permute.xlu0 %1203
      %1205 = vrot.lane.b32.xlu0 %v1134, 8
      %v1206 = vpop.permute.xlu0 %1205
      %1207 = vrot.lane.b32.xlu0 %v1146, 8
      %v1208 = vpop.permute.xlu0 %1207
      %1209 = vrot.lane.b32.xlu0 %v1158, 8
      %v1210 = vpop.permute.xlu0 %1209
      %1211 = vrot.lane.b32.xlu0 %v1170, 8
      %v1212 = vpop.permute.xlu0 %1211
      %1213 = vrot.lane.b32.xlu0 %v1182, 8
      %v1214 = vpop.permute.xlu0 %1213
      %vm1215 = vcmask 1046528
      %v1216 = vrot.slane %v926, 1
      %v1217 = vrot.slane %v974, 1
      %v1218 = vsel %vm1215, %v1216, %v1217
      %v1219 = vrot.slane %v927, 1
      %v1220 = vrot.slane %v975, 1
      %v1221 = vsel %vm1215, %v1219, %v1220
      %v1222 = vrot.slane %v928, 1
      %v1223 = vrot.slane %v976, 1
      %v1224 = vsel %vm1215, %v1222, %v1223
      %v1225 = vrot.slane %v929, 1
      %v1226 = vrot.slane %v977, 1
      %v1227 = vsel %vm1215, %v1225, %v1226
      %v1228 = vrot.slane %v930, 1
      %v1229 = vrot.slane %v978, 1
      %v1230 = vsel %vm1215, %v1228, %v1229
      %v1231 = vrot.slane %v931, 1
      %v1232 = vrot.slane %v979, 1
      %v1233 = vsel %vm1215, %v1231, %v1232
      %v1234 = vrot.slane %v932, 1
      %v1235 = vrot.slane %v980, 1
      %v1236 = vsel %vm1215, %v1234, %v1235
      %v1237 = vrot.slane %v933, 1
      %v1238 = vrot.slane %v981, 1
      %v1239 = vsel %vm1215, %v1237, %v1238
      %v1240 = vrot.slane %v934, 1
      %v1241 = vrot.slane %v982, 1
      %v1242 = vsel %vm1215, %v1240, %v1241
      %v1243 = vrot.slane %v935, 1
      %v1244 = vrot.slane %v983, 1
      %v1245 = vsel %vm1215, %v1243, %v1244
      %v1246 = vrot.slane %v936, 1
      %v1247 = vrot.slane %v984, 1
      %v1248 = vsel %vm1215, %v1246, %v1247
      %v1249 = vrot.slane %v937, 1
      %v1250 = vrot.slane %v985, 1
      %v1251 = vsel %vm1215, %v1249, %v1250
      %v1252 = vrot.slane %v938, 1
      %v1253 = vrot.slane %v986, 1
      %v1254 = vsel %vm1215, %v1252, %v1253
      %v1255 = vrot.slane %v939, 1
      %v1256 = vrot.slane %v987, 1
      %v1257 = vsel %vm1215, %v1255, %v1256
      %v1258 = vrot.slane %v940, 1
      %v1259 = vrot.slane %v988, 1
      %v1260 = vsel %vm1215, %v1258, %v1259
      %v1261 = vrot.slane %v941, 1
      %v1262 = vrot.slane %v989, 1
      %v1263 = vsel %vm1215, %v1261, %v1262
      %1264 = vrot.lane.b32.xlu0 %v1218, 16
      %v1265 = vpop.permute.xlu0 %1264
      %1266 = vrot.lane.b32.xlu0 %v1221, 16
      %v1267 = vpop.permute.xlu0 %1266
      %1268 = vrot.lane.b32.xlu0 %v1224, 16
      %v1269 = vpop.permute.xlu0 %1268
      %1270 = vrot.lane.b32.xlu0 %v1227, 16
      %v1271 = vpop.permute.xlu0 %1270
      %1272 = vrot.lane.b32.xlu0 %v1230, 16
      %v1273 = vpop.permute.xlu0 %1272
      %1274 = vrot.lane.b32.xlu0 %v1233, 16
      %v1275 = vpop.permute.xlu0 %1274
      %1276 = vrot.lane.b32.xlu0 %v1236, 16
      %v1277 = vpop.permute.xlu0 %1276
      %1278 = vrot.lane.b32.xlu0 %v1239, 16
      %v1279 = vpop.permute.xlu0 %1278
      %1280 = vrot.lane.b32.xlu0 %v1242, 16
      %v1281 = vpop.permute.xlu0 %1280
      %1282 = vrot.lane.b32.xlu0 %v1245, 16
      %v1283 = vpop.permute.xlu0 %1282
      %1284 = vrot.lane.b32.xlu0 %v1248, 16
      %v1285 = vpop.permute.xlu0 %1284
      %1286 = vrot.lane.b32.xlu0 %v1251, 16
      %v1287 = vpop.permute.xlu0 %1286
      %1288 = vrot.lane.b32.xlu0 %v1254, 16
      %v1289 = vpop.permute.xlu0 %1288
      %1290 = vrot.lane.b32.xlu0 %v1257, 16
      %v1291 = vpop.permute.xlu0 %1290
      %1292 = vrot.lane.b32.xlu0 %v1260, 16
      %v1293 = vpop.permute.xlu0 %1292
      %1294 = vrot.lane.b32.xlu0 %v1263, 16
      %v1295 = vpop.permute.xlu0 %1294
      %v1298 = vunpack.c.l.b16 %v856
      %v1299 = vunpack.c.l.b16 %v857
      %v1300 = vpack.c.b16 %v1299, %v1298
      %1301 = vrot.lane.b32.xlu0 %v927, 24
      %v1302 = vpop.permute.xlu0 %1301
      %1303 = vrot.lane.b32.xlu0 %v928, 24
      %v1304 = vpop.permute.xlu0 %1303
      %1305 = vrot.lane.b32.xlu0 %v929, 24
      %v1306 = vpop.permute.xlu0 %1305
      %1307 = vrot.lane.b32.xlu0 %v930, 24
      %v1308 = vpop.permute.xlu0 %1307
      %1309 = vrot.lane.b32.xlu0 %v931, 24
      %v1310 = vpop.permute.xlu0 %1309
      %1311 = vrot.lane.b32.xlu0 %v932, 24
      %v1312 = vpop.permute.xlu0 %1311
      %1313 = vrot.lane.b32.xlu0 %v933, 24
      %v1314 = vpop.permute.xlu0 %1313
      %1315 = vrot.lane.b32.xlu0 %v934, 24
      %v1316 = vpop.permute.xlu0 %1315
      %1317 = vrot.lane.b32.xlu0 %v935, 24
      %v1318 = vpop.permute.xlu0 %1317
      %1319 = vrot.lane.b32.xlu0 %v936, 24
      %v1320 = vpop.permute.xlu0 %1319
      %1321 = vrot.lane.b32.xlu0 %v937, 24
      %v1322 = vpop.permute.xlu0 %1321
      %1323 = vrot.lane.b32.xlu0 %v938, 24
      %v1324 = vpop.permute.xlu0 %1323
      %1325 = vrot.lane.b32.xlu0 %v939, 24
      %v1326 = vpop.permute.xlu0 %1325
      %1327 = vrot.lane.b32.xlu0 %v940, 24
      %v1328 = vpop.permute.xlu0 %1327
      %1329 = vrot.lane.b32.xlu0 %v941, 24
      %v1330 = vpop.permute.xlu0 %1329
      %1331 = vrot.lane.b32.xlu0 %v1300, 24
      %v1332 = vpop.permute.xlu0 %1331
      %v1334 = vunpack.c.l.b16 %v858
      %v1335 = vpack.c.b16 %v1334, %v1334
      %v1337 = vshrl.u32 %v1300, 16
      %v1339 = vshll.u32 %v1300, 16
      %v1341 = vrot.slane %v1339, 1
      %v1342 = vor.u32 %v1337, %v1341
      %v1344 = vshll.u32 %v1335, 16
      %v1346 = vrot.slane %v1344, 1
      %v1347 = vsel %vm990, %v1342, %v1346
      %1348 = vrot.lane.b32.xlu0 %v1014, 32
      %v1349 = vpop.permute.xlu0 %1348
      %1350 = vrot.lane.b32.xlu0 %v1026, 32
      %v1351 = vpop.permute.xlu0 %1350
      %1352 = vrot.lane.b32.xlu0 %v1038, 32
      %v1353 = vpop.permute.xlu0 %1352
      %1354 = vrot.lane.b32.xlu0 %v1050, 32
      %v1355 = vpop.permute.xlu0 %1354
      %1356 = vrot.lane.b32.xlu0 %v1062, 32
      %v1357 = vpop.permute.xlu0 %1356
      %1358 = vrot.lane.b32.xlu0 %v1074, 32
      %v1359 = vpop.permute.xlu0 %1358
      %1360 = vrot.lane.b32.xlu0 %v1086, 32
      %v1361 = vpop.permute.xlu0 %1360
      %1362 = vrot.lane.b32.xlu0 %v1098, 32
      %v1363 = vpop.permute.xlu0 %1362
      %1364 = vrot.lane.b32.xlu0 %v1110, 32
      %v1365 = vpop.permute.xlu0 %1364
      %1366 = vrot.lane.b32.xlu0 %v1122, 32
      %v1367 = vpop.permute.xlu0 %1366
      %1368 = vrot.lane.b32.xlu0 %v1134, 32
      %v1369 = vpop.permute.xlu0 %1368
      %1370 = vrot.lane.b32.xlu0 %v1146, 32
      %v1371 = vpop.permute.xlu0 %1370
      %1372 = vrot.lane.b32.xlu0 %v1158, 32
      %v1373 = vpop.permute.xlu0 %1372
      %1374 = vrot.lane.b32.xlu0 %v1170, 32
      %v1375 = vpop.permute.xlu0 %1374
      %1376 = vrot.lane.b32.xlu0 %v1182, 32
      %v1377 = vpop.permute.xlu0 %1376
      %1378 = vrot.lane.b32.xlu0 %v1347, 32
      %v1379 = vpop.permute.xlu0 %1378
      %v1380 = vrot.slane %v1300, 1
      %v1381 = vrot.slane %v1335, 1
      %v1382 = vsel %vm1215, %v1380, %v1381
      %1383 = vrot.lane.b32.xlu0 %v1221, 40
      %v1384 = vpop.permute.xlu0 %1383
      %1385 = vrot.lane.b32.xlu0 %v1224, 40
      %v1386 = vpop.permute.xlu0 %1385
      %1387 = vrot.lane.b32.xlu0 %v1227, 40
      %v1388 = vpop.permute.xlu0 %1387
      %1389 = vrot.lane.b32.xlu0 %v1230, 40
      %v1390 = vpop.permute.xlu0 %1389
      %1391 = vrot.lane.b32.xlu0 %v1233, 40
      %v1392 = vpop.permute.xlu0 %1391
      %1393 = vrot.lane.b32.xlu0 %v1236, 40
      %v1394 = vpop.permute.xlu0 %1393
      %1395 = vrot.lane.b32.xlu0 %v1239, 40
      %v1396 = vpop.permute.xlu0 %1395
      %1397 = vrot.lane.b32.xlu0 %v1242, 40
      %v1398 = vpop.permute.xlu0 %1397
      %1399 = vrot.lane.b32.xlu0 %v1245, 40
      %v1400 = vpop.permute.xlu0 %1399
      %1401 = vrot.lane.b32.xlu0 %v1248, 40
      %v1402 = vpop.permute.xlu0 %1401
      %1403 = vrot.lane.b32.xlu0 %v1251, 40
      %v1404 = vpop.permute.xlu0 %1403
      %1405 = vrot.lane.b32.xlu0 %v1254, 40
      %v1406 = vpop.permute.xlu0 %1405
      %1407 = vrot.lane.b32.xlu0 %v1257, 40
      %v1408 = vpop.permute.xlu0 %1407
      %1409 = vrot.lane.b32.xlu0 %v1260, 40
      %v1410 = vpop.permute.xlu0 %1409
      %1411 = vrot.lane.b32.xlu0 %v1263, 40
      %v1412 = vpop.permute.xlu0 %1411
      %1413 = vrot.lane.b32.xlu0 %v1382, 40
      %v1414 = vpop.permute.xlu0 %1413
      %v1417 = vunpack.c.l.b16 %v859
      %v1418 = vunpack.c.l.b16 %v860
      %v1419 = vpack.c.b16 %v1418, %v1417
      %1420 = vrot.lane.b32.xlu0 %v928, 48
      %v1421 = vpop.permute.xlu0 %1420
      %1422 = vrot.lane.b32.xlu0 %v929, 48
      %v1423 = vpop.permute.xlu0 %1422
      %1424 = vrot.lane.b32.xlu0 %v930, 48
      %v1425 = vpop.permute.xlu0 %1424
      %1426 = vrot.lane.b32.xlu0 %v931, 48
      %v1427 = vpop.permute.xlu0 %1426
      %1428 = vrot.lane.b32.xlu0 %v932, 48
      %v1429 = vpop.permute.xlu0 %1428
      %1430 = vrot.lane.b32.xlu0 %v933, 48
      %v1431 = vpop.permute.xlu0 %1430
      %1432 = vrot.lane.b32.xlu0 %v934, 48
      %v1433 = vpop.permute.xlu0 %1432
      %1434 = vrot.lane.b32.xlu0 %v935, 48
      %v1435 = vpop.permute.xlu0 %1434
      %1436 = vrot.lane.b32.xlu0 %v936, 48
      %v1437 = vpop.permute.xlu0 %1436
      %1438 = vrot.lane.b32.xlu0 %v937, 48
      %v1439 = vpop.permute.xlu0 %1438
      %1440 = vrot.lane.b32.xlu0 %v938, 48
      %v1441 = vpop.permute.xlu0 %1440
      %1442 = vrot.lane.b32.xlu0 %v939, 48
      %v1443 = vpop.permute.xlu0 %1442
      %1444 = vrot.lane.b32.xlu0 %v940, 48
      %v1445 = vpop.permute.xlu0 %1444
      %1446 = vrot.lane.b32.xlu0 %v941, 48
      %v1447 = vpop.permute.xlu0 %1446
      %1448 = vrot.lane.b32.xlu0 %v1300, 48
      %v1449 = vpop.permute.xlu0 %1448
      %1450 = vrot.lane.b32.xlu0 %v1419, 48
      %v1451 = vpop.permute.xlu0 %1450
      %v1453 = vunpack.c.l.b16 %v861
      %v1454 = vpack.c.b16 %v1453, %v1453
      %v1456 = vshrl.u32 %v1419, 16
      %v1458 = vshll.u32 %v1419, 16
      %v1460 = vrot.slane %v1458, 1
      %v1461 = vor.u32 %v1456, %v1460
      %v1463 = vshll.u32 %v1454, 16
      %v1465 = vrot.slane %v1463, 1
      %v1466 = vsel %vm990, %v1461, %v1465
      %1467 = vrot.lane.b32.xlu0 %v1026, 56
      %v1468 = vpop.permute.xlu0 %1467
      %1469 = vrot.lane.b32.xlu0 %v1038, 56
      %v1470 = vpop.permute.xlu0 %1469
      %1471 = vrot.lane.b32.xlu0 %v1050, 56
      %v1472 = vpop.permute.xlu0 %1471
      %1473 = vrot.lane.b32.xlu0 %v1062, 56
      %v1474 = vpop.permute.xlu0 %1473
      %1475 = vrot.lane.b32.xlu0 %v1074, 56
      %v1476 = vpop.permute.xlu0 %1475
      %1477 = vrot.lane.b32.xlu0 %v1086, 56
      %v1478 = vpop.permute.xlu0 %1477
      %1479 = vrot.lane.b32.xlu0 %v1098, 56
      %v1480 = vpop.permute.xlu0 %1479
      %1481 = vrot.lane.b32.xlu0 %v1110, 56
      %v1482 = vpop.permute.xlu0 %1481
      %1483 = vrot.lane.b32.xlu0 %v1122, 56
      %v1484 = vpop.permute.xlu0 %1483
      %1485 = vrot.lane.b32.xlu0 %v1134, 56
      %v1486 = vpop.permute.xlu0 %1485
      %1487 = vrot.lane.b32.xlu0 %v1146, 56
      %v1488 = vpop.permute.xlu0 %1487
      %1489 = vrot.lane.b32.xlu0 %v1158, 56
      %v1490 = vpop.permute.xlu0 %1489
      %1491 = vrot.lane.b32.xlu0 %v1170, 56
      %v1492 = vpop.permute.xlu0 %1491
      %1493 = vrot.lane.b32.xlu0 %v1182, 56
      %v1494 = vpop.permute.xlu0 %1493
      %1495 = vrot.lane.b32.xlu0 %v1347, 56
      %v1496 = vpop.permute.xlu0 %1495
      %1497 = vrot.lane.b32.xlu0 %v1466, 56
      %v1498 = vpop.permute.xlu0 %1497
      %v1499 = vrot.slane %v1419, 1
      %v1500 = vrot.slane %v1454, 1
      %v1501 = vsel %vm1215, %v1499, %v1500
      %1502 = vrot.lane.b32.xlu0 %v1224, 64
      %v1503 = vpop.permute.xlu0 %1502
      %1504 = vrot.lane.b32.xlu0 %v1227, 64
      %v1505 = vpop.permute.xlu0 %1504
      %1506 = vrot.lane.b32.xlu0 %v1230, 64
      %v1507 = vpop.permute.xlu0 %1506
      %1508 = vrot.lane.b32.xlu0 %v1233, 64
      %v1509 = vpop.permute.xlu0 %1508
      %1510 = vrot.lane.b32.xlu0 %v1236, 64
      %v1511 = vpop.permute.xlu0 %1510
      %1512 = vrot.lane.b32.xlu0 %v1239, 64
      %v1513 = vpop.permute.xlu0 %1512
      %1514 = vrot.lane.b32.xlu0 %v1242, 64
      %v1515 = vpop.permute.xlu0 %1514
      %1516 = vrot.lane.b32.xlu0 %v1245, 64
      %v1517 = vpop.permute.xlu0 %1516
      %1518 = vrot.lane.b32.xlu0 %v1248, 64
      %v1519 = vpop.permute.xlu0 %1518
      %1520 = vrot.lane.b32.xlu0 %v1251, 64
      %v1521 = vpop.permute.xlu0 %1520
      %1522 = vrot.lane.b32.xlu0 %v1254, 64
      %v1523 = vpop.permute.xlu0 %1522
      %1524 = vrot.lane.b32.xlu0 %v1257, 64
      %v1525 = vpop.permute.xlu0 %1524
      %1526 = vrot.lane.b32.xlu0 %v1260, 64
      %v1527 = vpop.permute.xlu0 %1526
      %1528 = vrot.lane.b32.xlu0 %v1263, 64
      %v1529 = vpop.permute.xlu0 %1528
      %1530 = vrot.lane.b32.xlu0 %v1382, 64
      %v1531 = vpop.permute.xlu0 %1530
      %1532 = vrot.lane.b32.xlu0 %v1501, 64
      %v1533 = vpop.permute.xlu0 %1532
      %vm1534 = vcmask 64512
      %v1536 = vsel %vm1534, %v926, %v1184
      %v1538 = vsel %vm1534, %v927, %v1186
      %v1540 = vsel %vm1534, %v928, %v1188
      %v1542 = vsel %vm1534, %v929, %v1190
      %v1544 = vsel %vm1534, %v930, %v1192
      %v1546 = vsel %vm1534, %v931, %v1194
      %v1548 = vsel %vm1534, %v932, %v1196
      %v1550 = vsel %vm1534, %v933, %v1198
      %v1552 = vsel %vm1534, %v934, %v1200
      %v1554 = vsel %vm1534, %v935, %v1202
      %v1556 = vsel %vm1534, %v936, %v1204
      %v1558 = vsel %vm1534, %v937, %v1206
      %v1560 = vsel %vm1534, %v938, %v1208
      %v1562 = vsel %vm1534, %v939, %v1210
      %v1564 = vsel %vm1534, %v940, %v1212
      %v1566 = vsel %vm1534, %v941, %v1214
      %vm1567 = vcmask 130048
      %v1569 = vsel %vm1567, %v1536, %v1265
      %v1571 = vsel %vm1567, %v1538, %v1267
      %v1573 = vsel %vm1567, %v1540, %v1269
      %v1575 = vsel %vm1567, %v1542, %v1271
      %v1577 = vsel %vm1567, %v1544, %v1273
      %v1579 = vsel %vm1567, %v1546, %v1275
      %v1581 = vsel %vm1567, %v1548, %v1277
      %v1583 = vsel %vm1567, %v1550, %v1279
      %v1585 = vsel %vm1567, %v1552, %v1281
      %v1587 = vsel %vm1567, %v1554, %v1283
      %v1589 = vsel %vm1567, %v1556, %v1285
      %v1591 = vsel %vm1567, %v1558, %v1287
      %v1593 = vsel %vm1567, %v1560, %v1289
      %v1595 = vsel %vm1567, %v1562, %v1291
      %v1597 = vsel %vm1567, %v1564, %v1293
      %v1599 = vsel %vm1567, %v1566, %v1295
      %vm1600 = vcmask 195584
      %v1602 = vsel %vm1600, %v1569, %v1302
      %v1604 = vsel %vm1600, %v1571, %v1304
      %v1606 = vsel %vm1600, %v1573, %v1306
      %v1608 = vsel %vm1600, %v1575, %v1308
      %v1610 = vsel %vm1600, %v1577, %v1310
      %v1612 = vsel %vm1600, %v1579, %v1312
      %v1614 = vsel %vm1600, %v1581, %v1314
      %v1616 = vsel %vm1600, %v1583, %v1316
      %v1618 = vsel %vm1600, %v1585, %v1318
      %v1620 = vsel %vm1600, %v1587, %v1320
      %v1622 = vsel %vm1600, %v1589, %v1322
      %v1624 = vsel %vm1600, %v1591, %v1324
      %v1626 = vsel %vm1600, %v1593, %v1326
      %v1628 = vsel %vm1600, %v1595, %v1328
      %v1630 = vsel %vm1600, %v1597, %v1330
      %v1632 = vsel %vm1600, %v1599, %v1332
      %vm1633 = vcmask 261120
      %v1635 = vsel %vm1633, %v1602, %v1349
      %v1637 = vsel %vm1633, %v1604, %v1351
      %v1639 = vsel %vm1633, %v1606, %v1353
      %v1641 = vsel %vm1633, %v1608, %v1355
      %v1643 = vsel %vm1633, %v1610, %v1357
      %v1645 = vsel %vm1633, %v1612, %v1359
      %v1647 = vsel %vm1633, %v1614, %v1361
      %v1649 = vsel %vm1633, %v1616, %v1363
      %v1651 = vsel %vm1633, %v1618, %v1365
      %v1653 = vsel %vm1633, %v1620, %v1367
      %v1655 = vsel %vm1633, %v1622, %v1369
      %v1657 = vsel %vm1633, %v1624, %v1371
      %v1659 = vsel %vm1633, %v1626, %v1373
      %v1661 = vsel %vm1633, %v1628, %v1375
      %v1663 = vsel %vm1633, %v1630, %v1377
      %v1665 = vsel %vm1633, %v1632, %v1379
      %vm1666 = vcmask 326656
      %v1668 = vsel %vm1666, %v1635, %v1384
      %v1670 = vsel %vm1666, %v1637, %v1386
      %v1672 = vsel %vm1666, %v1639, %v1388
      %v1674 = vsel %vm1666, %v1641, %v1390
      %v1676 = vsel %vm1666, %v1643, %v1392
      %v1678 = vsel %vm1666, %v1645, %v1394
      %v1680 = vsel %vm1666, %v1647, %v1396
      %v1682 = vsel %vm1666, %v1649, %v1398
      %v1684 = vsel %vm1666, %v1651, %v1400
      %v1686 = vsel %vm1666, %v1653, %v1402
      %v1688 = vsel %vm1666, %v1655, %v1404
      %v1690 = vsel %vm1666, %v1657, %v1406
      %v1692 = vsel %vm1666, %v1659, %v1408
      %v1694 = vsel %vm1666, %v1661, %v1410
      %v1696 = vsel %vm1666, %v1663, %v1412
      %v1698 = vsel %vm1666, %v1665, %v1414
      %vm1699 = vcmask 392192
      %v1701 = vsel %vm1699, %v1668, %v1421
      %v1703 = vsel %vm1699, %v1670, %v1423
      %v1705 = vsel %vm1699, %v1672, %v1425
      %v1707 = vsel %vm1699, %v1674, %v1427
      %v1709 = vsel %vm1699, %v1676, %v1429
      %v1711 = vsel %vm1699, %v1678, %v1431
      %v1713 = vsel %vm1699, %v1680, %v1433
      %v1715 = vsel %vm1699, %v1682, %v1435
      %v1717 = vsel %vm1699, %v1684, %v1437
      %v1719 = vsel %vm1699, %v1686, %v1439
      %v1721 = vsel %vm1699, %v1688, %v1441
      %v1723 = vsel %vm1699, %v1690, %v1443
      %v1725 = vsel %vm1699, %v1692, %v1445
      %v1727 = vsel %vm1699, %v1694, %v1447
      %v1729 = vsel %vm1699, %v1696, %v1449
      %v1731 = vsel %vm1699, %v1698, %v1451
      %vm1732 = vcmask 457728
      %v1734 = vsel %vm1732, %v1701, %v1468
      %v1736 = vsel %vm1732, %v1703, %v1470
      %v1738 = vsel %vm1732, %v1705, %v1472
      %v1740 = vsel %vm1732, %v1707, %v1474
      %v1742 = vsel %vm1732, %v1709, %v1476
      %v1744 = vsel %vm1732, %v1711, %v1478
      %v1746 = vsel %vm1732, %v1713, %v1480
      %v1748 = vsel %vm1732, %v1715, %v1482
      %v1750 = vsel %vm1732, %v1717, %v1484
      %v1752 = vsel %vm1732, %v1719, %v1486
      %v1754 = vsel %vm1732, %v1721, %v1488
      %v1756 = vsel %vm1732, %v1723, %v1490
      %v1758 = vsel %vm1732, %v1725, %v1492
      %v1760 = vsel %vm1732, %v1727, %v1494
      %v1762 = vsel %vm1732, %v1729, %v1496
      %v1764 = vsel %vm1732, %v1731, %v1498
      %vm1765 = vcmask 523264
      %v1767 = vsel %vm1765, %v1734, %v1503
      %v1769 = vsel %vm1765, %v1736, %v1505
      %v1771 = vsel %vm1765, %v1738, %v1507
      %v1773 = vsel %vm1765, %v1740, %v1509
      %v1775 = vsel %vm1765, %v1742, %v1511
      %v1777 = vsel %vm1765, %v1744, %v1513
      %v1779 = vsel %vm1765, %v1746, %v1515
      %v1781 = vsel %vm1765, %v1748, %v1517
      %v1783 = vsel %vm1765, %v1750, %v1519
      %v1785 = vsel %vm1765, %v1752, %v1521
      %v1787 = vsel %vm1765, %v1754, %v1523
      %v1789 = vsel %vm1765, %v1756, %v1525
      %v1791 = vsel %vm1765, %v1758, %v1527
      %v1793 = vsel %vm1765, %v1760, %v1529
      %v1795 = vsel %vm1765, %v1762, %v1531
      %v1797 = vsel %vm1765, %v1764, %v1533
      %vm1798 = vcmask 588800
      %v1800 = vsel %vm1798, %v1767, 0
      %v1802 = vsel %vm1798, %v1769, 0
      %v1804 = vsel %vm1798, %v1771, 0
      %v1806 = vsel %vm1798, %v1773, 0
      %v1808 = vsel %vm1798, %v1775, 0
      %v1810 = vsel %vm1798, %v1777, 0
      %v1812 = vsel %vm1798, %v1779, 0
      %v1814 = vsel %vm1798, %v1781, 0
      %v1816 = vsel %vm1798, %v1783, 0
      %v1818 = vsel %vm1798, %v1785, 0
      %v1820 = vsel %vm1798, %v1787, 0
      %v1822 = vsel %vm1798, %v1789, 0
      %v1824 = vsel %vm1798, %v1791, 0
      %v1826 = vsel %vm1798, %v1793, 0
      %v1828 = vsel %vm1798, %v1795, 0
      %v1830 = vsel %vm1798, %v1797, 0
      %v1832 = vld [vmem:[%s5] sm:$0xf]
      %v1833 = vld [vmem:[%s5 + $0x4] sm:$0xf]
      %v1834 = vld [vmem:[%s5 + $0x8] sm:$0xf]
      %v1835 = vld [vmem:[%s5 + $0xc] sm:$0xf]
      %v1836 = vld [vmem:[%s5 + $0x10] sm:$0xf]
      %v1837 = vld [vmem:[%s5 + $0x14] sm:$0xf]
      %v1838 = vld [vmem:[%s5 + $0x18] sm:$0xf]
      %v1839 = vld [vmem:[%s5 + $0x1c] sm:$0xf]
      %v1840 = vld [vmem:[%s5 + $0x20] sm:$0xf]
      %v1841 = vld [vmem:[%s5 + $0x24] sm:$0xf]
      %v1842 = vld [vmem:[%s5 + $0x28] sm:$0xf]
      %v1843 = vld [vmem:[%s5 + $0x2c] sm:$0xf]
      %v1844 = vld [vmem:[%s5 + $0x30] sm:$0xf]
      %v1845 = vld [vmem:[%s5 + $0x34] sm:$0xf]
      %v1846 = vld [vmem:[%s5 + $0x38] sm:$0xf]
      %v1847 = vld [vmem:[%s5 + $0x3c] sm:$0xf]
      %v1864 = vunpack.c.l.b16 %v1832
      %v1865 = vunpack.c.l.b16 %v1833
      %v1866 = vunpack.c.l.b16 %v1834
      %v1867 = vunpack.c.l.b16 %v1835
      %v1868 = vunpack.c.l.b16 %v1836
      %v1869 = vunpack.c.l.b16 %v1837
      %v1870 = vunpack.c.l.b16 %v1838
      %v1871 = vunpack.c.l.b16 %v1839
      %v1872 = vunpack.c.l.b16 %v1840
      %v1873 = vunpack.c.l.b16 %v1841
      %v1874 = vunpack.c.l.b16 %v1842
      %v1875 = vunpack.c.l.b16 %v1843
      %v1876 = vunpack.c.l.b16 %v1844
      %v1877 = vunpack.c.l.b16 %v1845
      %v1878 = vunpack.c.l.b16 %v1846
      %v1879 = vunpack.c.l.b16 %v1847
      %v1880 = vpack.c.b16 %v1865, %v1864
      %v1881 = vpack.c.b16 %v1867, %v1866
      %v1882 = vpack.c.b16 %v1869, %v1868
      %v1883 = vpack.c.b16 %v1871, %v1870
      %v1884 = vpack.c.b16 %v1873, %v1872
      %v1885 = vpack.c.b16 %v1875, %v1874
      %v1886 = vpack.c.b16 %v1877, %v1876
      %v1887 = vpack.c.b16 %v1879, %v1878
      %1896 = vmatpush.bf16.msra.mxu0 %v1887
      %1897 = vmatpush.bf16.msra.mxu0 %v1886
      %1898 = vmatpush.bf16.msra.mxu0 %v1885
      %1899 = vmatpush.bf16.msra.mxu0 %v1884
      %1900 = vmatpush.bf16.msra.mxu0 %v1883
      %1901 = vmatpush.bf16.msra.mxu0 %v1882
      %1902 = vmatpush.bf16.msra.mxu0 %v1881
      %1903 = vmatpush.bf16.msra.mxu0 %v1880
      %1904 = vmatmul.bf16.gmra.mxu0 %v1800
      %v1905 = vpop.f32.mrf.mxu0
      %v1906 = vadd.f32 0.0, %v1905
      %v1907 = vpop.f32.mrf.mxu0
      %v1908 = vadd.f32 0.0, %v1907
      %1909 = vmatmul.bf16.gmra.mxu0 %v1802
      %v1910 = vpop.f32.mrf.mxu0
      %v1911 = vadd.f32 0.0, %v1910
      %v1912 = vpop.f32.mrf.mxu0
      %v1913 = vadd.f32 0.0, %v1912
      %1914 = vmatmul.bf16.gmra.mxu0 %v1804
      %v1915 = vpop.f32.mrf.mxu0
      %v1916 = vadd.f32 0.0, %v1915
      %v1917 = vpop.f32.mrf.mxu0
      %v1918 = vadd.f32 0.0, %v1917
      %1919 = vmatmul.bf16.gmra.mxu0 %v1806
      %v1920 = vpop.f32.mrf.mxu0
      %v1921 = vadd.f32 0.0, %v1920
      %v1922 = vpop.f32.mrf.mxu0
      %v1923 = vadd.f32 0.0, %v1922
      %1924 = vmatmul.bf16.gmra.mxu0 %v1808
      %v1925 = vpop.f32.mrf.mxu0
      %v1926 = vadd.f32 0.0, %v1925
      %v1927 = vpop.f32.mrf.mxu0
      %v1928 = vadd.f32 0.0, %v1927
      %1929 = vmatmul.bf16.gmra.mxu0 %v1810
      %v1930 = vpop.f32.mrf.mxu0
      %v1931 = vadd.f32 0.0, %v1930
      %v1932 = vpop.f32.mrf.mxu0
      %v1933 = vadd.f32 0.0, %v1932
      %1934 = vmatmul.bf16.gmra.mxu0 %v1812
      %v1935 = vpop.f32.mrf.mxu0
      %v1936 = vadd.f32 0.0, %v1935
      %v1937 = vpop.f32.mrf.mxu0
      %v1938 = vadd.f32 0.0, %v1937
      %1939 = vmatmul.bf16.gmra.mxu0 %v1814
      %v1940 = vpop.f32.mrf.mxu0
      %v1941 = vadd.f32 0.0, %v1940
      %v1942 = vpop.f32.mrf.mxu0
      %v1943 = vadd.f32 0.0, %v1942
      %1944 = vmatmul.bf16.gmra.mxu0 %v1816
      %v1945 = vpop.f32.mrf.mxu0
      %v1946 = vadd.f32 0.0, %v1945
      %v1947 = vpop.f32.mrf.mxu0
      %v1948 = vadd.f32 0.0, %v1947
      %1949 = vmatmul.bf16.gmra.mxu0 %v1818
      %v1950 = vpop.f32.mrf.mxu0
      %v1951 = vadd.f32 0.0, %v1950
      %v1952 = vpop.f32.mrf.mxu0
      %v1953 = vadd.f32 0.0, %v1952
      %1954 = vmatmul.bf16.gmra.mxu0 %v1820
      %v1955 = vpop.f32.mrf.mxu0
      %v1956 = vadd.f32 0.0, %v1955
      %v1957 = vpop.f32.mrf.mxu0
      %v1958 = vadd.f32 0.0, %v1957
      %1959 = vmatmul.bf16.gmra.mxu0 %v1822
      %v1960 = vpop.f32.mrf.mxu0
      %v1961 = vadd.f32 0.0, %v1960
      %v1962 = vpop.f32.mrf.mxu0
      %v1963 = vadd.f32 0.0, %v1962
      %1964 = vmatmul.bf16.gmra.mxu0 %v1824
      %v1965 = vpop.f32.mrf.mxu0
      %v1966 = vadd.f32 0.0, %v1965
      %v1967 = vpop.f32.mrf.mxu0
      %v1968 = vadd.f32 0.0, %v1967
      %1969 = vmatmul.bf16.gmra.mxu0 %v1826
      %v1970 = vpop.f32.mrf.mxu0
      %v1971 = vadd.f32 0.0, %v1970
      %v1972 = vpop.f32.mrf.mxu0
      %v1973 = vadd.f32 0.0, %v1972
      %1974 = vmatmul.bf16.gmra.mxu0 %v1828
      %v1975 = vpop.f32.mrf.mxu0
      %v1976 = vadd.f32 0.0, %v1975
      %v1977 = vpop.f32.mrf.mxu0
      %v1978 = vadd.f32 0.0, %v1977
      %1979 = vmatmul.bf16.gmra.mxu0 %v1830
      %v1980 = vpop.f32.mrf.mxu0
      %v1981 = vadd.f32 0.0, %v1980
      %v1982 = vpop.f32.mrf.mxu0
      %v1983 = vadd.f32 0.0, %v1982
      %1984 = vdwg.mxu0
      %1985 = vst.msk [vmem:[%s454] sm:$0xff] %vm1534, %v1906
      %1986 = vst.msk [vmem:[%s454 + $0x8] sm:$0xff] %vm1534, %v1908
      %1987 = vst.msk [vmem:[%s454 + $0x10] sm:$0xff] %vm1534, %v1911
      %1988 = vst.msk [vmem:[%s454 + $0x18] sm:$0xff] %vm1534, %v1913
      %1989 = vst.msk [vmem:[%s454 + $0x20] sm:$0xff] %vm1534, %v1916
      %1990 = vst.msk [vmem:[%s454 + $0x28] sm:$0xff] %vm1534, %v1918
      %1991 = vst.msk [vmem:[%s454 + $0x30] sm:$0xff] %vm1534, %v1921
      %1992 = vst.msk [vmem:[%s454 + $0x38] sm:$0xff] %vm1534, %v1923
      %1993 = vst.msk [vmem:[%s454 + $0x40] sm:$0xff] %vm1534, %v1926
      %1994 = vst.msk [vmem:[%s454 + $0x48] sm:$0xff] %vm1534, %v1928
      %1995 = vst.msk [vmem:[%s454 + $0x50] sm:$0xff] %vm1534, %v1931
      %1996 = vst.msk [vmem:[%s454 + $0x58] sm:$0xff] %vm1534, %v1933
      %1997 = vst.msk [vmem:[%s454 + $0x60] sm:$0xff] %vm1534, %v1936
      %1998 = vst.msk [vmem:[%s454 + $0x68] sm:$0xff] %vm1534, %v1938
      %1999 = vst.msk [vmem:[%s454 + $0x70] sm:$0xff] %vm1534, %v1941
      %2000 = vst.msk [vmem:[%s454 + $0x78] sm:$0xff] %vm1534, %v1943
      %2001 = vst.msk [vmem:[%s454 + $0x80] sm:$0xff] %vm1534, %v1946
      %2002 = vst.msk [vmem:[%s454 + $0x88] sm:$0xff] %vm1534, %v1948
      %2003 = vst.msk [vmem:[%s454 + $0x90] sm:$0xff] %vm1534, %v1951
      %2004 = vst.msk [vmem:[%s454 + $0x98] sm:$0xff] %vm1534, %v1953
      %2005 = vst.msk [vmem:[%s454 + $0xa0] sm:$0xff] %vm1534, %v1956
      %2006 = vst.msk [vmem:[%s454 + $0xa8] sm:$0xff] %vm1534, %v1958
      %2007 = vst.msk [vmem:[%s454 + $0xb0] sm:$0xff] %vm1534, %v1961
      %2008 = vst.msk [vmem:[%s454 + $0xb8] sm:$0xff] %vm1534, %v1963
      %2009 = vst.msk [vmem:[%s454 + $0xc0] sm:$0xff] %vm1534, %v1966
      %2010 = vst.msk [vmem:[%s454 + $0xc8] sm:$0xff] %vm1534, %v1968
      %2011 = vst.msk [vmem:[%s454 + $0xd0] sm:$0xff] %vm1534, %v1971
      %2012 = vst.msk [vmem:[%s454 + $0xd8] sm:$0xff] %vm1534, %v1973
      %2013 = vst.msk [vmem:[%s454 + $0xe0] sm:$0xff] %vm1534, %v1976
      %2014 = vst.msk [vmem:[%s454 + $0xe8] sm:$0xff] %vm1534, %v1978
      %2015 = vst.msk [vmem:[%s454 + $0xf0] sm:$0xff] %vm1534, %v1981
      %2016 = vst.msk [vmem:[%s454 + $0xf8] sm:$0xff] %vm1534, %v1983
      %v2017 = vsel %vm1534, %v1906, 0.0
      %v2018 = vsel %vm1534, %v1908, 0.0
      %v2019 = vadd.f32 %v2017, %v2018
      %v2020 = vsel %vm1534, %v1911, 0.0
      %v2021 = vadd.f32 %v2019, %v2020
      %v2022 = vsel %vm1534, %v1913, 0.0
      %v2023 = vadd.f32 %v2021, %v2022
      %v2024 = vsel %vm1534, %v1916, 0.0
      %v2025 = vadd.f32 %v2023, %v2024
      %v2026 = vsel %vm1534, %v1918, 0.0
      %v2027 = vadd.f32 %v2025, %v2026
      %v2028 = vsel %vm1534, %v1921, 0.0
      %v2029 = vadd.f32 %v2027, %v2028
      %v2030 = vsel %vm1534, %v1923, 0.0
      %v2031 = vadd.f32 %v2029, %v2030
      %v2032 = vsel %vm1534, %v1926, 0.0
      %v2033 = vadd.f32 %v2031, %v2032
      %v2034 = vsel %vm1534, %v1928, 0.0
      %v2035 = vadd.f32 %v2033, %v2034
      %v2036 = vsel %vm1534, %v1931, 0.0
      %v2037 = vadd.f32 %v2035, %v2036
      %v2038 = vsel %vm1534, %v1933, 0.0
      %v2039 = vadd.f32 %v2037, %v2038
      %v2040 = vsel %vm1534, %v1936, 0.0
      %v2041 = vadd.f32 %v2039, %v2040
      %v2042 = vsel %vm1534, %v1938, 0.0
      %v2043 = vadd.f32 %v2041, %v2042
      %v2044 = vsel %vm1534, %v1941, 0.0
      %v2045 = vadd.f32 %v2043, %v2044
      %v2046 = vsel %vm1534, %v1943, 0.0
      %v2047 = vadd.f32 %v2045, %v2046
      %v2048 = vsel %vm1534, %v1946, 0.0
      %v2049 = vadd.f32 %v2047, %v2048
      %v2050 = vsel %vm1534, %v1948, 0.0
      %v2051 = vadd.f32 %v2049, %v2050
      %v2052 = vsel %vm1534, %v1951, 0.0
      %v2053 = vadd.f32 %v2051, %v2052
      %v2054 = vsel %vm1534, %v1953, 0.0
      %v2055 = vadd.f32 %v2053, %v2054
      %v2056 = vsel %vm1534, %v1956, 0.0
      %v2057 = vadd.f32 %v2055, %v2056
      %v2058 = vsel %vm1534, %v1958, 0.0
      %v2059 = vadd.f32 %v2057, %v2058
      %v2060 = vsel %vm1534, %v1961, 0.0
      %v2061 = vadd.f32 %v2059, %v2060
      %v2062 = vsel %vm1534, %v1963, 0.0
      %v2063 = vadd.f32 %v2061, %v2062
      %v2064 = vsel %vm1534, %v1966, 0.0
      %v2065 = vadd.f32 %v2063, %v2064
      %v2066 = vsel %vm1534, %v1968, 0.0
      %v2067 = vadd.f32 %v2065, %v2066
      %v2068 = vsel %vm1534, %v1971, 0.0
      %v2069 = vadd.f32 %v2067, %v2068
      %v2070 = vsel %vm1534, %v1973, 0.0
      %v2071 = vadd.f32 %v2069, %v2070
      %v2072 = vsel %vm1534, %v1976, 0.0
      %v2073 = vadd.f32 %v2071, %v2072
      %v2074 = vsel %vm1534, %v1978, 0.0
      %v2075 = vadd.f32 %v2073, %v2074
      %v2076 = vsel %vm1534, %v1981, 0.0
      %v2077 = vadd.f32 %v2075, %v2076
      %v2078 = vsel %vm1534, %v1983, 0.0
      %v2079 = vadd.f32 %v2077, %v2078
      %v2080 = vrot.slane %v2079, 4
      %v2081 = vadd.f32 %v2079, %v2080
      %v2082 = vrot.slane %v2081, 2
      %v2083 = vadd.f32 %v2081, %v2082
      %v2084 = vrot.slane %v2083, 1
      %v2085 = vadd.f32 %v2083, %v2084
      %v2086 = vmul.f32 %v1906, %v1906
      %v2087 = vmul.f32 %v1908, %v1908
      %v2088 = vmul.f32 %v1911, %v1911
      %v2089 = vmul.f32 %v1913, %v1913
      %v2090 = vmul.f32 %v1916, %v1916
      %v2091 = vmul.f32 %v1918, %v1918
      %v2092 = vmul.f32 %v1921, %v1921
      %v2093 = vmul.f32 %v1923, %v1923
      %v2094 = vmul.f32 %v1926, %v1926
      %v2095 = vmul.f32 %v1928, %v1928
      %v2096 = vmul.f32 %v1931, %v1931
      %v2097 = vmul.f32 %v1933, %v1933
      %v2098 = vmul.f32 %v1936, %v1936
      %v2099 = vmul.f32 %v1938, %v1938
      %v2100 = vmul.f32 %v1941, %v1941
      %v2101 = vmul.f32 %v1943, %v1943
      %v2102 = vmul.f32 %v1946, %v1946
      %v2103 = vmul.f32 %v1948, %v1948
      %v2104 = vmul.f32 %v1951, %v1951
      %v2105 = vmul.f32 %v1953, %v1953
      %v2106 = vmul.f32 %v1956, %v1956
      %v2107 = vmul.f32 %v1958, %v1958
      %v2108 = vmul.f32 %v1961, %v1961
      %v2109 = vmul.f32 %v1963, %v1963
      %v2110 = vmul.f32 %v1966, %v1966
      %v2111 = vmul.f32 %v1968, %v1968
      %v2112 = vmul.f32 %v1971, %v1971
      %v2113 = vmul.f32 %v1973, %v1973
      %v2114 = vmul.f32 %v1976, %v1976
      %v2115 = vmul.f32 %v1978, %v1978
      %v2116 = vmul.f32 %v1981, %v1981
      %v2117 = vmul.f32 %v1983, %v1983
      %v2118 = vsel %vm1534, %v2086, 0.0
      %v2119 = vsel %vm1534, %v2087, 0.0
      %v2120 = vadd.f32 %v2118, %v2119
      %v2121 = vsel %vm1534, %v2088, 0.0
      %v2122 = vadd.f32 %v2120, %v2121
      %v2123 = vsel %vm1534, %v2089, 0.0
      %v2124 = vadd.f32 %v2122, %v2123
      %v2125 = vsel %vm1534, %v2090, 0.0
      %v2126 = vadd.f32 %v2124, %v2125
      %v2127 = vsel %vm1534, %v2091, 0.0
      %v2128 = vadd.f32 %v2126, %v2127
      %v2129 = vsel %vm1534, %v2092, 0.0
      %v2130 = vadd.f32 %v2128, %v2129
      %v2131 = vsel %vm1534, %v2093, 0.0
      %v2132 = vadd.f32 %v2130, %v2131
      %v2133 = vsel %vm1534, %v2094, 0.0
      %v2134 = vadd.f32 %v2132, %v2133
      %v2135 = vsel %vm1534, %v2095, 0.0
      %v2136 = vadd.f32 %v2134, %v2135
      %v2137 = vsel %vm1534, %v2096, 0.0
      %v2138 = vadd.f32 %v2136, %v2137
      %v2139 = vsel %vm1534, %v2097, 0.0
      %v2140 = vadd.f32 %v2138, %v2139
      %v2141 = vsel %vm1534, %v2098, 0.0
      %v2142 = vadd.f32 %v2140, %v2141
      %v2143 = vsel %vm1534, %v2099, 0.0
      %v2144 = vadd.f32 %v2142, %v2143
      %v2145 = vsel %vm1534, %v2100, 0.0
      %v2146 = vadd.f32 %v2144, %v2145
      %v2147 = vsel %vm1534, %v2101, 0.0
      %v2148 = vadd.f32 %v2146, %v2147
      %v2149 = vsel %vm1534, %v2102, 0.0
      %v2150 = vadd.f32 %v2148, %v2149
      %v2151 = vsel %vm1534, %v2103, 0.0
      %v2152 = vadd.f32 %v2150, %v2151
      %v2153 = vsel %vm1534, %v2104, 0.0
      %v2154 = vadd.f32 %v2152, %v2153
      %v2155 = vsel %vm1534, %v2105, 0.0
      %v2156 = vadd.f32 %v2154, %v2155
      %v2157 = vsel %vm1534, %v2106, 0.0
      %v2158 = vadd.f32 %v2156, %v2157
      %v2159 = vsel %vm1534, %v2107, 0.0
      %v2160 = vadd.f32 %v2158, %v2159
      %v2161 = vsel %vm1534, %v2108, 0.0
      %v2162 = vadd.f32 %v2160, %v2161
      %v2163 = vsel %vm1534, %v2109, 0.0
      %v2164 = vadd.f32 %v2162, %v2163
      %v2165 = vsel %vm1534, %v2110, 0.0
      %v2166 = vadd.f32 %v2164, %v2165
      %v2167 = vsel %vm1534, %v2111, 0.0
      %v2168 = vadd.f32 %v2166, %v2167
      %v2169 = vsel %vm1534, %v2112, 0.0
      %v2170 = vadd.f32 %v2168, %v2169
      %v2171 = vsel %vm1534, %v2113, 0.0
      %v2172 = vadd.f32 %v2170, %v2171
      %v2173 = vsel %vm1534, %v2114, 0.0
      %v2174 = vadd.f32 %v2172, %v2173
      %v2175 = vsel %vm1534, %v2115, 0.0
      %v2176 = vadd.f32 %v2174, %v2175
      %v2177 = vsel %vm1534, %v2116, 0.0
      %v2178 = vadd.f32 %v2176, %v2177
      %v2179 = vsel %vm1534, %v2117, 0.0
      %v2180 = vadd.f32 %v2178, %v2179
      %v2181 = vrot.slane %v2180, 4
      %v2182 = vadd.f32 %v2180, %v2181
      %v2183 = vrot.slane %v2182, 2
      %v2184 = vadd.f32 %v2182, %v2183
      %v2185 = vrot.slane %v2184, 1
      %v2186 = vadd.f32 %v2184, %v2185
      %2188 = vrot.lane.b32.xlu0 %v2186, 8
      %v2189 = vpop.permute.xlu0 %2188
      %v2191 = vsel %vm1534, %v2085, %v2189
      %vm2192 = vcmask 122880
      %2193 = vst.msk [vmem:[%s461] sm:$0x1] %vm2192, %v2191
      %s2194 = smul.u32 32, %s24
      %p2195 = scmp.lt.s32.totalorder %s23, 1
      %s2196 = scalar_select %p2195, %s23, 1
      %p2197 = scmp.lt.s32.totalorder %s2194, 31
      %s2198 = scalar_select %p2197, %s2194, 31
      %s2199 = smul.addr %s2196, 32
      %s2200 = sadd.s32 %s2198, %s2199
      %s2201 = smul.addr %s2200, 8
      %s2202 = scalar_lea.vmem %s6, %s2201
      %p2203 = scmp.lt.s32.totalorder %s23, 1
      %s2204 = scalar_select %p2203, %s23, 1
      %p2205 = scmp.lt.s32.totalorder %s24, 0
      %s2206 = scalar_select %p2205, %s24, 0
      %s2207 = sadd.s32 %s2206, %s2204
      %s2208 = scalar_lea.vmem %s7, %s2207
      // Predicated region
      $region45: #{ae_conv_block.4} parent=43 // pred_check
        %p2209 = pneg %p214
      $region46: #{ae_conv_block.4} parent=43 // pred_check_branch
        %2211 = sbr.rel (%p2209) target = $region48
      $region47: #{ae_conv_block.4} parent=43 // pred_region
        %s2212 = smul.u32 32, %s24
      $region48: #{ae_conv_block.4} parent=43 // pred_fallthru
        _
      // Predicated region
      $region49: #{ae_conv_block.4} parent=43 // pred_check
        %p2213 = pneg %p242
      $region50: #{ae_conv_block.4} parent=43 // pred_check_branch
        %2215 = sbr.rel (%p2213) target = $region52
      $region51: #{ae_conv_block.4} parent=43 // pred_region
        _
      $region52: #{ae_conv_block.4} parent=43 // pred_fallthru
        _
    $region44: #{ae_conv_block.4} parent=5 // pred_fallthru
      _
    %p2216 = scmp.le.s32.totalorder 2, %s14
    // Predicated region
    $region53: #{ae_conv_block.4} parent=5 // pred_check
      %p2217 = pneg %p2216
    $region54: #{ae_conv_block.4} parent=5 // pred_check_branch
      %2219 = sbr.rel (%p2217) target = $region56
    $region55: #{ae_conv_block.4} parent=5 // pred_region
      %s2220 = ssub.s32 %s14, 2
      // Predicated region
      $region57: #{ae_conv_block.4} parent=55 // pred_check
        %p2221 = pneg %p220
      $region58: #{ae_conv_block.4} parent=55 // pred_check_branch
        %2223 = sbr.rel (%p2221) target = $region60
      $region59: #{ae_conv_block.4} parent=55 // pred_region
        %s2224 = smul.u32 32, %s26
        %p2225 = scmp.lt.s32.totalorder %s25, 1
        %s2226 = scalar_select %p2225, %s25, 1
        %p2227 = scmp.lt.s32.totalorder %s2224, 31
        %s2228 = scalar_select %p2227, %s2224, 31
        %s2229 = smul.addr %s2226, 32
        %s2230 = sadd.s32 %s2228, %s2229
        %s2231 = smul.addr %s2230, 8
        %s2232 = scalar_lea.vmem %s6, %s2231
      $region60: #{ae_conv_block.4} parent=55 // pred_fallthru
        _
      // Predicated region
      $region61: #{ae_conv_block.4} parent=55 // pred_check
        %p2233 = pneg %p248
      $region62: #{ae_conv_block.4} parent=55 // pred_check_branch
        %2235 = sbr.rel (%p2233) target = $region64
      $region63: #{ae_conv_block.4} parent=55 // pred_region
        %p2236 = scmp.lt.s32.totalorder %s25, 1
        %s2237 = scalar_select %p2236, %s25, 1
        %p2238 = scmp.lt.s32.totalorder %s26, 0
        %s2239 = scalar_select %p2238, %s26, 0
        %s2240 = sadd.s32 %s2239, %s2237
        %s2241 = scalar_lea.vmem %s7, %s2240
      $region64: #{ae_conv_block.4} parent=55 // pred_fallthru
        _
    $region56: #{ae_conv_block.4} parent=5 // pred_fallthru
      _
  $region6: #{ae_conv_block.4} parent=0 // loop_footer
    %s18 = sadd.s32 1, %s14
  $region7: #{ae_conv_block.4} parent=0 // loop_footer_branch
    %13 = sbr.rel target = $region3
  $region8: #{ae_conv_block.4} parent=0 // loop_exit
    _

// kernel: ae_conv_block.3
$region0: #{ae_conv_block.3}
  #allocation0 [shape = 'u32[]', space=smem, size = 0x4, offset = 0x4, fixed_abs, tag = 'smem constant byte address 0x4 - core index']
  #allocation1 [shape = 'u32[72,128]{1,0:T(1,128)}', space=vmem, size = 0x9000, scoped, tag = 'internal scratch']
  %s0 = inlined_call_operand.vmem [shape: f32[2,16,16,4], index: 0, kind: input, shape index: {}, may-alias: {0,1,2}]
  %s1 = inlined_call_operand.vmem [shape: f32[2,16,16,4], index: 1, kind: input, shape index: {}, may-alias: {0,1,2}]
  %s2 = inlined_call_operand.vmem [shape: f32[2,16,16,4], index: 2, kind: input, shape index: {}, may-alias: {0,1,2}]
  %s3 = inlined_call_operand.vmem [shape: f32[1,4], index: 3, kind: input, shape index: {}]
  %s4 = inlined_call_operand.vmem [shape: f32[1,4], index: 4, kind: input, shape index: {}]
  %s5 = inlined_call_operand.vmem [shape: bf16[128,8], index: 5, kind: input, shape index: {}]
  %s6 = inlined_call_operand.vmem [shape: f32[2,256,8], index: 6, kind: output, shape index: {0}]
  %s7 = inlined_call_operand.vmem [shape: f32[2,1,1,16], index: 7, kind: output, shape index: {1}]
  %8 = xla_tuple %s6, %s7
  %s9 = sld [smem:[#allocation0]]
  $region65: #{ae_conv_block.3} parent=0
    _
  %s11 = ssub.s32 1, %s9
  %s12 = scalar_select 0, %s11, %s9
  loop: start=0, step=1, limit=4
  $region2: #{ae_conv_block.3} parent=0 // loop_pre_header
    _
  $region3: #{ae_conv_block.3} parent=0 // loop_header
    %s14 = sphi 0, %s18
    %p15 = scmp.ge.s32.totalorder %s14, 4
    %s21 = sphi 0, %s33
    %s22 = sphi 0, %s29
    %s23 = sphi 0, %s21
    %s24 = sphi 0, %s22
    %s25 = sphi 0, %s23
    %s26 = sphi 0, %s24
    %s46 = sphi 0, %s48
    %s49 = sphi 0, %s46
    %s50 = sphi 0, %s49
    %s66 = sphi 0, %s50
    %s74 = sphi 0, %s76
    %s77 = sphi 0, %s74
    %s78 = sphi 0, %s77
    %s94 = sphi 0, %s78
    %s110 = sphi 0, %s112
    %s113 = sphi 0, %s110
    %s114 = sphi 0, %s113
    %s130 = sphi 0, %s114
    %s134 = sphi 0, %s134
    %s136 = sphi 0, %s134
    %s137 = sphi 0, %s136
    %s151 = sphi 0, %s137
    %s155 = sphi 0, %s155
    %s157 = sphi 0, %s155
    %s158 = sphi 0, %s157
    %s172 = sphi 0, %s158
    %s176 = sphi 0, %s176
    %s178 = sphi 0, %s176
    %s179 = sphi 0, %s178
    %s193 = sphi 0, %s179
    %s201 = sphi 0, %s203
    %s204 = sphi 0, %s201
    %s205 = sphi 0, %s204
    %s221 = sphi 0, %s205
    %s229 = sphi 0, %s231
    %s232 = sphi 0, %s229
    %s233 = sphi 0, %s232
    %s249 = sphi 0, %s233
  $region4: #{ae_conv_block.3} parent=0 // loop_header_branch
    %17 = sbr.rel (%p15) target = $region8
  $region5: #{ae_conv_block.3} parent=0 // loop_body
    %s19 = ssub.s32 %s14, 1
    %s20 = ssub.s32 %s14, 2
    %s27 = sadd.s32 1, %s22
    %p28 = scmp.ge.s32.totalorder %s27, 1
    %s29 = scalar_select %p28, 0, %s27
    %s30 = sadd.s32 1, %s21
    %s31 = scalar_select %p28, %s30, %s21
    %p32 = scmp.ge.s32.totalorder %s31, 2
    %s33 = scalar_select %p32, 0, %s31
    %s34 = smul.u32 %s22, 16
    %s35 = ssub.s32 %s34, 1
    %p36 = scmp.gt.s32.totalorder %s35, 0
    %s37 = scalar_select %p36, %s35, 0
    %s38 = smul.u32 %s29, 16
    %s39 = ssub.s32 %s38, 1
    %p40 = scmp.gt.s32.totalorder %s39, 0
    %s41 = scalar_select %p40, %s39, 0
    %s42 = ssub.s32 %s21, %s33
    %s43 = ssub.s32 %s37, %s41
    %s44 = sor.u32 %s42, %s43
    %p45 = scmp.eq.s32.totalorder %s44, 0
    %s47 = sadd.s32 %s46, 1
    %s48 = scalar_select %p45, %s46, %s47
    %p51 = pneg %p45
    %p52 = scmp.eq.s32.totalorder %s14, 1
    %p53 = por %p51, %p52
    %p54 = scmp.ne.s32.totalorder %s46, %s49
    %p55 = scmp.eq.s32.totalorder %s14, 0
    %p56 = por %p54, %p55
    %p57 = scmp.ne.s32.totalorder %s46, %s49
    %p58 = scmp.eq.s32.totalorder %s19, 1
    %p59 = por %p57, %p58
    %p60 = scmp.ne.s32.totalorder %s49, %s50
    %p61 = scmp.eq.s32.totalorder %s19, 0
    %p62 = por %p60, %p61
    %p63 = scmp.ne.s32.totalorder %s49, %s50
    %p64 = scmp.eq.s32.totalorder %s20, 1
    %p65 = por %p63, %p64
    %p67 = scmp.ne.s32.totalorder %s50, %s66
    %p68 = scmp.eq.s32.totalorder %s20, 0
    %p69 = por %p67, %p68
    %s70 = ssub.s32 %s21, %s33
    %s71 = ssub.s32 %s22, %s29
    %s72 = sor.u32 %s70, %s71
    %p73 = scmp.eq.s32.totalorder %s72, 0
    %s75 = sadd.s32 %s74, 1
    %s76 = scalar_select %p73, %s74, %s75
    %p79 = pneg %p73
    %p80 = scmp.eq.s32.totalorder %s14, 1
    %p81 = por %p79, %p80
    %p82 = scmp.ne.s32.totalorder %s74, %s77
    %p83 = scmp.eq.s32.totalorder %s14, 0
    %p84 = por %p82, %p83
    %p85 = scmp.ne.s32.totalorder %s74, %s77
    %p86 = scmp.eq.s32.totalorder %s19, 1
    %p87 = por %p85, %p86
    %p88 = scmp.ne.s32.totalorder %s77, %s78
    %p89 = scmp.eq.s32.totalorder %s19, 0
    %p90 = por %p88, %p89
    %p91 = scmp.ne.s32.totalorder %s77, %s78
    %p92 = scmp.eq.s32.totalorder %s20, 1
    %p93 = por %p91, %p92
    %p95 = scmp.ne.s32.totalorder %s78, %s94
    %p96 = scmp.eq.s32.totalorder %s20, 0
    %p97 = por %p95, %p96
    %s98 = sadd.s32 %s22, 1
    %s99 = smul.u32 %s98, 16
    %p100 = scmp.lt.s32.totalorder %s99, 15
    %s101 = scalar_select %p100, %s99, 15
    %s102 = sadd.s32 %s29, 1
    %s103 = smul.u32 %s102, 16
    %p104 = scmp.lt.s32.totalorder %s103, 15
    %s105 = scalar_select %p104, %s103, 15
    %s106 = ssub.s32 %s21, %s33
    %s107 = ssub.s32 %s101, %s105
    %s108 = sor.u32 %s106, %s107
    %p109 = scmp.eq.s32.totalorder %s108, 0
    %s111 = sadd.s32 %s110, 1
    %s112 = scalar_select %p109, %s110, %s111
    %p115 = pneg %p109
    %p116 = scmp.eq.s32.totalorder %s14, 1
    %p117 = por %p115, %p116
    %p118 = scmp.ne.s32.totalorder %s110, %s113
    %p119 = scmp.eq.s32.totalorder %s14, 0
    %p120 = por %p118, %p119
    %p121 = scmp.ne.s32.totalorder %s110, %s113
    %p122 = scmp.eq.s32.totalorder %s19, 1
    %p123 = por %p121, %p122
    %p124 = scmp.ne.s32.totalorder %s113, %s114
    %p125 = scmp.eq.s32.totalorder %s19, 0
    %p126 = por %p124, %p125
    %p127 = scmp.ne.s32.totalorder %s113, %s114
    %p128 = scmp.eq.s32.totalorder %s20, 1
    %p129 = por %p127, %p128
    %p131 = scmp.ne.s32.totalorder %s114, %s130
    %p132 = scmp.eq.s32.totalorder %s20, 0
    %p133 = por %p131, %p132
    %s135 = sadd.s32 %s134, 1
    %p138 = scmp.eq.s32.totalorder %s14, 1
    %p139 = scmp.ne.s32.totalorder %s134, %s136
    %p140 = scmp.eq.s32.totalorder %s14, 0
    %p141 = por %p139, %p140
    %p142 = scmp.ne.s32.totalorder %s134, %s136
    %p143 = scmp.eq.s32.totalorder %s19, 1
    %p144 = por %p142, %p143
    %p145 = scmp.ne.s32.totalorder %s136, %s137
    %p146 = scmp.eq.s32.totalorder %s19, 0
    %p147 = por %p145, %p146
    %p148 = scmp.ne.s32.totalorder %s136, %s137
    %p149 = scmp.eq.s32.totalorder %s20, 1
    %p150 = por %p148, %p149
    %p152 = scmp.ne.s32.totalorder %s137, %s151
    %p153 = scmp.eq.s32.totalorder %s20, 0
    %p154 = por %p152, %p153
    %s156 = sadd.s32 %s155, 1
    %p159 = scmp.eq.s32.totalorder %s14, 1
    %p160 = scmp.ne.s32.totalorder %s155, %s157
    %p161 = scmp.eq.s32.totalorder %s14, 0
    %p162 = por %p160, %p161
    %p163 = scmp.ne.s32.totalorder %s155, %s157
    %p164 = scmp.eq.s32.totalorder %s19, 1
    %p165 = por %p163, %p164
    %p166 = scmp.ne.s32.totalorder %s157, %s158
    %p167 = scmp.eq.s32.totalorder %s19, 0
    %p168 = por %p166, %p167
    %p169 = scmp.ne.s32.totalorder %s157, %s158
    %p170 = scmp.eq.s32.totalorder %s20, 1
    %p171 = por %p169, %p170
    %p173 = scmp.ne.s32.totalorder %s158, %s172
    %p174 = scmp.eq.s32.totalorder %s20, 0
    %p175 = por %p173, %p174
    %s177 = sadd.s32 %s176, 1
    %p180 = scmp.eq.s32.totalorder %s14, 1
    %p181 = scmp.ne.s32.totalorder %s176, %s178
    %p182 = scmp.eq.s32.totalorder %s14, 0
    %p183 = por %p181, %p182
    %p184 = scmp.ne.s32.totalorder %s176, %s178
    %p185 = scmp.eq.s32.totalorder %s19, 1
    %p186 = por %p184, %p185
    %p187 = scmp.ne.s32.totalorder %s178, %s179
    %p188 = scmp.eq.s32.totalorder %s19, 0
    %p189 = por %p187, %p188
    %p190 = scmp.ne.s32.totalorder %s178, %s179
    %p191 = scmp.eq.s32.totalorder %s20, 1
    %p192 = por %p190, %p191
    %p194 = scmp.ne.s32.totalorder %s179, %s193
    %p195 = scmp.eq.s32.totalorder %s20, 0
    %p196 = por %p194, %p195
    %s197 = ssub.s32 %s21, %s33
    %s198 = ssub.s32 %s22, %s29
    %s199 = sor.u32 %s197, %s198
    %p200 = scmp.eq.s32.totalorder %s199, 0
    %s202 = sadd.s32 %s201, 1
    %s203 = scalar_select %p200, %s201, %s202
    %p206 = pneg %p200
    %p207 = scmp.eq.s32.totalorder %s14, 1
    %p208 = por %p206, %p207
    %p209 = scmp.ne.s32.totalorder %s201, %s204
    %p210 = scmp.eq.s32.totalorder %s14, 0
    %p211 = por %p209, %p210
    %p212 = scmp.ne.s32.totalorder %s201, %s204
    %p213 = scmp.eq.s32.totalorder %s19, 1
    %p214 = por %p212, %p213
    %p215 = scmp.ne.s32.totalorder %s204, %s205
    %p216 = scmp.eq.s32.totalorder %s19, 0
    %p217 = por %p215, %p216
    %p218 = scmp.ne.s32.totalorder %s204, %s205
    %p219 = scmp.eq.s32.totalorder %s20, 1
    %p220 = por %p218, %p219
    %p222 = scmp.ne.s32.totalorder %s205, %s221
    %p223 = scmp.eq.s32.totalorder %s20, 0
    %p224 = por %p222, %p223
    %s225 = ssub.s32 %s21, %s33
    %s226 = ssub.s32 %s22, %s29
    %s227 = sor.u32 %s225, %s226
    %p228 = scmp.eq.s32.totalorder %s227, 0
    %s230 = sadd.s32 %s229, 1
    %s231 = scalar_select %p228, %s229, %s230
    %p234 = pneg %p228
    %p235 = scmp.eq.s32.totalorder %s14, 1
    %p236 = por %p234, %p235
    %p237 = scmp.ne.s32.totalorder %s229, %s232
    %p238 = scmp.eq.s32.totalorder %s14, 0
    %p239 = por %p237, %p238
    %p240 = scmp.ne.s32.totalorder %s229, %s232
    %p241 = scmp.eq.s32.totalorder %s19, 1
    %p242 = por %p240, %p241
    %p243 = scmp.ne.s32.totalorder %s232, %s233
    %p244 = scmp.eq.s32.totalorder %s19, 0
    %p245 = por %p243, %p244
    %p246 = scmp.ne.s32.totalorder %s232, %s233
    %p247 = scmp.eq.s32.totalorder %s20, 1
    %p248 = por %p246, %p247
    %p250 = scmp.ne.s32.totalorder %s233, %s249
    %p251 = scmp.eq.s32.totalorder %s20, 0
    %p252 = por %p250, %p251
    %p253 = scmp.le.s32.totalorder 1, %s14
    %p254 = scmp.lt.s32.totalorder %s14, 3
    %p255 = pnand %p253, %p254
    %p256 = pneg %p255
    // Predicated region
    $region9: #{ae_conv_block.3} parent=5 // pred_check
      _
    $region10: #{ae_conv_block.3} parent=5 // pred_check_branch
      %258 = sbr.rel (%p255) target = $region12
    $region11: #{ae_conv_block.3} parent=5 // pred_region
      %s259 = ssub.s32 %s14, 1
      // Predicated region
      $region13: #{ae_conv_block.3} parent=11 // pred_check
        %p260 = pneg %p147
      $region14: #{ae_conv_block.3} parent=11 // pred_check_branch
        %262 = sbr.rel (%p260) target = $region16
      $region15: #{ae_conv_block.3} parent=11 // pred_region
        _
      $region16: #{ae_conv_block.3} parent=11 // pred_fallthru
        _
      // Predicated region
      $region17: #{ae_conv_block.3} parent=11 // pred_check
        %p263 = pneg %p168
      $region18: #{ae_conv_block.3} parent=11 // pred_check_branch
        %265 = sbr.rel (%p263) target = $region20
      $region19: #{ae_conv_block.3} parent=11 // pred_region
        _
      $region20: #{ae_conv_block.3} parent=11 // pred_fallthru
        _
      // Predicated region
      $region21: #{ae_conv_block.3} parent=11 // pred_check
        %p266 = pneg %p189
      $region22: #{ae_conv_block.3} parent=11 // pred_check_branch
        %268 = sbr.rel (%p266) target = $region24
      $region23: #{ae_conv_block.3} parent=11 // pred_region
        _
      $region24: #{ae_conv_block.3} parent=11 // pred_fallthru
        _
    $region12: #{ae_conv_block.3} parent=5 // pred_fallthru
      _
    %p269 = scmp.lt.s32.totalorder %s14, 2
    // Predicated region
    $region25: #{ae_conv_block.3} parent=5 // pred_check
      %p270 = pneg %p269
    $region26: #{ae_conv_block.3} parent=5 // pred_check_branch
      %272 = sbr.rel (%p270) target = $region28
    $region27: #{ae_conv_block.3} parent=5 // pred_region
      // Predicated region
      $region29: #{ae_conv_block.3} parent=27 // pred_check
        %p273 = pneg %p56
      $region30: #{ae_conv_block.3} parent=27 // pred_check_branch
        %275 = sbr.rel (%p273) target = $region32
      $region31: #{ae_conv_block.3} parent=27 // pred_region
        %s276 = smul.u32 %s22, 16
        %s277 = ssub.s32 %s276, 1
        %p278 = scmp.gt.s32.totalorder %s277, 0
        %s279 = scalar_select %p278, %s277, 0
        %p280 = scmp.lt.s32.totalorder %s21, 1
        %s281 = scalar_select %p280, %s21, 1
        %p282 = scmp.lt.s32.totalorder %s279, 15
        %s283 = scalar_select %p282, %s279, 15
        %s284 = smul.addr %s283, 2
        %s285 = smul.addr %s281, 32
        %s286 = sadd.s32 %s284, %s285
        %s287 = smul.addr %s286, 8
        %s288 = scalar_lea.vmem %s0, %s287
        %s289 = smul.u32 %s22, 16
        %s290 = ssub.s32 %s289, 1
        %p291 = scmp.gt.s32.totalorder %s290, 0
        %s292 = scalar_select %p291, %s290, 0
      $region32: #{ae_conv_block.3} parent=27 // pred_fallthru
        _
      // Predicated region
      $region33: #{ae_conv_block.3} parent=27 // pred_check
        %p293 = pneg %p84
      $region34: #{ae_conv_block.3} parent=27 // pred_check_branch
        %295 = sbr.rel (%p293) target = $region36
      $region35: #{ae_conv_block.3} parent=27 // pred_region
        %s296 = smul.u32 16, %s22
        %p297 = scmp.lt.s32.totalorder %s21, 1
        %s298 = scalar_select %p297, %s21, 1
        %p299 = scmp.lt.s32.totalorder %s296, 15
        %s300 = scalar_select %p299, %s296, 15
        %s301 = smul.addr %s300, 2
        %s302 = smul.addr %s298, 32
        %s303 = sadd.s32 %s301, %s302
        %s304 = smul.addr %s303, 8
        %s305 = scalar_lea.vmem %s1, %s304
        %s306 = smul.u32 16, %s22
      $region36: #{ae_conv_block.3} parent=27 // pred_fallthru
        _
      // Predicated region
      $region37: #{ae_conv_block.3} parent=27 // pred_check
        %p307 = pneg %p120
      $region38: #{ae_conv_block.3} parent=27 // pred_check_branch
        %309 = sbr.rel (%p307) target = $region40
      $region39: #{ae_conv_block.3} parent=27 // pred_region
        %s310 = sadd.s32 %s22, 1
        %s311 = smul.u32 %s310, 16
        %p312 = scmp.lt.s32.totalorder %s311, 15
        %s313 = scalar_select %p312, %s311, 15
        %p314 = scmp.lt.s32.totalorder %s21, 1
        %s315 = scalar_select %p314, %s21, 1
        %p316 = scmp.lt.s32.totalorder %s313, 15
        %s317 = scalar_select %p316, %s313, 15
        %s318 = smul.addr %s317, 2
        %s319 = smul.addr %s315, 32
        %s320 = sadd.s32 %s318, %s319
        %s321 = smul.addr %s320, 8
        %s322 = scalar_lea.vmem %s2, %s321
        %s323 = sadd.s32 %s22, 1
        %s324 = smul.u32 %s323, 16
        %p325 = scmp.lt.s32.totalorder %s324, 15
        %s326 = scalar_select %p325, %s324, 15
      $region40: #{ae_conv_block.3} parent=27 // pred_fallthru
        _
    $region28: #{ae_conv_block.3} parent=5 // pred_fallthru
      _
    %p327 = scmp.le.s32.totalorder 1, %s14
    %p328 = scmp.lt.s32.totalorder %s14, 3
    %p329 = pnand %p327, %p328
    %p330 = pneg %p329
    // Predicated region
    $region41: #{ae_conv_block.3} parent=5 // pred_check
      _
    $region42: #{ae_conv_block.3} parent=5 // pred_check_branch
      %332 = sbr.rel (%p329) target = $region44
    $region43: #{ae_conv_block.3} parent=5 // pred_region
      %s333 = ssub.s32 %s14, 1
      %s334 = smul.u32 %s24, 16
      %s335 = ssub.s32 %s334, 1
      %p336 = scmp.gt.s32.totalorder %s335, 0
      %s337 = scalar_select %p336, %s335, 0
      %p338 = scmp.lt.s32.totalorder %s23, 1
      %s339 = scalar_select %p338, %s23, 1
      %p340 = scmp.lt.s32.totalorder %s337, 15
      %s341 = scalar_select %p340, %s337, 15
      %s342 = smul.addr %s341, 2
      %s343 = smul.addr %s339, 32
      %s344 = sadd.s32 %s342, %s343
      %s345 = smul.addr %s344, 8
      %s346 = scalar_lea.vmem %s0, %s345
      %p347 = pneg %p62
      %p348 = pneg %p59
      %s349 = smul.u32 16, %s24
      %p350 = scmp.lt.s32.totalorder %s23, 1
      %s351 = scalar_select %p350, %s23, 1
      %p352 = scmp.lt.s32.totalorder %s349, 15
      %s353 = scalar_select %p352, %s349, 15
      %s354 = smul.addr %s353, 2
      %s355 = smul.addr %s351, 32
      %s356 = sadd.s32 %s354, %s355
      %s357 = smul.addr %s356, 8
      %s358 = scalar_lea.vmem %s1, %s357
      %p359 = pneg %p90
      %p360 = pneg %p87
      %s361 = sadd.s32 %s24, 1
      %s362 = smul.u32 %s361, 16
      %p363 = scmp.lt.s32.totalorder %s362, 15
      %s364 = scalar_select %p363, %s362, 15
      %p365 = scmp.lt.s32.totalorder %s23, 1
      %s366 = scalar_select %p365, %s23, 1
      %p367 = scmp.lt.s32.totalorder %s364, 15
      %s368 = scalar_select %p367, %s364, 15
      %s369 = smul.addr %s368, 2
      %s370 = smul.addr %s366, 32
      %s371 = sadd.s32 %s369, %s370
      %s372 = smul.addr %s371, 8
      %s373 = scalar_lea.vmem %s2, %s372
      %p374 = pneg %p126
      %p375 = pneg %p123
      %p376 = pneg %p147
      %p377 = pneg %p144
      %p378 = pneg %p168
      %p379 = pneg %p165
      %p380 = pneg %p189
      %p381 = pneg %p186
      %p382 = pneg %p217
      %p383 = pneg %p214
      %s384 = smul.u32 32, %s24
      %p385 = scmp.lt.s32.totalorder %s23, 1
      %s386 = scalar_select %p385, %s23, 1
      %p387 = scmp.lt.s32.totalorder %s384, 31
      %s388 = scalar_select %p387, %s384, 31
      %s389 = smul.addr %s386, 32
      %s390 = sadd.s32 %s388, %s389
      %s391 = smul.addr %s390, 8
      %s392 = scalar_lea.vmem %s6, %s391
      %p393 = pneg %p245
      %p394 = pneg %p242
      %p395 = scmp.lt.s32.totalorder %s23, 1
      %s396 = scalar_select %p395, %s23, 1
      %p397 = scmp.lt.s32.totalorder %s24, 0
      %s398 = scalar_select %p397, %s24, 0
      %s399 = sadd.s32 %s398, %s396
      %s400 = scalar_lea.vmem %s7, %s399
      %s401 = smul.u32 %s24, 16
      %s402 = ssub.s32 %s401, 1
      %p403 = scmp.gt.s32.totalorder %s402, 0
      %s404 = scalar_select %p403, %s402, 0
      %p405 = scmp.lt.s32.totalorder %s23, 1
      %s406 = scalar_select %p405, %s23, 1
      %p407 = scmp.lt.s32.totalorder %s404, 15
      %s408 = scalar_select %p407, %s404, 15
      %s409 = smul.addr %s408, 2
      %s410 = smul.addr %s406, 32
      %s411 = sadd.s32 %s409, %s410
      %s412 = smul.addr %s411, 8
      %s413 = scalar_lea.vmem %s0, %s412
      %s414 = smul.u32 %s24, 16
      %s415 = ssub.s32 %s414, 1
      %p416 = scmp.gt.s32.totalorder %s415, 0
      %s417 = scalar_select %p416, %s415, 0
      %s418 = smul.u32 16, %s24
      %p419 = scmp.lt.s32.totalorder %s23, 1
      %s420 = scalar_select %p419, %s23, 1
      %p421 = scmp.lt.s32.totalorder %s418, 15
      %s422 = scalar_select %p421, %s418, 15
      %s423 = smul.addr %s422, 2
      %s424 = smul.addr %s420, 32
      %s425 = sadd.s32 %s423, %s424
      %s426 = smul.addr %s425, 8
      %s427 = scalar_lea.vmem %s1, %s426
      %s428 = smul.u32 16, %s24
      %s429 = sadd.s32 %s24, 1
      %s430 = smul.u32 %s429, 16
      %p431 = scmp.lt.s32.totalorder %s430, 15
      %s432 = scalar_select %p431, %s430, 15
      %p433 = scmp.lt.s32.totalorder %s23, 1
      %s434 = scalar_select %p433, %s23, 1
      %p435 = scmp.lt.s32.totalorder %s432, 15
      %s436 = scalar_select %p435, %s432, 15
      %s437 = smul.addr %s436, 2
      %s438 = smul.addr %s434, 32
      %s439 = sadd.s32 %s437, %s438
      %s440 = smul.addr %s439, 8
      %s441 = scalar_lea.vmem %s2, %s440
      %s442 = sadd.s32 %s24, 1
      %s443 = smul.u32 %s442, 16
      %p444 = scmp.lt.s32.totalorder %s443, 15
      %s445 = scalar_select %p444, %s443, 15
      %s446 = smul.u32 32, %s24
      %p447 = scmp.lt.s32.totalorder %s23, 1
      %s448 = scalar_select %p447, %s23, 1
      %p449 = scmp.lt.s32.totalorder %s446, 31
      %s450 = scalar_select %p449, %s446, 31
      %s451 = smul.addr %s448, 32
      %s452 = sadd.s32 %s450, %s451
      %s453 = smul.addr %s452, 8
      %s454 = scalar_lea.vmem %s6, %s453
      %s455 = smul.u32 32, %s24
      %p456 = scmp.lt.s32.totalorder %s23, 1
      %s457 = scalar_select %p456, %s23, 1
      %p458 = scmp.lt.s32.totalorder %s24, 0
      %s459 = scalar_select %p458, %s24, 0
      %s460 = sadd.s32 %s459, %s457
      %s461 = scalar_lea.vmem %s7, %s460
      %v463 = vld [vmem:[%s427] sm:$0xff]
      %v464 = vld [vmem:[%s427 + $0x8] sm:$0xff]
      %v465 = vld [vmem:[%s427 + $0x10] sm:$0xff]
      %v466 = vld [vmem:[%s427 + $0x18] sm:$0xff]
      %v467 = vld [vmem:[%s427 + $0x20] sm:$0xff]
      %v468 = vld [vmem:[%s427 + $0x28] sm:$0xff]
      %v469 = vld [vmem:[%s427 + $0x30] sm:$0xff]
      %v470 = vld [vmem:[%s427 + $0x38] sm:$0xff]
      %v471 = vld [vmem:[%s427 + $0x40] sm:$0xff]
      %v472 = vld [vmem:[%s427 + $0x48] sm:$0xff]
      %v473 = vld [vmem:[%s427 + $0x50] sm:$0xff]
      %v474 = vld [vmem:[%s427 + $0x58] sm:$0xff]
      %v475 = vld [vmem:[%s427 + $0x60] sm:$0xff]
      %v476 = vld [vmem:[%s427 + $0x68] sm:$0xff]
      %v477 = vld [vmem:[%s427 + $0x70] sm:$0xff]
      %v478 = vld [vmem:[%s427 + $0x78] sm:$0xff]
      %v479 = vld [vmem:[%s427 + $0x80] sm:$0xff]
      %v480 = vld [vmem:[%s427 + $0x88] sm:$0xff]
      %v481 = vld [vmem:[%s427 + $0x90] sm:$0xff]
      %v482 = vld [vmem:[%s427 + $0x98] sm:$0xff]
      %v483 = vld [vmem:[%s427 + $0xa0] sm:$0xff]
      %v484 = vld [vmem:[%s427 + $0xa8] sm:$0xff]
      %v485 = vld [vmem:[%s427 + $0xb0] sm:$0xff]
      %v486 = vld [vmem:[%s427 + $0xb8] sm:$0xff]
      %v487 = vld [vmem:[%s427 + $0xc0] sm:$0xff]
      %v488 = vld [vmem:[%s427 + $0xc8] sm:$0xff]
      %v489 = vld [vmem:[%s427 + $0xd0] sm:$0xff]
      %v490 = vld [vmem:[%s427 + $0xd8] sm:$0xff]
      %v491 = vld [vmem:[%s427 + $0xe0] sm:$0xff]
      %v492 = vld [vmem:[%s427 + $0xe8] sm:$0xff]
      %v493 = vld [vmem:[%s427 + $0xf0] sm:$0xff]
      %v494 = vld [vmem:[%s427 + $0xf8] sm:$0xff]
      %v495 = vld [vmem:[%s413] sm:$0xff]
      %v496 = vld [vmem:[%s413 + $0x8] sm:$0xff]
      %v497 = vld [vmem:[%s441] sm:$0xff]
      %v498 = vld [vmem:[%s441 + $0x8] sm:$0xff]
      %p499 = scmp.gt.s32.totalorder %s24, 0
      %s500 = scalar_select %p499, 1, 0
      %s501 = scvt.s32.f32 %s500
      %v502 = vstv %s501
      %v503 = vmul.f32 %v495, %v502
      %v504 = vmul.f32 %v496, %v502
      %p505 = scmp.lt.s32.totalorder %s24, 0
      %s506 = scalar_select %p505, 1, 0
      %s507 = scvt.s32.f32 %s506
      %v508 = vstv %s507
      %v509 = vmul.f32 %v497, %v508
      %v510 = vmul.f32 %v498, %v508
      %vm547 = vcmask 1040384
      %v548 = vrot.slane %v503, 7
      %v549 = vrot.slane %v504, 7
      %v550 = vsel %vm547, %v548, %v549
      %v551 = vrot.slane %v463, 7
      %v552 = vrot.slane %v464, 7
      %v553 = vsel %vm547, %v551, %v552
      %v554 = vrot.slane %v465, 7
      %v555 = vrot.slane %v466, 7
      %v556 = vsel %vm547, %v554, %v555
      %v557 = vrot.slane %v467, 7
      %v558 = vrot.slane %v468, 7
      %v559 = vsel %vm547, %v557, %v558
      %v560 = vrot.slane %v469, 7
      %v561 = vrot.slane %v470, 7
      %v562 = vsel %vm547, %v560, %v561
      %v563 = vrot.slane %v471, 7
      %v564 = vrot.slane %v472, 7
      %v565 = vsel %vm547, %v563, %v564
      %v566 = vrot.slane %v473, 7
      %v567 = vrot.slane %v474, 7
      %v568 = vsel %vm547, %v566, %v567
      %v569 = vrot.slane %v475, 7
      %v570 = vrot.slane %v476, 7
      %v571 = vsel %vm547, %v569, %v570
      %v572 = vrot.slane %v477, 7
      %v573 = vrot.slane %v478, 7
      %v574 = vsel %vm547, %v572, %v573
      %v575 = vrot.slane %v479, 7
      %v576 = vrot.slane %v480, 7
      %v577 = vsel %vm547, %v575, %v576
      %v578 = vrot.slane %v481, 7
      %v579 = vrot.slane %v482, 7
      %v580 = vsel %vm547, %v578, %v579
      %v581 = vrot.slane %v483, 7
      %v582 = vrot.slane %v484, 7
      %v583 = vsel %vm547, %v581, %v582
      %v584 = vrot.slane %v485, 7
      %v585 = vrot.slane %v486, 7
      %v586 = vsel %vm547, %v584, %v585
      %v587 = vrot.slane %v487, 7
      %v588 = vrot.slane %v488, 7
      %v589 = vsel %vm547, %v587, %v588
      %v590 = vrot.slane %v489, 7
      %v591 = vrot.slane %v490, 7
      %v592 = vsel %vm547, %v590, %v591
      %v593 = vrot.slane %v491, 7
      %v594 = vrot.slane %v492, 7
      %v595 = vsel %vm547, %v593, %v594
      %v596 = vrot.slane %v493, 7
      %v597 = vrot.slane %v494, 7
      %v598 = vsel %vm547, %v596, %v597
      %v599 = vrot.slane %v509, 7
      %v600 = vrot.slane %v510, 7
      %v601 = vsel %vm547, %v599, %v600
      %v656 = vsel %vm547, 0.0, %v548
      %v657 = vsel %vm547, 0.0, %v551
      %v658 = vsel %vm547, 0.0, %v554
      %v659 = vsel %vm547, 0.0, %v557
      %v660 = vsel %vm547, 0.0, %v560
      %v661 = vsel %vm547, 0.0, %v563
      %v662 = vsel %vm547, 0.0, %v566
      %v663 = vsel %vm547, 0.0, %v569
      %v664 = vsel %vm547, 0.0, %v572
      %v665 = vsel %vm547, 0.0, %v575
      %v666 = vsel %vm547, 0.0, %v578
      %v667 = vsel %vm547, 0.0, %v581
      %v668 = vsel %vm547, 0.0, %v584
      %v669 = vsel %vm547, 0.0, %v587
      %v670 = vsel %vm547, 0.0, %v590
      %v671 = vsel %vm547, 0.0, %v593
      %v672 = vsel %vm547, 0.0, %v596
      %v673 = vsel %vm547, 0.0, %v599
      %v674 = vsel %vm547, %v549, 0.0
      %v675 = vsel %vm547, %v552, 0.0
      %v676 = vsel %vm547, %v555, 0.0
      %v677 = vsel %vm547, %v558, 0.0
      %v678 = vsel %vm547, %v561, 0.0
      %v679 = vsel %vm547, %v564, 0.0
      %v680 = vsel %vm547, %v567, 0.0
      %v681 = vsel %vm547, %v570, 0.0
      %v682 = vsel %vm547, %v573, 0.0
      %v683 = vsel %vm547, %v576, 0.0
      %v684 = vsel %vm547, %v579, 0.0
      %v685 = vsel %vm547, %v582, 0.0
      %v686 = vsel %vm547, %v585, 0.0
      %v687 = vsel %vm547, %v588, 0.0
      %v688 = vsel %vm547, %v591, 0.0
      %v689 = vsel %vm547, %v594, 0.0
      %v690 = vsel %vm547, %v597, 0.0
      %v691 = vsel %vm547, %v600, 0.0
      %v692 = vpack.c.bf16 %v656, %v656
      %v693 = vpack.c.bf16 %v550, %v550
      %v694 = vpack.c.bf16 %v674, %v674
      %v695 = vpack.c.bf16 %v657, %v657
      %v696 = vpack.c.bf16 %v553, %v553
      %v697 = vpack.c.bf16 %v675, %v675
      %v698 = vpack.c.bf16 %v658, %v658
      %v699 = vpack.c.bf16 %v556, %v556
      %v700 = vpack.c.bf16 %v676, %v676
      %v701 = vpack.c.bf16 %v659, %v659
      %v702 = vpack.c.bf16 %v559, %v559
      %v703 = vpack.c.bf16 %v677, %v677
      %v704 = vpack.c.bf16 %v660, %v660
      %v705 = vpack.c.bf16 %v562, %v562
      %v706 = vpack.c.bf16 %v678, %v678
      %v707 = vpack.c.bf16 %v661, %v661
      %v708 = vpack.c.bf16 %v565, %v565
      %v709 = vpack.c.bf16 %v679, %v679
      %v710 = vpack.c.bf16 %v662, %v662
      %v711 = vpack.c.bf16 %v568, %v568
      %v712 = vpack.c.bf16 %v680, %v680
      %v713 = vpack.c.bf16 %v663, %v663
      %v714 = vpack.c.bf16 %v571, %v571
      %v715 = vpack.c.bf16 %v681, %v681
      %v716 = vpack.c.bf16 %v664, %v664
      %v717 = vpack.c.bf16 %v574, %v574
      %v718 = vpack.c.bf16 %v682, %v682
      %v719 = vpack.c.bf16 %v665, %v665
      %v720 = vpack.c.bf16 %v577, %v577
      %v721 = vpack.c.bf16 %v683, %v683
      %v722 = vpack.c.bf16 %v666, %v666
      %v723 = vpack.c.bf16 %v580, %v580
      %v724 = vpack.c.bf16 %v684, %v684
      %v725 = vpack.c.bf16 %v667, %v667
      %v726 = vpack.c.bf16 %v583, %v583
      %v727 = vpack.c.bf16 %v685, %v685
      %v728 = vpack.c.bf16 %v668, %v668
      %v729 = vpack.c.bf16 %v586, %v586
      %v730 = vpack.c.bf16 %v686, %v686
      %v731 = vpack.c.bf16 %v669, %v669
      %v732 = vpack.c.bf16 %v589, %v589
      %v733 = vpack.c.bf16 %v687, %v687
      %v734 = vpack.c.bf16 %v670, %v670
      %v735 = vpack.c.bf16 %v592, %v592
      %v736 = vpack.c.bf16 %v688, %v688
      %v737 = vpack.c.bf16 %v671, %v671
      %v738 = vpack.c.bf16 %v595, %v595
      %v739 = vpack.c.bf16 %v689, %v689
      %v740 = vpack.c.bf16 %v672, %v672
      %v741 = vpack.c.bf16 %v598, %v598
      %v742 = vpack.c.bf16 %v690, %v690
      %v743 = vpack.c.bf16 %v673, %v673
      %v744 = vpack.c.bf16 %v601, %v601
      %v745 = vpack.c.bf16 %v691, %v691
      %v778 = vunpack.c.l.b16 %v692
      %v779 = vunpack.c.l.b16 %v693
      %v780 = vunpack.c.l.b16 %v695
      %v781 = vunpack.c.l.b16 %v696
      %v782 = vunpack.c.l.b16 %v698
      %v783 = vunpack.c.l.b16 %v699
      %v784 = vunpack.c.l.b16 %v701
      %v785 = vunpack.c.l.b16 %v702
      %v786 = vunpack.c.l.b16 %v704
      %v787 = vunpack.c.l.b16 %v705
      %v788 = vunpack.c.l.b16 %v707
      %v789 = vunpack.c.l.b16 %v708
      %v790 = vunpack.c.l.b16 %v710
      %v791 = vunpack.c.l.b16 %v711
      %v792 = vunpack.c.l.b16 %v713
      %v793 = vunpack.c.l.b16 %v714
      %v794 = vunpack.c.l.b16 %v716
      %v795 = vunpack.c.l.b16 %v717
      %v796 = vunpack.c.l.b16 %v719
      %v797 = vunpack.c.l.b16 %v720
      %v798 = vunpack.c.l.b16 %v722
      %v799 = vunpack.c.l.b16 %v723
      %v800 = vunpack.c.l.b16 %v725
      %v801 = vunpack.c.l.b16 %v726
      %v802 = vunpack.c.l.b16 %v728
      %v803 = vunpack.c.l.b16 %v729
      %v804 = vunpack.c.l.b16 %v731
      %v805 = vunpack.c.l.b16 %v732
      %v806 = vunpack.c.l.b16 %v734
      %v807 = vunpack.c.l.b16 %v735
      %v808 = vunpack.c.l.b16 %v737
      %v809 = vunpack.c.l.b16 %v738
      %v810 = vpack.c.b16 %v779, %v778
      %v811 = vpack.c.b16 %v781, %v780
      %v812 = vpack.c.b16 %v783, %v782
      %v813 = vpack.c.b16 %v785, %v784
      %v814 = vpack.c.b16 %v787, %v786
      %v815 = vpack.c.b16 %v789, %v788
      %v816 = vpack.c.b16 %v791, %v790
      %v817 = vpack.c.b16 %v793, %v792
      %v818 = vpack.c.b16 %v795, %v794
      %v819 = vpack.c.b16 %v797, %v796
      %v820 = vpack.c.b16 %v799, %v798
      %v821 = vpack.c.b16 %v801, %v800
      %v822 = vpack.c.b16 %v803, %v802
      %v823 = vpack.c.b16 %v805, %v804
      %v824 = vpack.c.b16 %v807, %v806
      %v825 = vpack.c.b16 %v809, %v808
      %v842 = vunpack.c.l.b16 %v694
      %v843 = vunpack.c.l.b16 %v697
      %v844 = vunpack.c.l.b16 %v700
      %v845 = vunpack.c.l.b16 %v703
      %v846 = vunpack.c.l.b16 %v706
      %v847 = vunpack.c.l.b16 %v709
      %v848 = vunpack.c.l.b16 %v712
      %v849 = vunpack.c.l.b16 %v715
      %v850 = vunpack.c.l.b16 %v718
      %v851 = vunpack.c.l.b16 %v721
      %v852 = vunpack.c.l.b16 %v724
      %v853 = vunpack.c.l.b16 %v727
      %v854 = vunpack.c.l.b16 %v730
      %v855 = vunpack.c.l.b16 %v733
      %v856 = vunpack.c.l.b16 %v736
      %v857 = vunpack.c.l.b16 %v739
      %v858 = vpack.c.b16 %v842, %v842
      %v859 = vpack.c.b16 %v843, %v843
      %v860 = vpack.c.b16 %v844, %v844
      %v861 = vpack.c.b16 %v845, %v845
      %v862 = vpack.c.b16 %v846, %v846
      %v863 = vpack.c.b16 %v847, %v847
      %v864 = vpack.c.b16 %v848, %v848
      %v865 = vpack.c.b16 %v849, %v849
      %v866 = vpack.c.b16 %v850, %v850
      %v867 = vpack.c.b16 %v851, %v851
      %v868 = vpack.c.b16 %v852, %v852
      %v869 = vpack.c.b16 %v853, %v853
      %v870 = vpack.c.b16 %v854, %v854
      %v871 = vpack.c.b16 %v855, %v855
      %v872 = vpack.c.b16 %v856, %v856
      %v873 = vpack.c.b16 %v857, %v857
      %vm874 = vsmask.f32 7424
      %v876 = vshrl.u32 %v810, 16
      %v878 = vshll.u32 %v810, 16
      %v880 = vrot.slane %v878, 1
      %v881 = vor.u32 %v876, %v880
      %v883 = vshll.u32 %v858, 16
      %v885 = vrot.slane %v883, 1
      %v886 = vsel %vm874, %v881, %v885
      %v888 = vshrl.u32 %v811, 16
      %v890 = vshll.u32 %v811, 16
      %v892 = vrot.slane %v890, 1
      %v893 = vor.u32 %v888, %v892
      %v895 = vshll.u32 %v859, 16
      %v897 = vrot.slane %v895, 1
      %v898 = vsel %vm874, %v893, %v897
      %v900 = vshrl.u32 %v812, 16
      %v902 = vshll.u32 %v812, 16
      %v904 = vrot.slane %v902, 1
      %v905 = vor.u32 %v900, %v904
      %v907 = vshll.u32 %v860, 16
      %v909 = vrot.slane %v907, 1
      %v910 = vsel %vm874, %v905, %v909
      %v912 = vshrl.u32 %v813, 16
      %v914 = vshll.u32 %v813, 16
      %v916 = vrot.slane %v914, 1
      %v917 = vor.u32 %v912, %v916
      %v919 = vshll.u32 %v861, 16
      %v921 = vrot.slane %v919, 1
      %v922 = vsel %vm874, %v917, %v921
      %v924 = vshrl.u32 %v814, 16
      %v926 = vshll.u32 %v814, 16
      %v928 = vrot.slane %v926, 1
      %v929 = vor.u32 %v924, %v928
      %v931 = vshll.u32 %v862, 16
      %v933 = vrot.slane %v931, 1
      %v934 = vsel %vm874, %v929, %v933
      %v936 = vshrl.u32 %v815, 16
      %v938 = vshll.u32 %v815, 16
      %v940 = vrot.slane %v938, 1
      %v941 = vor.u32 %v936, %v940
      %v943 = vshll.u32 %v863, 16
      %v945 = vrot.slane %v943, 1
      %v946 = vsel %vm874, %v941, %v945
      %v948 = vshrl.u32 %v816, 16
      %v950 = vshll.u32 %v816, 16
      %v952 = vrot.slane %v950, 1
      %v953 = vor.u32 %v948, %v952
      %v955 = vshll.u32 %v864, 16
      %v957 = vrot.slane %v955, 1
      %v958 = vsel %vm874, %v953, %v957
      %v960 = vshrl.u32 %v817, 16
      %v962 = vshll.u32 %v817, 16
      %v964 = vrot.slane %v962, 1
      %v965 = vor.u32 %v960, %v964
      %v967 = vshll.u32 %v865, 16
      %v969 = vrot.slane %v967, 1
      %v970 = vsel %vm874, %v965, %v969
      %v972 = vshrl.u32 %v818, 16
      %v974 = vshll.u32 %v818, 16
      %v976 = vrot.slane %v974, 1
      %v977 = vor.u32 %v972, %v976
      %v979 = vshll.u32 %v866, 16
      %v981 = vrot.slane %v979, 1
      %v982 = vsel %vm874, %v977, %v981
      %v984 = vshrl.u32 %v819, 16
      %v986 = vshll.u32 %v819, 16
      %v988 = vrot.slane %v986, 1
      %v989 = vor.u32 %v984, %v988
      %v991 = vshll.u32 %v867, 16
      %v993 = vrot.slane %v991, 1
      %v994 = vsel %vm874, %v989, %v993
      %v996 = vshrl.u32 %v820, 16
      %v998 = vshll.u32 %v820, 16
      %v1000 = vrot.slane %v998, 1
      %v1001 = vor.u32 %v996, %v1000
      %v1003 = vshll.u32 %v868, 16
      %v1005 = vrot.slane %v1003, 1
      %v1006 = vsel %vm874, %v1001, %v1005
      %v1008 = vshrl.u32 %v821, 16
      %v1010 = vshll.u32 %v821, 16
      %v1012 = vrot.slane %v1010, 1
      %v1013 = vor.u32 %v1008, %v1012
      %v1015 = vshll.u32 %v869, 16
      %v1017 = vrot.slane %v1015, 1
      %v1018 = vsel %vm874, %v1013, %v1017
      %v1020 = vshrl.u32 %v822, 16
      %v1022 = vshll.u32 %v822, 16
      %v1024 = vrot.slane %v1022, 1
      %v1025 = vor.u32 %v1020, %v1024
      %v1027 = vshll.u32 %v870, 16
      %v1029 = vrot.slane %v1027, 1
      %v1030 = vsel %vm874, %v1025, %v1029
      %v1032 = vshrl.u32 %v823, 16
      %v1034 = vshll.u32 %v823, 16
      %v1036 = vrot.slane %v1034, 1
      %v1037 = vor.u32 %v1032, %v1036
      %v1039 = vshll.u32 %v871, 16
      %v1041 = vrot.slane %v1039, 1
      %v1042 = vsel %vm874, %v1037, %v1041
      %v1044 = vshrl.u32 %v824, 16
      %v1046 = vshll.u32 %v824, 16
      %v1048 = vrot.slane %v1046, 1
      %v1049 = vor.u32 %v1044, %v1048
      %v1051 = vshll.u32 %v872, 16
      %v1053 = vrot.slane %v1051, 1
      %v1054 = vsel %vm874, %v1049, %v1053
      %v1056 = vshrl.u32 %v825, 16
      %v1058 = vshll.u32 %v825, 16
      %v1060 = vrot.slane %v1058, 1
      %v1061 = vor.u32 %v1056, %v1060
      %v1063 = vshll.u32 %v873, 16
      %v1065 = vrot.slane %v1063, 1
      %v1066 = vsel %vm874, %v1061, %v1065
      %1067 = vrot.lane.b32.xlu0 %v886, 4
      %v1068 = vpop.permute.xlu0 %1067
      %1069 = vrot.lane.b32.xlu0 %v898, 4
      %v1070 = vpop.permute.xlu0 %1069
      %1071 = vrot.lane.b32.xlu0 %v910, 4
      %v1072 = vpop.permute.xlu0 %1071
      %1073 = vrot.lane.b32.xlu0 %v922, 4
      %v1074 = vpop.permute.xlu0 %1073
      %1075 = vrot.lane.b32.xlu0 %v934, 4
      %v1076 = vpop.permute.xlu0 %1075
      %1077 = vrot.lane.b32.xlu0 %v946, 4
      %v1078 = vpop.permute.xlu0 %1077
      %1079 = vrot.lane.b32.xlu0 %v958, 4
      %v1080 = vpop.permute.xlu0 %1079
      %1081 = vrot.lane.b32.xlu0 %v970, 4
      %v1082 = vpop.permute.xlu0 %1081
      %1083 = vrot.lane.b32.xlu0 %v982, 4
      %v1084 = vpop.permute.xlu0 %1083
      %1085 = vrot.lane.b32.xlu0 %v994, 4
      %v1086 = vpop.permute.xlu0 %1085
      %1087 = vrot.lane.b32.xlu0 %v1006, 4
      %v1088 = vpop.permute.xlu0 %1087
      %1089 = vrot.lane.b32.xlu0 %v1018, 4
      %v1090 = vpop.permute.xlu0 %1089
      %1091 = vrot.lane.b32.xlu0 %v1030, 4
      %v1092 = vpop.permute.xlu0 %1091
      %1093 = vrot.lane.b32.xlu0 %v1042, 4
      %v1094 = vpop.permute.xlu0 %1093
      %1095 = vrot.lane.b32.xlu0 %v1054, 4
      %v1096 = vpop.permute.xlu0 %1095
      %1097 = vrot.lane.b32.xlu0 %v1066, 4
      %v1098 = vpop.permute.xlu0 %1097
      %vm1099 = vcmask 1046528
      %v1100 = vrot.slane %v810, 1
      %v1101 = vrot.slane %v858, 1
      %v1102 = vsel %vm1099, %v1100, %v1101
      %v1103 = vrot.slane %v811, 1
      %v1104 = vrot.slane %v859, 1
      %v1105 = vsel %vm1099, %v1103, %v1104
      %v1106 = vrot.slane %v812, 1
      %v1107 = vrot.slane %v860, 1
      %v1108 = vsel %vm1099, %v1106, %v1107
      %v1109 = vrot.slane %v813, 1
      %v1110 = vrot.slane %v861, 1
      %v1111 = vsel %vm1099, %v1109, %v1110
      %v1112 = vrot.slane %v814, 1
      %v1113 = vrot.slane %v862, 1
      %v1114 = vsel %vm1099, %v1112, %v1113
      %v1115 = vrot.slane %v815, 1
      %v1116 = vrot.slane %v863, 1
      %v1117 = vsel %vm1099, %v1115, %v1116
      %v1118 = vrot.slane %v816, 1
      %v1119 = vrot.slane %v864, 1
      %v1120 = vsel %vm1099, %v1118, %v1119
      %v1121 = vrot.slane %v817, 1
      %v1122 = vrot.slane %v865, 1
      %v1123 = vsel %vm1099, %v1121, %v1122
      %v1124 = vrot.slane %v818, 1
      %v1125 = vrot.slane %v866, 1
      %v1126 = vsel %vm1099, %v1124, %v1125
      %v1127 = vrot.slane %v819, 1
      %v1128 = vrot.slane %v867, 1
      %v1129 = vsel %vm1099, %v1127, %v1128
      %v1130 = vrot.slane %v820, 1
      %v1131 = vrot.slane %v868, 1
      %v1132 = vsel %vm1099, %v1130, %v1131
      %v1133 = vrot.slane %v821, 1
      %v1134 = vrot.slane %v869, 1
      %v1135 = vsel %vm1099, %v1133, %v1134
      %v1136 = vrot.slane %v822, 1
      %v1137 = vrot.slane %v870, 1
      %v1138 = vsel %vm1099, %v1136, %v1137
      %v1139 = vrot.slane %v823, 1
      %v1140 = vrot.slane %v871, 1
      %v1141 = vsel %vm1099, %v1139, %v1140
      %v1142 = vrot.slane %v824, 1
      %v1143 = vrot.slane %v872, 1
      %v1144 = vsel %vm1099, %v1142, %v1143
      %v1145 = vrot.slane %v825, 1
      %v1146 = vrot.slane %v873, 1
      %v1147 = vsel %vm1099, %v1145, %v1146
      %1148 = vrot.lane.b32.xlu0 %v1102, 8
      %v1149 = vpop.permute.xlu0 %1148
      %1150 = vrot.lane.b32.xlu0 %v1105, 8
      %v1151 = vpop.permute.xlu0 %1150
      %1152 = vrot.lane.b32.xlu0 %v1108, 8
      %v1153 = vpop.permute.xlu0 %1152
      %1154 = vrot.lane.b32.xlu0 %v1111, 8
      %v1155 = vpop.permute.xlu0 %1154
      %1156 = vrot.lane.b32.xlu0 %v1114, 8
      %v1157 = vpop.permute.xlu0 %1156
      %1158 = vrot.lane.b32.xlu0 %v1117, 8
      %v1159 = vpop.permute.xlu0 %1158
      %1160 = vrot.lane.b32.xlu0 %v1120, 8
      %v1161 = vpop.permute.xlu0 %1160
      %1162 = vrot.lane.b32.xlu0 %v1123, 8
      %v1163 = vpop.permute.xlu0 %1162
      %1164 = vrot.lane.b32.xlu0 %v1126, 8
      %v1165 = vpop.permute.xlu0 %1164
      %1166 = vrot.lane.b32.xlu0 %v1129, 8
      %v1167 = vpop.permute.xlu0 %1166
      %1168 = vrot.lane.b32.xlu0 %v1132, 8
      %v1169 = vpop.permute.xlu0 %1168
      %1170 = vrot.lane.b32.xlu0 %v1135, 8
      %v1171 = vpop.permute.xlu0 %1170
      %1172 = vrot.lane.b32.xlu0 %v1138, 8
      %v1173 = vpop.permute.xlu0 %1172
      %1174 = vrot.lane.b32.xlu0 %v1141, 8
      %v1175 = vpop.permute.xlu0 %1174
      %1176 = vrot.lane.b32.xlu0 %v1144, 8
      %v1177 = vpop.permute.xlu0 %1176
      %1178 = vrot.lane.b32.xlu0 %v1147, 8
      %v1179 = vpop.permute.xlu0 %1178
      %v1182 = vunpack.c.l.b16 %v740
      %v1183 = vunpack.c.l.b16 %v741
      %v1184 = vpack.c.b16 %v1183, %v1182
      %1185 = vrot.lane.b32.xlu0 %v811, 12
      %v1186 = vpop.permute.xlu0 %1185
      %1187 = vrot.lane.b32.xlu0 %v812, 12
      %v1188 = vpop.permute.xlu0 %1187
      %1189 = vrot.lane.b32.xlu0 %v813, 12
      %v1190 = vpop.permute.xlu0 %1189
      %1191 = vrot.lane.b32.xlu0 %v814, 12
      %v1192 = vpop.permute.xlu0 %1191
      %1193 = vrot.lane.b32.xlu0 %v815, 12
      %v1194 = vpop.permute.xlu0 %1193
      %1195 = vrot.lane.b32.xlu0 %v816, 12
      %v1196 = vpop.permute.xlu0 %1195
      %1197 = vrot.lane.b32.xlu0 %v817, 12
      %v1198 = vpop.permute.xlu0 %1197
      %1199 = vrot.lane.b32.xlu0 %v818, 12
      %v1200 = vpop.permute.xlu0 %1199
      %1201 = vrot.lane.b32.xlu0 %v819, 12
      %v1202 = vpop.permute.xlu0 %1201
      %1203 = vrot.lane.b32.xlu0 %v820, 12
      %v1204 = vpop.permute.xlu0 %1203
      %1205 = vrot.lane.b32.xlu0 %v821, 12
      %v1206 = vpop.permute.xlu0 %1205
      %1207 = vrot.lane.b32.xlu0 %v822, 12
      %v1208 = vpop.permute.xlu0 %1207
      %1209 = vrot.lane.b32.xlu0 %v823, 12
      %v1210 = vpop.permute.xlu0 %1209
      %1211 = vrot.lane.b32.xlu0 %v824, 12
      %v1212 = vpop.permute.xlu0 %1211
      %1213 = vrot.lane.b32.xlu0 %v825, 12
      %v1214 = vpop.permute.xlu0 %1213
      %1215 = vrot.lane.b32.xlu0 %v1184, 12
      %v1216 = vpop.permute.xlu0 %1215
      %v1218 = vunpack.c.l.b16 %v742
      %v1219 = vpack.c.b16 %v1218, %v1218
      %v1221 = vshrl.u32 %v1184, 16
      %v1223 = vshll.u32 %v1184, 16
      %v1225 = vrot.slane %v1223, 1
      %v1226 = vor.u32 %v1221, %v1225
      %v1228 = vshll.u32 %v1219, 16
      %v1230 = vrot.slane %v1228, 1
      %v1231 = vsel %vm874, %v1226, %v1230
      %1232 = vrot.lane.b32.xlu0 %v898, 16
      %v1233 = vpop.permute.xlu0 %1232
      %1234 = vrot.lane.b32.xlu0 %v910, 16
      %v1235 = vpop.permute.xlu0 %1234
      %1236 = vrot.lane.b32.xlu0 %v922, 16
      %v1237 = vpop.permute.xlu0 %1236
      %1238 = vrot.lane.b32.xlu0 %v934, 16
      %v1239 = vpop.permute.xlu0 %1238
      %1240 = vrot.lane.b32.xlu0 %v946, 16
      %v1241 = vpop.permute.xlu0 %1240
      %1242 = vrot.lane.b32.xlu0 %v958, 16
      %v1243 = vpop.permute.xlu0 %1242
      %1244 = vrot.lane.b32.xlu0 %v970, 16
      %v1245 = vpop.permute.xlu0 %1244
      %1246 = vrot.lane.b32.xlu0 %v982, 16
      %v1247 = vpop.permute.xlu0 %1246
      %1248 = vrot.lane.b32.xlu0 %v994, 16
      %v1249 = vpop.permute.xlu0 %1248
      %1250 = vrot.lane.b32.xlu0 %v1006, 16
      %v1251 = vpop.permute.xlu0 %1250
      %1252 = vrot.lane.b32.xlu0 %v1018, 16
      %v1253 = vpop.permute.xlu0 %1252
      %1254 = vrot.lane.b32.xlu0 %v1030, 16
      %v1255 = vpop.permute.xlu0 %1254
      %1256 = vrot.lane.b32.xlu0 %v1042, 16
      %v1257 = vpop.permute.xlu0 %1256
      %1258 = vrot.lane.b32.xlu0 %v1054, 16
      %v1259 = vpop.permute.xlu0 %1258
      %1260 = vrot.lane.b32.xlu0 %v1066, 16
      %v1261 = vpop.permute.xlu0 %1260
      %1262 = vrot.lane.b32.xlu0 %v1231, 16
      %v1263 = vpop.permute.xlu0 %1262
      %v1264 = vrot.slane %v1184, 1
      %v1265 = vrot.slane %v1219, 1
      %v1266 = vsel %vm1099, %v1264, %v1265
      %1267 = vrot.lane.b32.xlu0 %v1105, 20
      %v1268 = vpop.permute.xlu0 %1267
      %1269 = vrot.lane.b32.xlu0 %v1108, 20
      %v1270 = vpop.permute.xlu0 %1269
      %1271 = vrot.lane.b32.xlu0 %v1111, 20
      %v1272 = vpop.permute.xlu0 %1271
      %1273 = vrot.lane.b32.xlu0 %v1114, 20
      %v1274 = vpop.permute.xlu0 %1273
      %1275 = vrot.lane.b32.xlu0 %v1117, 20
      %v1276 = vpop.permute.xlu0 %1275
      %1277 = vrot.lane.b32.xlu0 %v1120, 20
      %v1278 = vpop.permute.xlu0 %1277
      %1279 = vrot.lane.b32.xlu0 %v1123, 20
      %v1280 = vpop.permute.xlu0 %1279
      %1281 = vrot.lane.b32.xlu0 %v1126, 20
      %v1282 = vpop.permute.xlu0 %1281
      %1283 = vrot.lane.b32.xlu0 %v1129, 20
      %v1284 = vpop.permute.xlu0 %1283
      %1285 = vrot.lane.b32.xlu0 %v1132, 20
      %v1286 = vpop.permute.xlu0 %1285
      %1287 = vrot.lane.b32.xlu0 %v1135, 20
      %v1288 = vpop.permute.xlu0 %1287
      %1289 = vrot.lane.b32.xlu0 %v1138, 20
      %v1290 = vpop.permute.xlu0 %1289
      %1291 = vrot.lane.b32.xlu0 %v1141, 20
      %v1292 = vpop.permute.xlu0 %1291
      %1293 = vrot.lane.b32.xlu0 %v1144, 20
      %v1294 = vpop.permute.xlu0 %1293
      %1295 = vrot.lane.b32.xlu0 %v1147, 20
      %v1296 = vpop.permute.xlu0 %1295
      %1297 = vrot.lane.b32.xlu0 %v1266, 20
      %v1298 = vpop.permute.xlu0 %1297
      %v1301 = vunpack.c.l.b16 %v743
      %v1302 = vunpack.c.l.b16 %v744
      %v1303 = vpack.c.b16 %v1302, %v1301
      %1304 = vrot.lane.b32.xlu0 %v812, 24
      %v1305 = vpop.permute.xlu0 %1304
      %1306 = vrot.lane.b32.xlu0 %v813, 24
      %v1307 = vpop.permute.xlu0 %1306
      %1308 = vrot.lane.b32.xlu0 %v814, 24
      %v1309 = vpop.permute.xlu0 %1308
      %1310 = vrot.lane.b32.xlu0 %v815, 24
      %v1311 = vpop.permute.xlu0 %1310
      %1312 = vrot.lane.b32.xlu0 %v816, 24
      %v1313 = vpop.permute.xlu0 %1312
      %1314 = vrot.lane.b32.xlu0 %v817, 24
      %v1315 = vpop.permute.xlu0 %1314
      %1316 = vrot.lane.b32.xlu0 %v818, 24
      %v1317 = vpop.permute.xlu0 %1316
      %1318 = vrot.lane.b32.xlu0 %v819, 24
      %v1319 = vpop.permute.xlu0 %1318
      %1320 = vrot.lane.b32.xlu0 %v820, 24
      %v1321 = vpop.permute.xlu0 %1320
      %1322 = vrot.lane.b32.xlu0 %v821, 24
      %v1323 = vpop.permute.xlu0 %1322
      %1324 = vrot.lane.b32.xlu0 %v822, 24
      %v1325 = vpop.permute.xlu0 %1324
      %1326 = vrot.lane.b32.xlu0 %v823, 24
      %v1327 = vpop.permute.xlu0 %1326
      %1328 = vrot.lane.b32.xlu0 %v824, 24
      %v1329 = vpop.permute.xlu0 %1328
      %1330 = vrot.lane.b32.xlu0 %v825, 24
      %v1331 = vpop.permute.xlu0 %1330
      %1332 = vrot.lane.b32.xlu0 %v1184, 24
      %v1333 = vpop.permute.xlu0 %1332
      %1334 = vrot.lane.b32.xlu0 %v1303, 24
      %v1335 = vpop.permute.xlu0 %1334
      %v1337 = vunpack.c.l.b16 %v745
      %v1338 = vpack.c.b16 %v1337, %v1337
      %v1340 = vshrl.u32 %v1303, 16
      %v1342 = vshll.u32 %v1303, 16
      %v1344 = vrot.slane %v1342, 1
      %v1345 = vor.u32 %v1340, %v1344
      %v1347 = vshll.u32 %v1338, 16
      %v1349 = vrot.slane %v1347, 1
      %v1350 = vsel %vm874, %v1345, %v1349
      %1351 = vrot.lane.b32.xlu0 %v910, 28
      %v1352 = vpop.permute.xlu0 %1351
      %1353 = vrot.lane.b32.xlu0 %v922, 28
      %v1354 = vpop.permute.xlu0 %1353
      %1355 = vrot.lane.b32.xlu0 %v934, 28
      %v1356 = vpop.permute.xlu0 %1355
      %1357 = vrot.lane.b32.xlu0 %v946, 28
      %v1358 = vpop.permute.xlu0 %1357
      %1359 = vrot.lane.b32.xlu0 %v958, 28
      %v1360 = vpop.permute.xlu0 %1359
      %1361 = vrot.lane.b32.xlu0 %v970, 28
      %v1362 = vpop.permute.xlu0 %1361
      %1363 = vrot.lane.b32.xlu0 %v982, 28
      %v1364 = vpop.permute.xlu0 %1363
      %1365 = vrot.lane.b32.xlu0 %v994, 28
      %v1366 = vpop.permute.xlu0 %1365
      %1367 = vrot.lane.b32.xlu0 %v1006, 28
      %v1368 = vpop.permute.xlu0 %1367
      %1369 = vrot.lane.b32.xlu0 %v1018, 28
      %v1370 = vpop.permute.xlu0 %1369
      %1371 = vrot.lane.b32.xlu0 %v1030, 28
      %v1372 = vpop.permute.xlu0 %1371
      %1373 = vrot.lane.b32.xlu0 %v1042, 28
      %v1374 = vpop.permute.xlu0 %1373
      %1375 = vrot.lane.b32.xlu0 %v1054, 28
      %v1376 = vpop.permute.xlu0 %1375
      %1377 = vrot.lane.b32.xlu0 %v1066, 28
      %v1378 = vpop.permute.xlu0 %1377
      %1379 = vrot.lane.b32.xlu0 %v1231, 28
      %v1380 = vpop.permute.xlu0 %1379
      %1381 = vrot.lane.b32.xlu0 %v1350, 28
      %v1382 = vpop.permute.xlu0 %1381
      %v1383 = vrot.slane %v1303, 1
      %v1384 = vrot.slane %v1338, 1
      %v1385 = vsel %vm1099, %v1383, %v1384
      %1386 = vrot.lane.b32.xlu0 %v1108, 32
      %v1387 = vpop.permute.xlu0 %1386
      %1388 = vrot.lane.b32.xlu0 %v1111, 32
      %v1389 = vpop.permute.xlu0 %1388
      %1390 = vrot.lane.b32.xlu0 %v1114, 32
      %v1391 = vpop.permute.xlu0 %1390
      %1392 = vrot.lane.b32.xlu0 %v1117, 32
      %v1393 = vpop.permute.xlu0 %1392
      %1394 = vrot.lane.b32.xlu0 %v1120, 32
      %v1395 = vpop.permute.xlu0 %1394
      %1396 = vrot.lane.b32.xlu0 %v1123, 32
      %v1397 = vpop.permute.xlu0 %1396
      %1398 = vrot.lane.b32.xlu0 %v1126, 32
      %v1399 = vpop.permute.xlu0 %1398
      %1400 = vrot.lane.b32.xlu0 %v1129, 32
      %v1401 = vpop.permute.xlu0 %1400
      %1402 = vrot.lane.b32.xlu0 %v1132, 32
      %v1403 = vpop.permute.xlu0 %1402
      %1404 = vrot.lane.b32.xlu0 %v1135, 32
      %v1405 = vpop.permute.xlu0 %1404
      %1406 = vrot.lane.b32.xlu0 %v1138, 32
      %v1407 = vpop.permute.xlu0 %1406
      %1408 = vrot.lane.b32.xlu0 %v1141, 32
      %v1409 = vpop.permute.xlu0 %1408
      %1410 = vrot.lane.b32.xlu0 %v1144, 32
      %v1411 = vpop.permute.xlu0 %1410
      %1412 = vrot.lane.b32.xlu0 %v1147, 32
      %v1413 = vpop.permute.xlu0 %1412
      %1414 = vrot.lane.b32.xlu0 %v1266, 32
      %v1415 = vpop.permute.xlu0 %1414
      %1416 = vrot.lane.b32.xlu0 %v1385, 32
      %v1417 = vpop.permute.xlu0 %1416
      %vm1418 = vcmask 31744
      %v1420 = vsel %vm1418, %v810, %v1068
      %v1422 = vsel %vm1418, %v811, %v1070
      %v1424 = vsel %vm1418, %v812, %v1072
      %v1426 = vsel %vm1418, %v813, %v1074
      %v1428 = vsel %vm1418, %v814, %v1076
      %v1430 = vsel %vm1418, %v815, %v1078
      %v1432 = vsel %vm1418, %v816, %v1080
      %v1434 = vsel %vm1418, %v817, %v1082
      %v1436 = vsel %vm1418, %v818, %v1084
      %v1438 = vsel %vm1418, %v819, %v1086
      %v1440 = vsel %vm1418, %v820, %v1088
      %v1442 = vsel %vm1418, %v821, %v1090
      %v1444 = vsel %vm1418, %v822, %v1092
      %v1446 = vsel %vm1418, %v823, %v1094
      %v1448 = vsel %vm1418, %v824, %v1096
      %v1450 = vsel %vm1418, %v825, %v1098
      %vm1451 = vcmask 64512
      %v1453 = vsel %vm1451, %v1420, %v1149
      %v1455 = vsel %vm1451, %v1422, %v1151
      %v1457 = vsel %vm1451, %v1424, %v1153
      %v1459 = vsel %vm1451, %v1426, %v1155
      %v1461 = vsel %vm1451, %v1428, %v1157
      %v1463 = vsel %vm1451, %v1430, %v1159
      %v1465 = vsel %vm1451, %v1432, %v1161
      %v1467 = vsel %vm1451, %v1434, %v1163
      %v1469 = vsel %vm1451, %v1436, %v1165
      %v1471 = vsel %vm1451, %v1438, %v1167
      %v1473 = vsel %vm1451, %v1440, %v1169
      %v1475 = vsel %vm1451, %v1442, %v1171
      %v1477 = vsel %vm1451, %v1444, %v1173
      %v1479 = vsel %vm1451, %v1446, %v1175
      %v1481 = vsel %vm1451, %v1448, %v1177
      %v1483 = vsel %vm1451, %v1450, %v1179
      %vm1484 = vcmask 97280
      %v1486 = vsel %vm1484, %v1453, %v1186
      %v1488 = vsel %vm1484, %v1455, %v1188
      %v1490 = vsel %vm1484, %v1457, %v1190
      %v1492 = vsel %vm1484, %v1459, %v1192
      %v1494 = vsel %vm1484, %v1461, %v1194
      %v1496 = vsel %vm1484, %v1463, %v1196
      %v1498 = vsel %vm1484, %v1465, %v1198
      %v1500 = vsel %vm1484, %v1467, %v1200
      %v1502 = vsel %vm1484, %v1469, %v1202
      %v1504 = vsel %vm1484, %v1471, %v1204
      %v1506 = vsel %vm1484, %v1473, %v1206
      %v1508 = vsel %vm1484, %v1475, %v1208
      %v1510 = vsel %vm1484, %v1477, %v1210
      %v1512 = vsel %vm1484, %v1479, %v1212
      %v1514 = vsel %vm1484, %v1481, %v1214
      %v1516 = vsel %vm1484, %v1483, %v1216
      %vm1517 = vcmask 130048
      %v1519 = vsel %vm1517, %v1486, %v1233
      %v1521 = vsel %vm1517, %v1488, %v1235
      %v1523 = vsel %vm1517, %v1490, %v1237
      %v1525 = vsel %vm1517, %v1492, %v1239
      %v1527 = vsel %vm1517, %v1494, %v1241
      %v1529 = vsel %vm1517, %v1496, %v1243
      %v1531 = vsel %vm1517, %v1498, %v1245
      %v1533 = vsel %vm1517, %v1500, %v1247
      %v1535 = vsel %vm1517, %v1502, %v1249
      %v1537 = vsel %vm1517, %v1504, %v1251
      %v1539 = vsel %vm1517, %v1506, %v1253
      %v1541 = vsel %vm1517, %v1508, %v1255
      %v1543 = vsel %vm1517, %v1510, %v1257
      %v1545 = vsel %vm1517, %v1512, %v1259
      %v1547 = vsel %vm1517, %v1514, %v1261
      %v1549 = vsel %vm1517, %v1516, %v1263
      %vm1550 = vcmask 162816
      %v1552 = vsel %vm1550, %v1519, %v1268
      %v1554 = vsel %vm1550, %v1521, %v1270
      %v1556 = vsel %vm1550, %v1523, %v1272
      %v1558 = vsel %vm1550, %v1525, %v1274
      %v1560 = vsel %vm1550, %v1527, %v1276
      %v1562 = vsel %vm1550, %v1529, %v1278
      %v1564 = vsel %vm1550, %v1531, %v1280
      %v1566 = vsel %vm1550, %v1533, %v1282
      %v1568 = vsel %vm1550, %v1535, %v1284
      %v1570 = vsel %vm1550, %v1537, %v1286
      %v1572 = vsel %vm1550, %v1539, %v1288
      %v1574 = vsel %vm1550, %v1541, %v1290
      %v1576 = vsel %vm1550, %v1543, %v1292
      %v1578 = vsel %vm1550, %v1545, %v1294
      %v1580 = vsel %vm1550, %v1547, %v1296
      %v1582 = vsel %vm1550, %v1549, %v1298
      %vm1583 = vcmask 195584
      %v1585 = vsel %vm1583, %v1552, %v1305
      %v1587 = vsel %vm1583, %v1554, %v1307
      %v1589 = vsel %vm1583, %v1556, %v1309
      %v1591 = vsel %vm1583, %v1558, %v1311
      %v1593 = vsel %vm1583, %v1560, %v1313
      %v1595 = vsel %vm1583, %v1562, %v1315
      %v1597 = vsel %vm1583, %v1564, %v1317
      %v1599 = vsel %vm1583, %v1566, %v1319
      %v1601 = vsel %vm1583, %v1568, %v1321
      %v1603 = vsel %vm1583, %v1570, %v1323
      %v1605 = vsel %vm1583, %v1572, %v1325
      %v1607 = vsel %vm1583, %v1574, %v1327
      %v1609 = vsel %vm1583, %v1576, %v1329
      %v1611 = vsel %vm1583, %v1578, %v1331
      %v1613 = vsel %vm1583, %v1580, %v1333
      %v1615 = vsel %vm1583, %v1582, %v1335
      %vm1616 = vcmask 228352
      %v1618 = vsel %vm1616, %v1585, %v1352
      %v1620 = vsel %vm1616, %v1587, %v1354
      %v1622 = vsel %vm1616, %v1589, %v1356
      %v1624 = vsel %vm1616, %v1591, %v1358
      %v1626 = vsel %vm1616, %v1593, %v1360
      %v1628 = vsel %vm1616, %v1595, %v1362
      %v1630 = vsel %vm1616, %v1597, %v1364
      %v1632 = vsel %vm1616, %v1599, %v1366
      %v1634 = vsel %vm1616, %v1601, %v1368
      %v1636 = vsel %vm1616, %v1603, %v1370
      %v1638 = vsel %vm1616, %v1605, %v1372
      %v1640 = vsel %vm1616, %v1607, %v1374
      %v1642 = vsel %vm1616, %v1609, %v1376
      %v1644 = vsel %vm1616, %v1611, %v1378
      %v1646 = vsel %vm1616, %v1613, %v1380
      %v1648 = vsel %vm1616, %v1615, %v1382
      %vm1649 = vcmask 261120
      %v1651 = vsel %vm1649, %v1618, %v1387
      %v1653 = vsel %vm1649, %v1620, %v1389
      %v1655 = vsel %vm1649, %v1622, %v1391
      %v1657 = vsel %vm1649, %v1624, %v1393
      %v1659 = vsel %vm1649, %v1626, %v1395
      %v1661 = vsel %vm1649, %v1628, %v1397
      %v1663 = vsel %vm1649, %v1630, %v1399
      %v1665 = vsel %vm1649, %v1632, %v1401
      %v1667 = vsel %vm1649, %v1634, %v1403
      %v1669 = vsel %vm1649, %v1636, %v1405
      %v1671 = vsel %vm1649, %v1638, %v1407
      %v1673 = vsel %vm1649, %v1640, %v1409
      %v1675 = vsel %vm1649, %v1642, %v1411
      %v1677 = vsel %vm1649, %v1644, %v1413
      %v1679 = vsel %vm1649, %v1646, %v1415
      %v1681 = vsel %vm1649, %v1648, %v1417
      %vm1682 = vcmask 293888
      %v1684 = vsel %vm1682, %v1651, 0
      %v1686 = vsel %vm1682, %v1653, 0
      %v1688 = vsel %vm1682, %v1655, 0
      %v1690 = vsel %vm1682, %v1657, 0
      %v1692 = vsel %vm1682, %v1659, 0
      %v1694 = vsel %vm1682, %v1661, 0
      %v1696 = vsel %vm1682, %v1663, 0
      %v1698 = vsel %vm1682, %v1665, 0
      %v1700 = vsel %vm1682, %v1667, 0
      %v1702 = vsel %vm1682, %v1669, 0
      %v1704 = vsel %vm1682, %v1671, 0
      %v1706 = vsel %vm1682, %v1673, 0
      %v1708 = vsel %vm1682, %v1675, 0
      %v1710 = vsel %vm1682, %v1677, 0
      %v1712 = vsel %vm1682, %v1679, 0
      %v1714 = vsel %vm1682, %v1681, 0
      %v1716 = vld [vmem:[%s5] sm:$0xf]
      %v1717 = vld [vmem:[%s5 + $0x4] sm:$0xf]
      %v1718 = vld [vmem:[%s5 + $0x8] sm:$0xf]
      %v1719 = vld [vmem:[%s5 + $0xc] sm:$0xf]
      %v1720 = vld [vmem:[%s5 + $0x10] sm:$0xf]
      %v1721 = vld [vmem:[%s5 + $0x14] sm:$0xf]
      %v1722 = vld [vmem:[%s5 + $0x18] sm:$0xf]
      %v1723 = vld [vmem:[%s5 + $0x1c] sm:$0xf]
      %v1724 = vld [vmem:[%s5 + $0x20] sm:$0xf]
      %v1725 = vld [vmem:[%s5 + $0x24] sm:$0xf]
      %v1726 = vld [vmem:[%s5 + $0x28] sm:$0xf]
      %v1727 = vld [vmem:[%s5 + $0x2c] sm:$0xf]
      %v1728 = vld [vmem:[%s5 + $0x30] sm:$0xf]
      %v1729 = vld [vmem:[%s5 + $0x34] sm:$0xf]
      %v1730 = vld [vmem:[%s5 + $0x38] sm:$0xf]
      %v1731 = vld [vmem:[%s5 + $0x3c] sm:$0xf]
      %v1748 = vunpack.c.l.b16 %v1716
      %v1749 = vunpack.c.l.b16 %v1717
      %v1750 = vunpack.c.l.b16 %v1718
      %v1751 = vunpack.c.l.b16 %v1719
      %v1752 = vunpack.c.l.b16 %v1720
      %v1753 = vunpack.c.l.b16 %v1721
      %v1754 = vunpack.c.l.b16 %v1722
      %v1755 = vunpack.c.l.b16 %v1723
      %v1756 = vunpack.c.l.b16 %v1724
      %v1757 = vunpack.c.l.b16 %v1725
      %v1758 = vunpack.c.l.b16 %v1726
      %v1759 = vunpack.c.l.b16 %v1727
      %v1760 = vunpack.c.l.b16 %v1728
      %v1761 = vunpack.c.l.b16 %v1729
      %v1762 = vunpack.c.l.b16 %v1730
      %v1763 = vunpack.c.l.b16 %v1731
      %v1764 = vpack.c.b16 %v1749, %v1748
      %v1765 = vpack.c.b16 %v1751, %v1750
      %v1766 = vpack.c.b16 %v1753, %v1752
      %v1767 = vpack.c.b16 %v1755, %v1754
      %v1768 = vpack.c.b16 %v1757, %v1756
      %v1769 = vpack.c.b16 %v1759, %v1758
      %v1770 = vpack.c.b16 %v1761, %v1760
      %v1771 = vpack.c.b16 %v1763, %v1762
      %1780 = vmatpush.bf16.msra.mxu0 %v1771
      %1781 = vmatpush.bf16.msra.mxu0 %v1770
      %1782 = vmatpush.bf16.msra.mxu0 %v1769
      %1783 = vmatpush.bf16.msra.mxu0 %v1768
      %1784 = vmatpush.bf16.msra.mxu0 %v1767
      %1785 = vmatpush.bf16.msra.mxu0 %v1766
      %1786 = vmatpush.bf16.msra.mxu0 %v1765
      %1787 = vmatpush.bf16.msra.mxu0 %v1764
      %1788 = vmatmul.bf16.gmra.mxu0 %v1684
      %v1789 = vpop.f32.mrf.mxu0
      %v1790 = vadd.f32 0.0, %v1789
      %v1791 = vpop.f32.mrf.mxu0
      %v1792 = vadd.f32 0.0, %v1791
      %1793 = vmatmul.bf16.gmra.mxu0 %v1686
      %v1794 = vpop.f32.mrf.mxu0
      %v1795 = vadd.f32 0.0, %v1794
      %v1796 = vpop.f32.mrf.mxu0
      %v1797 = vadd.f32 0.0, %v1796
      %1798 = vmatmul.bf16.gmra.mxu0 %v1688
      %v1799 = vpop.f32.mrf.mxu0
      %v1800 = vadd.f32 0.0, %v1799
      %v1801 = vpop.f32.mrf.mxu0
      %v1802 = vadd.f32 0.0, %v1801
      %1803 = vmatmul.bf16.gmra.mxu0 %v1690
      %v1804 = vpop.f32.mrf.mxu0
      %v1805 = vadd.f32 0.0, %v1804
      %v1806 = vpop.f32.mrf.mxu0
      %v1807 = vadd.f32 0.0, %v1806
      %1808 = vmatmul.bf16.gmra.mxu0 %v1692
      %v1809 = vpop.f32.mrf.mxu0
      %v1810 = vadd.f32 0.0, %v1809
      %v1811 = vpop.f32.mrf.mxu0
      %v1812 = vadd.f32 0.0, %v1811
      %1813 = vmatmul.bf16.gmra.mxu0 %v1694
      %v1814 = vpop.f32.mrf.mxu0
      %v1815 = vadd.f32 0.0, %v1814
      %v1816 = vpop.f32.mrf.mxu0
      %v1817 = vadd.f32 0.0, %v1816
      %1818 = vmatmul.bf16.gmra.mxu0 %v1696
      %v1819 = vpop.f32.mrf.mxu0
      %v1820 = vadd.f32 0.0, %v1819
      %v1821 = vpop.f32.mrf.mxu0
      %v1822 = vadd.f32 0.0, %v1821
      %1823 = vmatmul.bf16.gmra.mxu0 %v1698
      %v1824 = vpop.f32.mrf.mxu0
      %v1825 = vadd.f32 0.0, %v1824
      %v1826 = vpop.f32.mrf.mxu0
      %v1827 = vadd.f32 0.0, %v1826
      %1828 = vmatmul.bf16.gmra.mxu0 %v1700
      %v1829 = vpop.f32.mrf.mxu0
      %v1830 = vadd.f32 0.0, %v1829
      %v1831 = vpop.f32.mrf.mxu0
      %v1832 = vadd.f32 0.0, %v1831
      %1833 = vmatmul.bf16.gmra.mxu0 %v1702
      %v1834 = vpop.f32.mrf.mxu0
      %v1835 = vadd.f32 0.0, %v1834
      %v1836 = vpop.f32.mrf.mxu0
      %v1837 = vadd.f32 0.0, %v1836
      %1838 = vmatmul.bf16.gmra.mxu0 %v1704
      %v1839 = vpop.f32.mrf.mxu0
      %v1840 = vadd.f32 0.0, %v1839
      %v1841 = vpop.f32.mrf.mxu0
      %v1842 = vadd.f32 0.0, %v1841
      %1843 = vmatmul.bf16.gmra.mxu0 %v1706
      %v1844 = vpop.f32.mrf.mxu0
      %v1845 = vadd.f32 0.0, %v1844
      %v1846 = vpop.f32.mrf.mxu0
      %v1847 = vadd.f32 0.0, %v1846
      %1848 = vmatmul.bf16.gmra.mxu0 %v1708
      %v1849 = vpop.f32.mrf.mxu0
      %v1850 = vadd.f32 0.0, %v1849
      %v1851 = vpop.f32.mrf.mxu0
      %v1852 = vadd.f32 0.0, %v1851
      %1853 = vmatmul.bf16.gmra.mxu0 %v1710
      %v1854 = vpop.f32.mrf.mxu0
      %v1855 = vadd.f32 0.0, %v1854
      %v1856 = vpop.f32.mrf.mxu0
      %v1857 = vadd.f32 0.0, %v1856
      %1858 = vmatmul.bf16.gmra.mxu0 %v1712
      %v1859 = vpop.f32.mrf.mxu0
      %v1860 = vadd.f32 0.0, %v1859
      %v1861 = vpop.f32.mrf.mxu0
      %v1862 = vadd.f32 0.0, %v1861
      %1863 = vmatmul.bf16.gmra.mxu0 %v1714
      %v1864 = vpop.f32.mrf.mxu0
      %v1865 = vadd.f32 0.0, %v1864
      %v1866 = vpop.f32.mrf.mxu0
      %v1867 = vadd.f32 0.0, %v1866
      %1868 = vdwg.mxu0
      %1869 = vst.msk [vmem:[%s454] sm:$0xff] %vm1451, %v1790
      %1870 = vst.msk [vmem:[%s454 + $0x8] sm:$0xff] %vm1451, %v1792
      %1871 = vst.msk [vmem:[%s454 + $0x10] sm:$0xff] %vm1451, %v1795
      %1872 = vst.msk [vmem:[%s454 + $0x18] sm:$0xff] %vm1451, %v1797
      %1873 = vst.msk [vmem:[%s454 + $0x20] sm:$0xff] %vm1451, %v1800
      %1874 = vst.msk [vmem:[%s454 + $0x28] sm:$0xff] %vm1451, %v1802
      %1875 = vst.msk [vmem:[%s454 + $0x30] sm:$0xff] %vm1451, %v1805
      %1876 = vst.msk [vmem:[%s454 + $0x38] sm:$0xff] %vm1451, %v1807
      %1877 = vst.msk [vmem:[%s454 + $0x40] sm:$0xff] %vm1451, %v1810
      %1878 = vst.msk [vmem:[%s454 + $0x48] sm:$0xff] %vm1451, %v1812
      %1879 = vst.msk [vmem:[%s454 + $0x50] sm:$0xff] %vm1451, %v1815
      %1880 = vst.msk [vmem:[%s454 + $0x58] sm:$0xff] %vm1451, %v1817
      %1881 = vst.msk [vmem:[%s454 + $0x60] sm:$0xff] %vm1451, %v1820
      %1882 = vst.msk [vmem:[%s454 + $0x68] sm:$0xff] %vm1451, %v1822
      %1883 = vst.msk [vmem:[%s454 + $0x70] sm:$0xff] %vm1451, %v1825
      %1884 = vst.msk [vmem:[%s454 + $0x78] sm:$0xff] %vm1451, %v1827
      %1885 = vst.msk [vmem:[%s454 + $0x80] sm:$0xff] %vm1451, %v1830
      %1886 = vst.msk [vmem:[%s454 + $0x88] sm:$0xff] %vm1451, %v1832
      %1887 = vst.msk [vmem:[%s454 + $0x90] sm:$0xff] %vm1451, %v1835
      %1888 = vst.msk [vmem:[%s454 + $0x98] sm:$0xff] %vm1451, %v1837
      %1889 = vst.msk [vmem:[%s454 + $0xa0] sm:$0xff] %vm1451, %v1840
      %1890 = vst.msk [vmem:[%s454 + $0xa8] sm:$0xff] %vm1451, %v1842
      %1891 = vst.msk [vmem:[%s454 + $0xb0] sm:$0xff] %vm1451, %v1845
      %1892 = vst.msk [vmem:[%s454 + $0xb8] sm:$0xff] %vm1451, %v1847
      %1893 = vst.msk [vmem:[%s454 + $0xc0] sm:$0xff] %vm1451, %v1850
      %1894 = vst.msk [vmem:[%s454 + $0xc8] sm:$0xff] %vm1451, %v1852
      %1895 = vst.msk [vmem:[%s454 + $0xd0] sm:$0xff] %vm1451, %v1855
      %1896 = vst.msk [vmem:[%s454 + $0xd8] sm:$0xff] %vm1451, %v1857
      %1897 = vst.msk [vmem:[%s454 + $0xe0] sm:$0xff] %vm1451, %v1860
      %1898 = vst.msk [vmem:[%s454 + $0xe8] sm:$0xff] %vm1451, %v1862
      %1899 = vst.msk [vmem:[%s454 + $0xf0] sm:$0xff] %vm1451, %v1865
      %1900 = vst.msk [vmem:[%s454 + $0xf8] sm:$0xff] %vm1451, %v1867
      %v1901 = vsel %vm1451, %v1790, 0.0
      %v1902 = vsel %vm1451, %v1792, 0.0
      %v1903 = vadd.f32 %v1901, %v1902
      %v1904 = vsel %vm1451, %v1795, 0.0
      %v1905 = vadd.f32 %v1903, %v1904
      %v1906 = vsel %vm1451, %v1797, 0.0
      %v1907 = vadd.f32 %v1905, %v1906
      %v1908 = vsel %vm1451, %v1800, 0.0
      %v1909 = vadd.f32 %v1907, %v1908
      %v1910 = vsel %vm1451, %v1802, 0.0
      %v1911 = vadd.f32 %v1909, %v1910
      %v1912 = vsel %vm1451, %v1805, 0.0
      %v1913 = vadd.f32 %v1911, %v1912
      %v1914 = vsel %vm1451, %v1807, 0.0
      %v1915 = vadd.f32 %v1913, %v1914
      %v1916 = vsel %vm1451, %v1810, 0.0
      %v1917 = vadd.f32 %v1915, %v1916
      %v1918 = vsel %vm1451, %v1812, 0.0
      %v1919 = vadd.f32 %v1917, %v1918
      %v1920 = vsel %vm1451, %v1815, 0.0
      %v1921 = vadd.f32 %v1919, %v1920
      %v1922 = vsel %vm1451, %v1817, 0.0
      %v1923 = vadd.f32 %v1921, %v1922
      %v1924 = vsel %vm1451, %v1820, 0.0
      %v1925 = vadd.f32 %v1923, %v1924
      %v1926 = vsel %vm1451, %v1822, 0.0
      %v1927 = vadd.f32 %v1925, %v1926
      %v1928 = vsel %vm1451, %v1825, 0.0
      %v1929 = vadd.f32 %v1927, %v1928
      %v1930 = vsel %vm1451, %v1827, 0.0
      %v1931 = vadd.f32 %v1929, %v1930
      %v1932 = vsel %vm1451, %v1830, 0.0
      %v1933 = vadd.f32 %v1931, %v1932
      %v1934 = vsel %vm1451, %v1832, 0.0
      %v1935 = vadd.f32 %v1933, %v1934
      %v1936 = vsel %vm1451, %v1835, 0.0
      %v1937 = vadd.f32 %v1935, %v1936
      %v1938 = vsel %vm1451, %v1837, 0.0
      %v1939 = vadd.f32 %v1937, %v1938
      %v1940 = vsel %vm1451, %v1840, 0.0
      %v1941 = vadd.f32 %v1939, %v1940
      %v1942 = vsel %vm1451, %v1842, 0.0
      %v1943 = vadd.f32 %v1941, %v1942
      %v1944 = vsel %vm1451, %v1845, 0.0
      %v1945 = vadd.f32 %v1943, %v1944
      %v1946 = vsel %vm1451, %v1847, 0.0
      %v1947 = vadd.f32 %v1945, %v1946
      %v1948 = vsel %vm1451, %v1850, 0.0
      %v1949 = vadd.f32 %v1947, %v1948
      %v1950 = vsel %vm1451, %v1852, 0.0
      %v1951 = vadd.f32 %v1949, %v1950
      %v1952 = vsel %vm1451, %v1855, 0.0
      %v1953 = vadd.f32 %v1951, %v1952
      %v1954 = vsel %vm1451, %v1857, 0.0
      %v1955 = vadd.f32 %v1953, %v1954
      %v1956 = vsel %vm1451, %v1860, 0.0
      %v1957 = vadd.f32 %v1955, %v1956
      %v1958 = vsel %vm1451, %v1862, 0.0
      %v1959 = vadd.f32 %v1957, %v1958
      %v1960 = vsel %vm1451, %v1865, 0.0
      %v1961 = vadd.f32 %v1959, %v1960
      %v1962 = vsel %vm1451, %v1867, 0.0
      %v1963 = vadd.f32 %v1961, %v1962
      %v1964 = vrot.slane %v1963, 4
      %v1965 = vadd.f32 %v1963, %v1964
      %v1966 = vrot.slane %v1965, 2
      %v1967 = vadd.f32 %v1965, %v1966
      %v1968 = vrot.slane %v1967, 1
      %v1969 = vadd.f32 %v1967, %v1968
      %v1970 = vmul.f32 %v1790, %v1790
      %v1971 = vmul.f32 %v1792, %v1792
      %v1972 = vmul.f32 %v1795, %v1795
      %v1973 = vmul.f32 %v1797, %v1797
      %v1974 = vmul.f32 %v1800, %v1800
      %v1975 = vmul.f32 %v1802, %v1802
      %v1976 = vmul.f32 %v1805, %v1805
      %v1977 = vmul.f32 %v1807, %v1807
      %v1978 = vmul.f32 %v1810, %v1810
      %v1979 = vmul.f32 %v1812, %v1812
      %v1980 = vmul.f32 %v1815, %v1815
      %v1981 = vmul.f32 %v1817, %v1817
      %v1982 = vmul.f32 %v1820, %v1820
      %v1983 = vmul.f32 %v1822, %v1822
      %v1984 = vmul.f32 %v1825, %v1825
      %v1985 = vmul.f32 %v1827, %v1827
      %v1986 = vmul.f32 %v1830, %v1830
      %v1987 = vmul.f32 %v1832, %v1832
      %v1988 = vmul.f32 %v1835, %v1835
      %v1989 = vmul.f32 %v1837, %v1837
      %v1990 = vmul.f32 %v1840, %v1840
      %v1991 = vmul.f32 %v1842, %v1842
      %v1992 = vmul.f32 %v1845, %v1845
      %v1993 = vmul.f32 %v1847, %v1847
      %v1994 = vmul.f32 %v1850, %v1850
      %v1995 = vmul.f32 %v1852, %v1852
      %v1996 = vmul.f32 %v1855, %v1855
      %v1997 = vmul.f32 %v1857, %v1857
      %v1998 = vmul.f32 %v1860, %v1860
      %v1999 = vmul.f32 %v1862, %v1862
      %v2000 = vmul.f32 %v1865, %v1865
      %v2001 = vmul.f32 %v1867, %v1867
      %v2002 = vsel %vm1451, %v1970, 0.0
      %v2003 = vsel %vm1451, %v1971, 0.0
      %v2004 = vadd.f32 %v2002, %v2003
      %v2005 = vsel %vm1451, %v1972, 0.0
      %v2006 = vadd.f32 %v2004, %v2005
      %v2007 = vsel %vm1451, %v1973, 0.0
      %v2008 = vadd.f32 %v2006, %v2007
      %v2009 = vsel %vm1451, %v1974, 0.0
      %v2010 = vadd.f32 %v2008, %v2009
      %v2011 = vsel %vm1451, %v1975, 0.0
      %v2012 = vadd.f32 %v2010, %v2011
      %v2013 = vsel %vm1451, %v1976, 0.0
      %v2014 = vadd.f32 %v2012, %v2013
      %v2015 = vsel %vm1451, %v1977, 0.0
      %v2016 = vadd.f32 %v2014, %v2015
      %v2017 = vsel %vm1451, %v1978, 0.0
      %v2018 = vadd.f32 %v2016, %v2017
      %v2019 = vsel %vm1451, %v1979, 0.0
      %v2020 = vadd.f32 %v2018, %v2019
      %v2021 = vsel %vm1451, %v1980, 0.0
      %v2022 = vadd.f32 %v2020, %v2021
      %v2023 = vsel %vm1451, %v1981, 0.0
      %v2024 = vadd.f32 %v2022, %v2023
      %v2025 = vsel %vm1451, %v1982, 0.0
      %v2026 = vadd.f32 %v2024, %v2025
      %v2027 = vsel %vm1451, %v1983, 0.0
      %v2028 = vadd.f32 %v2026, %v2027
      %v2029 = vsel %vm1451, %v1984, 0.0
      %v2030 = vadd.f32 %v2028, %v2029
      %v2031 = vsel %vm1451, %v1985, 0.0
      %v2032 = vadd.f32 %v2030, %v2031
      %v2033 = vsel %vm1451, %v1986, 0.0
      %v2034 = vadd.f32 %v2032, %v2033
      %v2035 = vsel %vm1451, %v1987, 0.0
      %v2036 = vadd.f32 %v2034, %v2035
      %v2037 = vsel %vm1451, %v1988, 0.0
      %v2038 = vadd.f32 %v2036, %v2037
      %v2039 = vsel %vm1451, %v1989, 0.0
      %v2040 = vadd.f32 %v2038, %v2039
      %v2041 = vsel %vm1451, %v1990, 0.0
      %v2042 = vadd.f32 %v2040, %v2041
      %v2043 = vsel %vm1451, %v1991, 0.0
      %v2044 = vadd.f32 %v2042, %v2043
      %v2045 = vsel %vm1451, %v1992, 0.0
      %v2046 = vadd.f32 %v2044, %v2045
      %v2047 = vsel %vm1451, %v1993, 0.0
      %v2048 = vadd.f32 %v2046, %v2047
      %v2049 = vsel %vm1451, %v1994, 0.0
      %v2050 = vadd.f32 %v2048, %v2049
      %v2051 = vsel %vm1451, %v1995, 0.0
      %v2052 = vadd.f32 %v2050, %v2051
      %v2053 = vsel %vm1451, %v1996, 0.0
      %v2054 = vadd.f32 %v2052, %v2053
      %v2055 = vsel %vm1451, %v1997, 0.0
      %v2056 = vadd.f32 %v2054, %v2055
      %v2057 = vsel %vm1451, %v1998, 0.0
      %v2058 = vadd.f32 %v2056, %v2057
      %v2059 = vsel %vm1451, %v1999, 0.0
      %v2060 = vadd.f32 %v2058, %v2059
      %v2061 = vsel %vm1451, %v2000, 0.0
      %v2062 = vadd.f32 %v2060, %v2061
      %v2063 = vsel %vm1451, %v2001, 0.0
      %v2064 = vadd.f32 %v2062, %v2063
      %v2065 = vrot.slane %v2064, 4
      %v2066 = vadd.f32 %v2064, %v2065
      %v2067 = vrot.slane %v2066, 2
      %v2068 = vadd.f32 %v2066, %v2067
      %v2069 = vrot.slane %v2068, 1
      %v2070 = vadd.f32 %v2068, %v2069
      %2072 = vrot.lane.b32.xlu0 %v2070, 8
      %v2073 = vpop.permute.xlu0 %2072
      %v2075 = vsel %vm1451, %v1969, %v2073
      %vm2076 = vcmask 122880
      %2077 = vst.msk [vmem:[%s461] sm:$0x1] %vm2076, %v2075
      %s2078 = smul.u32 32, %s24
      %p2079 = scmp.lt.s32.totalorder %s23, 1
      %s2080 = scalar_select %p2079, %s23, 1
      %p2081 = scmp.lt.s32.totalorder %s2078, 31
      %s2082 = scalar_select %p2081, %s2078, 31
      %s2083 = smul.addr %s2080, 32
      %s2084 = sadd.s32 %s2082, %s2083
      %s2085 = smul.addr %s2084, 8
      %s2086 = scalar_lea.vmem %s6, %s2085
      %p2087 = scmp.lt.s32.totalorder %s23, 1
      %s2088 = scalar_select %p2087, %s23, 1
      %p2089 = scmp.lt.s32.totalorder %s24, 0
      %s2090 = scalar_select %p2089, %s24, 0
      %s2091 = sadd.s32 %s2090, %s2088
      %s2092 = scalar_lea.vmem %s7, %s2091
      // Predicated region
      $region45: #{ae_conv_block.3} parent=43 // pred_check
        %p2093 = pneg %p214
      $region46: #{ae_conv_block.3} parent=43 // pred_check_branch
        %2095 = sbr.rel (%p2093) target = $region48
      $region47: #{ae_conv_block.3} parent=43 // pred_region
        %s2096 = smul.u32 32, %s24
      $region48: #{ae_conv_block.3} parent=43 // pred_fallthru
        _
      // Predicated region
      $region49: #{ae_conv_block.3} parent=43 // pred_check
        %p2097 = pneg %p242
      $region50: #{ae_conv_block.3} parent=43 // pred_check_branch
        %2099 = sbr.rel (%p2097) target = $region52
      $region51: #{ae_conv_block.3} parent=43 // pred_region
        _
      $region52: #{ae_conv_block.3} parent=43 // pred_fallthru
        _
    $region44: #{ae_conv_block.3} parent=5 // pred_fallthru
      _
    %p2100 = scmp.le.s32.totalorder 2, %s14
    // Predicated region
    $region53: #{ae_conv_block.3} parent=5 // pred_check
      %p2101 = pneg %p2100
    $region54: #{ae_conv_block.3} parent=5 // pred_check_branch
      %2103 = sbr.rel (%p2101) target = $region56
    $region55: #{ae_conv_block.3} parent=5 // pred_region
      %s2104 = ssub.s32 %s14, 2
      // Predicated region
      $region57: #{ae_conv_block.3} parent=55 // pred_check
        %p2105 = pneg %p220
      $region58: #{ae_conv_block.3} parent=55 // pred_check_branch
        %2107 = sbr.rel (%p2105) target = $region60
      $region59: #{ae_conv_block.3} parent=55 // pred_region
        %s2108 = smul.u32 32, %s26
        %p2109 = scmp.lt.s32.totalorder %s25, 1
        %s2110 = scalar_select %p2109, %s25, 1
        %p2111 = scmp.lt.s32.totalorder %s2108, 31
        %s2112 = scalar_select %p2111, %s2108, 31
        %s2113 = smul.addr %s2110, 32
        %s2114 = sadd.s32 %s2112, %s2113
        %s2115 = smul.addr %s2114, 8
        %s2116 = scalar_lea.vmem %s6, %s2115
      $region60: #{ae_conv_block.3} parent=55 // pred_fallthru
        _
      // Predicated region
      $region61: #{ae_conv_block.3} parent=55 // pred_check
        %p2117 = pneg %p248
      $region62: #{ae_conv_block.3} parent=55 // pred_check_branch
        %2119 = sbr.rel (%p2117) target = $region64
      $region63: #{ae_conv_block.3} parent=55 // pred_region
        %p2120 = scmp.lt.s32.totalorder %s25, 1
        %s2121 = scalar_select %p2120, %s25, 1
        %p2122 = scmp.lt.s32.totalorder %s26, 0
        %s2123 = scalar_select %p2122, %s26, 0
        %s2124 = sadd.s32 %s2123, %s2121
        %s2125 = scalar_lea.vmem %s7, %s2124
      $region64: #{ae_conv_block.3} parent=55 // pred_fallthru
        _
    $region56: #{ae_conv_block.3} parent=5 // pred_fallthru
      _
  $region6: #{ae_conv_block.3} parent=0 // loop_footer
    %s18 = sadd.s32 1, %s14
  $region7: #{ae_conv_block.3} parent=0 // loop_footer_branch
    %13 = sbr.rel target = $region3
  $region8: #{ae_conv_block.3} parent=0 // loop_exit
    _

</llo_original>
